<compile_context>
chip_gen: v7x
topology: tpu7x:2x2x1
jax: 0.10.0
libtpu: 0.0.40
codegen_flags: <defaults>
</compile_context>

<pallas_src>
import functools

import jax
import jax.numpy as jnp
from jax.experimental import pallas as pl
from jax.experimental.pallas import tpu as pltpu


def _round_up(x, m):
    return (x + m - 1) // m * m


def bottleneck_kernel(H, W,
                      x_ref, w1_ref, b1_ref, w2_ref, b2_ref, w3_ref, b3_ref,
                      o_ref, ypad_ref):
    HW = H * W
    PAD = W + 1                       # covers flat shifts of +/- (W + 1)
    Cw = w2_ref.shape[-1]             # padded conv2 width (multiple of 128)

    x32 = x_ref[0]                                    # (HW, Ci) f32
    xbf = x32.astype(jnp.bfloat16)

    # ---- conv1 (1x1, BN scale pre-folded into w1) + bias + ReLU ----------
    y1 = jnp.dot(xbf, w1_ref[...], preferred_element_type=jnp.float32)
    y1 = jnp.maximum(y1 + b1_ref[...], 0.0)           # (HW, Cw) f32

    # ---- conv2 (3x3, stride 1, pad 1) + bias + ReLU -----------------------
    # Single bulk store of y1 into a lane-dense zero-padded scratch, then nine
    # full-size shifted matmuls.  Row out-of-bounds taps read the zero pad;
    # column wrap-around reads are removed with iota-based column masks.
    ypad_ref[...] = jnp.zeros(ypad_ref.shape, ypad_ref.dtype)
    ypad_ref[PAD:PAD + HW, :] = y1.astype(jnp.bfloat16)

    # column index of every output position, lane-dense (HW, Cw)
    col = jax.lax.broadcasted_iota(jnp.int32, (H, W, Cw), 1).reshape(HW, Cw)
    not_first_col = col != 0          # outputs at w == 0   invalid for dx = -1
    not_last_col = col != (W - 1)     # outputs at w == W-1 invalid for dx = +1

    acc = jnp.zeros((HW, Cw), jnp.float32)
    for dy in range(3):               # static 9-tap unroll (small, fixed)
        for dx in range(3):
            off = (dy - 1) * W + (dx - 1)
            tap = ypad_ref[PAD + off:PAD + off + HW, :]        # (HW, Cw) bf16
            if dx == 0:               # source col w-1: mask outputs at w == 0
                tap = jnp.where(not_first_col, tap, jnp.zeros_like(tap))
            elif dx == 2:             # source col w+1: mask outputs at w == W-1
                tap = jnp.where(not_last_col, tap, jnp.zeros_like(tap))
            acc = acc + jnp.dot(tap, w2_ref[dy * 3 + dx],
                                preferred_element_type=jnp.float32)
    y2 = jnp.maximum(acc + b2_ref[...], 0.0)           # (HW, Cw) f32

    # ---- conv3 (1x1, BN scale pre-folded into w3) + bias ------------------
    y3 = jnp.dot(y2.astype(jnp.bfloat16), w3_ref[...],
                 preferred_element_type=jnp.float32)
    y3 = y3 + b3_ref[...]

    # ---- residual add (downsample is None -> identity) + ReLU -------------
    o_ref[0] = jnp.maximum(y3 + x32, 0.0).astype(o_ref.dtype)


def bottleneck_forward(x_nchw, w1, s1, b1, w2_hwio, s2, b2, w3, s3, b3):
    N, Cin, H, W = x_nchw.shape
    width = w1.shape[1]
    Cout = w3.shape[1]
    assert Cin == Cout, "downsample=None requires inplanes == planes*expansion"
    HW = H * W
    LANE = 128
    Ci = _round_up(Cin, LANE)
    Cw = _round_up(width, LANE)
    Co = _round_up(Cout, LANE)

    # NCHW -> (N, H*W, C) channels-last; zero-pad channels to a lane multiple.
    x = jnp.transpose(x_nchw, (0, 2, 3, 1)).reshape(N, HW, Cin)
    x = jnp.pad(x, ((0, 0), (0, 0), (0, Ci - Cin))).astype(jnp.float32)

    # Fold BN scales into conv weights, zero-pad, cast MXU operands to bf16.
    w1p = jnp.pad(w1 * s1[None, :],
                  ((0, Ci - Cin), (0, Cw - width))).astype(jnp.bfloat16)
    w2p = jnp.pad(w2_hwio * s2[None, None, None, :],
                  ((0, 0), (0, 0), (0, Cw - width), (0, Cw - width)))
    w2p = w2p.reshape(9, Cw, Cw).astype(jnp.bfloat16)
    w3p = jnp.pad(w3 * s3[None, :],
                  ((0, Cw - width), (0, Co - Cout))).astype(jnp.bfloat16)

    b1p = jnp.pad(b1, (0, Cw - width)).reshape(1, Cw).astype(jnp.float32)
    b2p = jnp.pad(b2, (0, Cw - width)).reshape(1, Cw).astype(jnp.float32)
    b3p = jnp.pad(b3, (0, Co - Cout)).reshape(1, Co).astype(jnp.float32)

    kernel = functools.partial(bottleneck_kernel, H, W)

    def const_spec(a):
        zeros = (0,) * a.ndim
        return pl.BlockSpec(a.shape, lambda n: zeros)

    out = pl.pallas_call(
        kernel,
        out_shape=jax.ShapeDtypeStruct((N, HW, Co), x_nchw.dtype),
        grid=(N,),
        in_specs=[pl.BlockSpec((1, HW, Ci), lambda n: (n, 0, 0)),
                  const_spec(w1p), const_spec(b1p),
                  const_spec(w2p), const_spec(b2p),
                  const_spec(w3p), const_spec(b3p)],
        out_specs=pl.BlockSpec((1, HW, Co), lambda n: (n, 0, 0)),
        scratch_shapes=[pltpu.VMEM((HW + 2 * (W + 1), Cw), jnp.bfloat16)],
        compiler_params=pltpu.CompilerParams(
            dimension_semantics=("parallel",),
            vmem_limit_bytes=32 * 1024 * 1024),
    )(x, w1p, b1p, w2p, b2p, w3p, b3p)

    out = out[:, :, :Cout].reshape(N, H, W, Cout)
    return jnp.transpose(out, (0, 3, 1, 2))            # back to NCHW


def ref_bottleneck(x_nchw, w1, s1, b1, w2_hwio, s2, b2, w3, s3, b3):
    """Pure-JAX f32 NCHW reference (BatchNorm folded into scale/bias)."""
    def bn(y, s, b):
        return y * s[None, :, None, None] + b[None, :, None, None]
    dn = ('NCHW', 'HWIO', 'NCHW')
    y = jax.lax.conv_general_dilated(x_nchw, w1[None, None, :, :], (1, 1),
                                     'VALID', dimension_numbers=dn)
    y = jax.nn.relu(bn(y, s1, b1))
    y = jax.lax.conv_general_dilated(y, w2_hwio, (1, 1), ((1, 1), (1, 1)),
                                     dimension_numbers=dn)
    y = jax.nn.relu(bn(y, s2, b2))
    y = jax.lax.conv_general_dilated(y, w3[None, None, :, :], (1, 1),
                                     'VALID', dimension_numbers=dn)
    y = bn(y, s3, b3)
    return jax.nn.relu(y + x_nchw)


if __name__ == "__main__":
    key = jax.random.PRNGKey(0)
    ks = jax.random.split(key, 16)

    # Bottleneck(inplanes=16, planes=4): width=4, out=planes*4=16 (identity ok)
    N, inplanes, H, W = 2, 16, 16, 16
    planes = 4
    width = planes                      # base_width=64, groups=1
    cout = planes * 4
    eps = 1e-5

    x = jax.random.normal(ks[0], (N, inplanes, H, W), jnp.float32)
    w1 = jax.random.normal(ks[1], (inplanes, width), jnp.float32) * 0.1
    w2 = jax.random.normal(ks[2], (3, 3, width, width), jnp.float32) * 0.1  # HWIO
    w3 = jax.random.normal(ks[3], (width, cout), jnp.float32) * 0.1

    def bn_fold(kg, kb, km, kv, c):
        gamma = jax.random.uniform(kg, (c,), minval=0.5, maxval=1.5)
        beta = jax.random.normal(kb, (c,)) * 0.1
        mean = jax.random.normal(km, (c,)) * 0.1
        var = jax.random.uniform(kv, (c,), minval=0.5, maxval=1.5)
        s = gamma / jnp.sqrt(var + eps)
        return s.astype(jnp.float32), (beta - mean * s).astype(jnp.float32)

    s1, b1 = bn_fold(ks[4], ks[5], ks[6], ks[7], width)
    s2, b2 = bn_fold(ks[8], ks[9], ks[10], ks[11], width)
    s3, b3 = bn_fold(ks[12], ks[13], ks[14], ks[15], cout)

    out = bottleneck_forward(x, w1, s1, b1, w2, s2, b2, w3, s3, b3)
    out = jax.block_until_ready(out)

    expected = ref_bottleneck(x, w1, s1, b1, w2, s2, b2, w3, s3, b3)
    max_err = float(jnp.max(jnp.abs(out - expected)))
    assert out.shape == (N, inplanes, H, W)
    # bf16 MXU operands -> looser tolerance than the pure-f32 reference.
    assert jnp.allclose(out, expected, atol=5e-2, rtol=5e-2), max_err
    print("KERNEL_OK")
</pallas_src>

<mosaic_0001>
module attributes {stable_mosaic.version = 11 : i64} {
  func.func @bottleneck_kernel(%arg0: i32, %arg1: memref<1x256x128xf32, #tpu.memory_space<vmem>>, %arg2: memref<128x128xbf16, #tpu.memory_space<vmem>>, %arg3: memref<1x128xf32, #tpu.memory_space<vmem>>, %arg4: memref<9x128x128xbf16, #tpu.memory_space<vmem>>, %arg5: memref<1x128xf32, #tpu.memory_space<vmem>>, %arg6: memref<128x128xbf16, #tpu.memory_space<vmem>>, %arg7: memref<1x128xf32, #tpu.memory_space<vmem>>, %arg8: memref<1x256x128xf32, #tpu.memory_space<vmem>>, %arg9: memref<290x128xbf16, #tpu.memory_space<vmem>>) attributes {dimension_semantics = [#tpu.dimension_semantics<parallel>], iteration_bounds = array<i64: 2>, scalar_prefetch = 0 : i64, scratch_operands = 1 : i64, tpu.core_type = #tpu.core_type<tc>, window_params = [{transform_indices = @transform_0, window_bounds = array<i64: 1, 256, 128>}, {pipeline_mode = #tpu.pipeline_mode<synchronous>, transform_indices = @transform_1, window_bounds = array<i64: 128, 128>}, {pipeline_mode = #tpu.pipeline_mode<synchronous>, transform_indices = @transform_2, window_bounds = array<i64: 1, 128>}, {pipeline_mode = #tpu.pipeline_mode<synchronous>, transform_indices = @transform_3, window_bounds = array<i64: 9, 128, 128>}, {pipeline_mode = #tpu.pipeline_mode<synchronous>, transform_indices = @transform_4, window_bounds = array<i64: 1, 128>}, {pipeline_mode = #tpu.pipeline_mode<synchronous>, transform_indices = @transform_5, window_bounds = array<i64: 128, 128>}, {pipeline_mode = #tpu.pipeline_mode<synchronous>, transform_indices = @transform_6, window_bounds = array<i64: 1, 128>}, {transform_indices = @transform_7, window_bounds = array<i64: 1, 256, 128>}]} {
    %c0 = arith.constant 0 : index
    %c0_0 = arith.constant 0 : index
    %c0_1 = arith.constant 0 : index
    %0 = vector.load %arg1[%c0, %c0_0, %c0_1] : memref<1x256x128xf32, #tpu.memory_space<vmem>>, vector<1x256x128xf32>
    %1 = vector.shape_cast %0 : vector<1x256x128xf32> to vector<256x128xf32>
    %2 = arith.truncf %1 : vector<256x128xf32> to vector<256x128xbf16>
    %c0_2 = arith.constant 0 : index
    %c0_3 = arith.constant 0 : index
    %3 = vector.load %arg2[%c0_2, %c0_3] : memref<128x128xbf16, #tpu.memory_space<vmem>>, vector<128x128xbf16>
    %cst = arith.constant dense<0.000000e+00> : vector<256x128xf32>
    %4 = tpu.matmul %2, %3, %cst {dimension_numbers = #tpu.dot_dimension_numbers<[1], [0], [0], [1], [0, 0, 1, 1], [], []>} : vector<256x128xbf16>, vector<128x128xbf16>, vector<256x128xf32> -> vector<256x128xf32>
    %c0_4 = arith.constant 0 : index
    %c0_5 = arith.constant 0 : index
    %5 = vector.load %arg3[%c0_4, %c0_5] : memref<1x128xf32, #tpu.memory_space<vmem>>, vector<1x128xf32>
    %6 = vector.broadcast %5 : vector<1x128xf32> to vector<256x128xf32>
    %7 = arith.addf %4, %6 : vector<256x128xf32>
    %cst_6 = arith.constant 0.000000e+00 : f32
    %8 = vector.broadcast %cst_6 : f32 to vector<256x128xf32>
    %9 = arith.maximumf %7, %8 : vector<256x128xf32>
    %cst_7 = arith.constant 0.000000e+00 : bf16
    %10 = vector.broadcast %cst_7 : bf16 to vector<290x128xbf16>
    %c0_8 = arith.constant 0 : index
    %c0_9 = arith.constant 0 : index
    %11 = vector.load %arg9[%c0_8, %c0_9] : memref<290x128xbf16, #tpu.memory_space<vmem>>, vector<290x128xbf16>
    tpu.vector_store %arg9[%c0_8, %c0_9], %10 {strides = array<i32>} : memref<290x128xbf16, #tpu.memory_space<vmem>>, vector<290x128xbf16>,
    %12 = arith.truncf %9 : vector<256x128xf32> to vector<256x128xbf16>
    %c17 = arith.constant 17 : index
    %c0_10 = arith.constant 0 : index
    %13 = vector.load %arg9[%c17, %c0_10] : memref<290x128xbf16, #tpu.memory_space<vmem>>, vector<256x128xbf16>
    tpu.vector_store %arg9[%c17, %c0_10], %12 {strides = array<i32>} : memref<290x128xbf16, #tpu.memory_space<vmem>>, vector<256x128xbf16>,
    %14 = tpu.iota {dimensions = array<i32: 1>} : vector<16x16x128xi32>
    %15 = vector.shape_cast %14 : vector<16x16x128xi32> to vector<256x128xi32>
    %c0_i32 = arith.constant 0 : i32
    %16 = vector.broadcast %c0_i32 : i32 to vector<256x128xi32>
    %17 = arith.cmpi ne, %15, %16 : vector<256x128xi32>
    %c15_i32 = arith.constant 15 : i32
    %18 = vector.broadcast %c15_i32 : i32 to vector<256x128xi32>
    %19 = arith.cmpi ne, %15, %18 : vector<256x128xi32>
    %cst_11 = arith.constant 0.000000e+00 : f32
    %20 = vector.broadcast %cst_11 : f32 to vector<256x128xf32>
    %c0_12 = arith.constant 0 : index
    %c0_13 = arith.constant 0 : index
    %21 = vector.load %arg9[%c0_12, %c0_13] : memref<290x128xbf16, #tpu.memory_space<vmem>>, vector<256x128xbf16>
    %cst_14 = arith.constant 0.000000e+00 : bf16
    %22 = vector.broadcast %cst_14 : bf16 to vector<256x128xbf16>
    %23 = arith.select %17, %21, %22 : vector<256x128xi1>, vector<256x128xbf16>
    %c0_15 = arith.constant 0 : index
    %c0_16 = arith.constant 0 : index
    %c0_17 = arith.constant 0 : index
    %24 = vector.load %arg4[%c0_15, %c0_16, %c0_17] : memref<9x128x128xbf16, #tpu.memory_space<vmem>>, vector<1x128x128xbf16>
    %25 = vector.shape_cast %24 : vector<1x128x128xbf16> to vector<128x128xbf16>
    %cst_18 = arith.constant dense<0.000000e+00> : vector<256x128xf32>
    %26 = tpu.matmul %23, %25, %cst_18 {dimension_numbers = #tpu.dot_dimension_numbers<[1], [0], [0], [1], [0, 0, 1, 1], [], []>} : vector<256x128xbf16>, vector<128x128xbf16>, vector<256x128xf32> -> vector<256x128xf32>
    %27 = arith.addf %20, %26 : vector<256x128xf32>
    %c1 = arith.constant 1 : index
    %c0_19 = arith.constant 0 : index
    %28 = vector.load %arg9[%c1, %c0_19] : memref<290x128xbf16, #tpu.memory_space<vmem>>, vector<256x128xbf16>
    %c1_20 = arith.constant 1 : index
    %c0_21 = arith.constant 0 : index
    %c0_22 = arith.constant 0 : index
    %29 = vector.load %arg4[%c1_20, %c0_21, %c0_22] : memref<9x128x128xbf16, #tpu.memory_space<vmem>>, vector<1x128x128xbf16>
    %30 = vector.shape_cast %29 : vector<1x128x128xbf16> to vector<128x128xbf16>
    %cst_23 = arith.constant dense<0.000000e+00> : vector<256x128xf32>
    %31 = tpu.matmul %28, %30, %cst_23 {dimension_numbers = #tpu.dot_dimension_numbers<[1], [0], [0], [1], [0, 0, 1, 1], [], []>} : vector<256x128xbf16>, vector<128x128xbf16>, vector<256x128xf32> -> vector<256x128xf32>
    %32 = arith.addf %27, %31 : vector<256x128xf32>
    %c2 = arith.constant 2 : index
    %c0_24 = arith.constant 0 : index
    %33 = vector.load %arg9[%c2, %c0_24] : memref<290x128xbf16, #tpu.memory_space<vmem>>, vector<256x128xbf16>
    %cst_25 = arith.constant 0.000000e+00 : bf16
    %34 = vector.broadcast %cst_25 : bf16 to vector<256x128xbf16>
    %35 = arith.select %19, %33, %34 : vector<256x128xi1>, vector<256x128xbf16>
    %c2_26 = arith.constant 2 : index
    %c0_27 = arith.constant 0 : index
    %c0_28 = arith.constant 0 : index
    %36 = vector.load %arg4[%c2_26, %c0_27, %c0_28] : memref<9x128x128xbf16, #tpu.memory_space<vmem>>, vector<1x128x128xbf16>
    %37 = vector.shape_cast %36 : vector<1x128x128xbf16> to vector<128x128xbf16>
    %cst_29 = arith.constant dense<0.000000e+00> : vector<256x128xf32>
    %38 = tpu.matmul %35, %37, %cst_29 {dimension_numbers = #tpu.dot_dimension_numbers<[1], [0], [0], [1], [0, 0, 1, 1], [], []>} : vector<256x128xbf16>, vector<128x128xbf16>, vector<256x128xf32> -> vector<256x128xf32>
    %39 = arith.addf %32, %38 : vector<256x128xf32>
    %c16 = arith.constant 16 : index
    %c0_30 = arith.constant 0 : index
    %40 = vector.load %arg9[%c16, %c0_30] : memref<290x128xbf16, #tpu.memory_space<vmem>>, vector<256x128xbf16>
    %cst_31 = arith.constant 0.000000e+00 : bf16
    %41 = vector.broadcast %cst_31 : bf16 to vector<256x128xbf16>
    %42 = arith.select %17, %40, %41 : vector<256x128xi1>, vector<256x128xbf16>
    %c3 = arith.constant 3 : index
    %c0_32 = arith.constant 0 : index
    %c0_33 = arith.constant 0 : index
    %43 = vector.load %arg4[%c3, %c0_32, %c0_33] : memref<9x128x128xbf16, #tpu.memory_space<vmem>>, vector<1x128x128xbf16>
    %44 = vector.shape_cast %43 : vector<1x128x128xbf16> to vector<128x128xbf16>
    %cst_34 = arith.constant dense<0.000000e+00> : vector<256x128xf32>
    %45 = tpu.matmul %42, %44, %cst_34 {dimension_numbers = #tpu.dot_dimension_numbers<[1], [0], [0], [1], [0, 0, 1, 1], [], []>} : vector<256x128xbf16>, vector<128x128xbf16>, vector<256x128xf32> -> vector<256x128xf32>
    %46 = arith.addf %39, %45 : vector<256x128xf32>
    %c17_35 = arith.constant 17 : index
    %c0_36 = arith.constant 0 : index
    %47 = vector.load %arg9[%c17_35, %c0_36] : memref<290x128xbf16, #tpu.memory_space<vmem>>, vector<256x128xbf16>
    %c4 = arith.constant 4 : index
    %c0_37 = arith.constant 0 : index
    %c0_38 = arith.constant 0 : index
    %48 = vector.load %arg4[%c4, %c0_37, %c0_38] : memref<9x128x128xbf16, #tpu.memory_space<vmem>>, vector<1x128x128xbf16>
    %49 = vector.shape_cast %48 : vector<1x128x128xbf16> to vector<128x128xbf16>
    %cst_39 = arith.constant dense<0.000000e+00> : vector<256x128xf32>
    %50 = tpu.matmul %47, %49, %cst_39 {dimension_numbers = #tpu.dot_dimension_numbers<[1], [0], [0], [1], [0, 0, 1, 1], [], []>} : vector<256x128xbf16>, vector<128x128xbf16>, vector<256x128xf32> -> vector<256x128xf32>
    %51 = arith.addf %46, %50 : vector<256x128xf32>
    %c18 = arith.constant 18 : index
    %c0_40 = arith.constant 0 : index
    %52 = vector.load %arg9[%c18, %c0_40] : memref<290x128xbf16, #tpu.memory_space<vmem>>, vector<256x128xbf16>
    %cst_41 = arith.constant 0.000000e+00 : bf16
    %53 = vector.broadcast %cst_41 : bf16 to vector<256x128xbf16>
    %54 = arith.select %19, %52, %53 : vector<256x128xi1>, vector<256x128xbf16>
    %c5 = arith.constant 5 : index
    %c0_42 = arith.constant 0 : index
    %c0_43 = arith.constant 0 : index
    %55 = vector.load %arg4[%c5, %c0_42, %c0_43] : memref<9x128x128xbf16, #tpu.memory_space<vmem>>, vector<1x128x128xbf16>
    %56 = vector.shape_cast %55 : vector<1x128x128xbf16> to vector<128x128xbf16>
    %cst_44 = arith.constant dense<0.000000e+00> : vector<256x128xf32>
    %57 = tpu.matmul %54, %56, %cst_44 {dimension_numbers = #tpu.dot_dimension_numbers<[1], [0], [0], [1], [0, 0, 1, 1], [], []>} : vector<256x128xbf16>, vector<128x128xbf16>, vector<256x128xf32> -> vector<256x128xf32>
    %58 = arith.addf %51, %57 : vector<256x128xf32>
    %c32 = arith.constant 32 : index
    %c0_45 = arith.constant 0 : index
    %59 = vector.load %arg9[%c32, %c0_45] : memref<290x128xbf16, #tpu.memory_space<vmem>>, vector<256x128xbf16>
    %cst_46 = arith.constant 0.000000e+00 : bf16
    %60 = vector.broadcast %cst_46 : bf16 to vector<256x128xbf16>
    %61 = arith.select %17, %59, %60 : vector<256x128xi1>, vector<256x128xbf16>
    %c6 = arith.constant 6 : index
    %c0_47 = arith.constant 0 : index
    %c0_48 = arith.constant 0 : index
    %62 = vector.load %arg4[%c6, %c0_47, %c0_48] : memref<9x128x128xbf16, #tpu.memory_space<vmem>>, vector<1x128x128xbf16>
    %63 = vector.shape_cast %62 : vector<1x128x128xbf16> to vector<128x128xbf16>
    %cst_49 = arith.constant dense<0.000000e+00> : vector<256x128xf32>
    %64 = tpu.matmul %61, %63, %cst_49 {dimension_numbers = #tpu.dot_dimension_numbers<[1], [0], [0], [1], [0, 0, 1, 1], [], []>} : vector<256x128xbf16>, vector<128x128xbf16>, vector<256x128xf32> -> vector<256x128xf32>
    %65 = arith.addf %58, %64 : vector<256x128xf32>
    %c33 = arith.constant 33 : index
    %c0_50 = arith.constant 0 : index
    %66 = vector.load %arg9[%c33, %c0_50] : memref<290x128xbf16, #tpu.memory_space<vmem>>, vector<256x128xbf16>
    %c7 = arith.constant 7 : index
    %c0_51 = arith.constant 0 : index
    %c0_52 = arith.constant 0 : index
    %67 = vector.load %arg4[%c7, %c0_51, %c0_52] : memref<9x128x128xbf16, #tpu.memory_space<vmem>>, vector<1x128x128xbf16>
    %68 = vector.shape_cast %67 : vector<1x128x128xbf16> to vector<128x128xbf16>
    %cst_53 = arith.constant dense<0.000000e+00> : vector<256x128xf32>
    %69 = tpu.matmul %66, %68, %cst_53 {dimension_numbers = #tpu.dot_dimension_numbers<[1], [0], [0], [1], [0, 0, 1, 1], [], []>} : vector<256x128xbf16>, vector<128x128xbf16>, vector<256x128xf32> -> vector<256x128xf32>
    %70 = arith.addf %65, %69 : vector<256x128xf32>
    %c34 = arith.constant 34 : index
    %c0_54 = arith.constant 0 : index
    %71 = vector.load %arg9[%c34, %c0_54] : memref<290x128xbf16, #tpu.memory_space<vmem>>, vector<256x128xbf16>
    %cst_55 = arith.constant 0.000000e+00 : bf16
    %72 = vector.broadcast %cst_55 : bf16 to vector<256x128xbf16>
    %73 = arith.select %19, %71, %72 : vector<256x128xi1>, vector<256x128xbf16>
    %c8 = arith.constant 8 : index
    %c0_56 = arith.constant 0 : index
    %c0_57 = arith.constant 0 : index
    %74 = vector.load %arg4[%c8, %c0_56, %c0_57] : memref<9x128x128xbf16, #tpu.memory_space<vmem>>, vector<1x128x128xbf16>
    %75 = vector.shape_cast %74 : vector<1x128x128xbf16> to vector<128x128xbf16>
    %cst_58 = arith.constant dense<0.000000e+00> : vector<256x128xf32>
    %76 = tpu.matmul %73, %75, %cst_58 {dimension_numbers = #tpu.dot_dimension_numbers<[1], [0], [0], [1], [0, 0, 1, 1], [], []>} : vector<256x128xbf16>, vector<128x128xbf16>, vector<256x128xf32> -> vector<256x128xf32>
    %77 = arith.addf %70, %76 : vector<256x128xf32>
    %c0_59 = arith.constant 0 : index
    %c0_60 = arith.constant 0 : index
    %78 = vector.load %arg5[%c0_59, %c0_60] : memref<1x128xf32, #tpu.memory_space<vmem>>, vector<1x128xf32>
    %79 = vector.broadcast %78 : vector<1x128xf32> to vector<256x128xf32>
    %80 = arith.addf %77, %79 : vector<256x128xf32>
    %cst_61 = arith.constant 0.000000e+00 : f32
    %81 = vector.broadcast %cst_61 : f32 to vector<256x128xf32>
    %82 = arith.maximumf %80, %81 : vector<256x128xf32>
    %83 = arith.truncf %82 : vector<256x128xf32> to vector<256x128xbf16>
    %c0_62 = arith.constant 0 : index
    %c0_63 = arith.constant 0 : index
    %84 = vector.load %arg6[%c0_62, %c0_63] : memref<128x128xbf16, #tpu.memory_space<vmem>>, vector<128x128xbf16>
    %cst_64 = arith.constant dense<0.000000e+00> : vector<256x128xf32>
    %85 = tpu.matmul %83, %84, %cst_64 {dimension_numbers = #tpu.dot_dimension_numbers<[1], [0], [0], [1], [0, 0, 1, 1], [], []>} : vector<256x128xbf16>, vector<128x128xbf16>, vector<256x128xf32> -> vector<256x128xf32>
    %c0_65 = arith.constant 0 : index
    %c0_66 = arith.constant 0 : index
    %86 = vector.load %arg7[%c0_65, %c0_66] : memref<1x128xf32, #tpu.memory_space<vmem>>, vector<1x128xf32>
    %87 = vector.broadcast %86 : vector<1x128xf32> to vector<256x128xf32>
    %88 = arith.addf %85, %87 : vector<256x128xf32>
    %89 = arith.addf %88, %1 : vector<256x128xf32>
    %cst_67 = arith.constant 0.000000e+00 : f32
    %90 = vector.broadcast %cst_67 : f32 to vector<256x128xf32>
    %91 = arith.maximumf %89, %90 : vector<256x128xf32>
    %c0_68 = arith.constant 0 : index
    %c0_69 = arith.constant 0 : index
    %c0_70 = arith.constant 0 : index
    %92 = vector.load %arg8[%c0_68, %c0_69, %c0_70] : memref<1x256x128xf32, #tpu.memory_space<vmem>>, vector<1x256x128xf32>
    %93 = vector.shape_cast %92 : vector<1x256x128xf32> to vector<256x128xf32>
    %94 = vector.shape_cast %91 : vector<256x128xf32> to vector<1x256x128xf32>
    tpu.vector_store %arg8[%c0_68, %c0_69, %c0_70], %94 {strides = array<i32>} : memref<1x256x128xf32, #tpu.memory_space<vmem>>, vector<1x256x128xf32>,
    return
  }
  func.func @transform_0(%arg0: i32) -> (i32, i32, i32) {
    %c0_i32 = arith.constant 0 : i32
    %c0_i32_0 = arith.constant 0 : i32
    %c0_i32_1 = arith.constant 0 : i32
    return %arg0, %c0_i32, %c0_i32_0 : i32, i32, i32
  }
  func.func @transform_1(%arg0: i32) -> (i32, i32) {
    %c0_i32 = arith.constant 0 : i32
    %c0_i32_0 = arith.constant 0 : i32
    %c0_i32_1 = arith.constant 0 : i32
    return %c0_i32, %c0_i32_0 : i32, i32
  }
  func.func @transform_2(%arg0: i32) -> (i32, i32) {
    %c0_i32 = arith.constant 0 : i32
    %c0_i32_0 = arith.constant 0 : i32
    %c0_i32_1 = arith.constant 0 : i32
    return %c0_i32, %c0_i32_0 : i32, i32
  }
  func.func @transform_3(%arg0: i32) -> (i32, i32, i32) {
    %c0_i32 = arith.constant 0 : i32
    %c0_i32_0 = arith.constant 0 : i32
    %c0_i32_1 = arith.constant 0 : i32
    %c0_i32_2 = arith.constant 0 : i32
    return %c0_i32, %c0_i32_0, %c0_i32_1 : i32, i32, i32
  }
  func.func @transform_4(%arg0: i32) -> (i32, i32) {
    %c0_i32 = arith.constant 0 : i32
    %c0_i32_0 = arith.constant 0 : i32
    %c0_i32_1 = arith.constant 0 : i32
    return %c0_i32, %c0_i32_0 : i32, i32
  }
  func.func @transform_5(%arg0: i32) -> (i32, i32) {
    %c0_i32 = arith.constant 0 : i32
    %c0_i32_0 = arith.constant 0 : i32
    %c0_i32_1 = arith.constant 0 : i32
    return %c0_i32, %c0_i32_0 : i32, i32
  }
  func.func @transform_6(%arg0: i32) -> (i32, i32) {
    %c0_i32 = arith.constant 0 : i32
    %c0_i32_0 = arith.constant 0 : i32
    %c0_i32_1 = arith.constant 0 : i32
    return %c0_i32, %c0_i32_0 : i32, i32
  }
  func.func @transform_7(%arg0: i32) -> (i32, i32, i32) {
    %c0_i32 = arith.constant 0 : i32
    %c0_i32_0 = arith.constant 0 : i32
    %c0_i32_1 = arith.constant 0 : i32
    return %arg0, %c0_i32, %c0_i32_0 : i32, i32, i32
  }
}

</mosaic_0001>

<llo_original>
// kernel: tpu_custom_call.1
$region0: #{tpu_custom_call.1}
  #allocation0 [shape = 'u32[]', space=smem, size = 0x4, offset = 0x4, fixed_abs, tag = 'smem constant byte address 0x4 - core index']
  #allocation1 [shape = 'u32[144,128]{1,0:T(1,128)}', space=vmem, size = 0x12000, scoped, tag = 'internal scratch']
  #allocation2 [shape = 'bf16[290,128]{1,0:T(8,128)(2,1)}', space=vmem, size = 0x12800, scoped, tag = 'scratch operand']
  %s0 = inlined_call_operand.hbm [shape: f32[2,256,128], index: 0, kind: input, shape index: {}]
  %s1 = inlined_call_operand.hbm [shape: bf16[128,128], index: 1, kind: input, shape index: {}]
  %s2 = inlined_call_operand.vmem [shape: f32[1,128], index: 2, kind: input, shape index: {}]
  %s3 = inlined_call_operand.hbm [shape: bf16[9,128,128], index: 3, kind: input, shape index: {}]
  %s4 = inlined_call_operand.vmem [shape: f32[1,128], index: 4, kind: input, shape index: {}]
  %s5 = inlined_call_operand.hbm [shape: bf16[128,128], index: 5, kind: input, shape index: {}]
  %s6 = inlined_call_operand.vmem [shape: f32[1,128], index: 6, kind: input, shape index: {}]
  %s7 = inlined_call_operand.hbm [shape: f32[2,256,128], index: 7, kind: output, shape index: {}]
  %s8 = sld [smem:[#allocation0]]
  $region77: #{tpu_custom_call.1} parent=0
    _
  %s10 = ssub.s32 1, %s8
  %s11 = scalar_select 0, %s10, %s8
  $region1: #{tpu_custom_call.1} parent=0
    #allocation3 [shape = 'u8[262144]{0}', space=vmem, size = 0x40000, scoped, tag = 'input window, operand 0']
    #allocation4 [shape = 's32[2]{0}', space=sflag, size = 0x8, scoped, tag = 'scoped memory for tpu_custom_call.1']
    #allocation5 [shape = 's32[2]{0}', space=sflag, size = 0x8, scoped, tag = 'scoped memory for tpu_custom_call.1']
    #allocation6 [shape = 'u8[32768]{0}', space=vmem, size = 0x8000, scoped, tag = 'input window, operand 1, single buffered']
    #allocation7 [shape = 's32[1]{0}', space=sflag, size = 0x4, scoped, tag = 'scoped memory for tpu_custom_call.1']
    #allocation8 [shape = 'u8[294912]{0}', space=vmem, size = 0x48000, scoped, tag = 'input window, operand 3, single buffered']
    #allocation9 [shape = 'u8[32768]{0}', space=vmem, size = 0x8000, scoped, tag = 'input window, operand 5, single buffered']
    #allocation10 [shape = 's32[1]{0}', space=sflag, size = 0x4, scoped, tag = 'scoped memory for tpu_custom_call.1']
    #allocation11 [shape = 'u8[262144]{0}', space=vmem, size = 0x40000, scoped, tag = 'output window, operand 0']
    %12 = vsyncpa [#allocation4], 0
    %s13 = scalar_lea.sflag [#allocation4], 1
    %14 = vsyncpa %s13, 0
    %15 = vsyncpa [#allocation7], 0
    %16 = vsyncpa [#allocation10], 0
    %17 = vsyncpa [#allocation5], 0
    %s18 = scalar_lea.sflag [#allocation5], 1
    %19 = vsyncpa %s18, 0
    loop: start=0, step=1, limit=4
    $region2: #{tpu_custom_call.1} parent=1 // loop_pre_header
      _
    $region3: #{tpu_custom_call.1} parent=1 // loop_header
      %s21 = sphi 0, %s25
      %p22 = scmp.ge.s32.totalorder %s21, 4
      %s31 = sphi 0, %s33
      %s34 = sphi 0, %s31
      %s35 = sphi 0, %s34
      %s51 = sphi 0, %s35
      %s55 = sphi 0, %s55
      %s57 = sphi 0, %s55
      %s58 = sphi 0, %s57
      %s72 = sphi 0, %s58
      %s76 = sphi 0, %s76
      %s78 = sphi 0, %s76
      %s79 = sphi 0, %s78
      %s93 = sphi 0, %s79
      %s97 = sphi 0, %s97
      %s99 = sphi 0, %s97
      %s100 = sphi 0, %s99
      %s114 = sphi 0, %s100
      %s118 = sphi 0, %s118
      %s120 = sphi 0, %s118
      %s121 = sphi 0, %s120
      %s135 = sphi 0, %s121
      %s139 = sphi 0, %s139
      %s141 = sphi 0, %s139
      %s142 = sphi 0, %s141
      %s156 = sphi 0, %s142
      %s160 = sphi 0, %s160
      %s162 = sphi 0, %s160
      %s163 = sphi 0, %s162
      %s177 = sphi 0, %s163
      %s183 = sphi 0, %s185
      %s186 = sphi 0, %s183
      %s187 = sphi 0, %s186
      %s203 = sphi 0, %s187
    $region4: #{tpu_custom_call.1} parent=1 // loop_header_branch
      %24 = sbr.rel (%p22) target = $region8
    $region5: #{tpu_custom_call.1} parent=1 // loop_body
      %s26 = ssub.s32 %s21, 1
      %s27 = ssub.s32 %s21, 2
      %s28 = sadd.s32 %s21, 1
      %s29 = ssub.s32 %s21, %s28
      %p30 = scmp.eq.s32.totalorder %s29, 0
      %s32 = sadd.s32 %s31, 1
      %s33 = scalar_select %p30, %s31, %s32
      %p36 = pneg %p30
      %p37 = scmp.eq.s32.totalorder %s21, 1
      %p38 = por %p36, %p37
      %p39 = scmp.ne.s32.totalorder %s31, %s34
      %p40 = scmp.eq.s32.totalorder %s21, 0
      %p41 = por %p39, %p40
      %p42 = scmp.ne.s32.totalorder %s31, %s34
      %p43 = scmp.eq.s32.totalorder %s26, 1
      %p44 = por %p42, %p43
      %p45 = scmp.ne.s32.totalorder %s34, %s35
      %p46 = scmp.eq.s32.totalorder %s26, 0
      %p47 = por %p45, %p46
      %p48 = scmp.ne.s32.totalorder %s34, %s35
      %p49 = scmp.eq.s32.totalorder %s27, 1
      %p50 = por %p48, %p49
      %p52 = scmp.ne.s32.totalorder %s35, %s51
      %p53 = scmp.eq.s32.totalorder %s27, 0
      %p54 = por %p52, %p53
      %s56 = sadd.s32 %s55, 1
      %p59 = scmp.eq.s32.totalorder %s21, 1
      %p60 = scmp.ne.s32.totalorder %s55, %s57
      %p61 = scmp.eq.s32.totalorder %s21, 0
      %p62 = por %p60, %p61
      %p63 = scmp.ne.s32.totalorder %s55, %s57
      %p64 = scmp.eq.s32.totalorder %s26, 1
      %p65 = por %p63, %p64
      %p66 = scmp.ne.s32.totalorder %s57, %s58
      %p67 = scmp.eq.s32.totalorder %s26, 0
      %p68 = por %p66, %p67
      %p69 = scmp.ne.s32.totalorder %s57, %s58
      %p70 = scmp.eq.s32.totalorder %s27, 1
      %p71 = por %p69, %p70
      %p73 = scmp.ne.s32.totalorder %s58, %s72
      %p74 = scmp.eq.s32.totalorder %s27, 0
      %p75 = por %p73, %p74
      %s77 = sadd.s32 %s76, 1
      %p80 = scmp.eq.s32.totalorder %s21, 1
      %p81 = scmp.ne.s32.totalorder %s76, %s78
      %p82 = scmp.eq.s32.totalorder %s21, 0
      %p83 = por %p81, %p82
      %p84 = scmp.ne.s32.totalorder %s76, %s78
      %p85 = scmp.eq.s32.totalorder %s26, 1
      %p86 = por %p84, %p85
      %p87 = scmp.ne.s32.totalorder %s78, %s79
      %p88 = scmp.eq.s32.totalorder %s26, 0
      %p89 = por %p87, %p88
      %p90 = scmp.ne.s32.totalorder %s78, %s79
      %p91 = scmp.eq.s32.totalorder %s27, 1
      %p92 = por %p90, %p91
      %p94 = scmp.ne.s32.totalorder %s79, %s93
      %p95 = scmp.eq.s32.totalorder %s27, 0
      %p96 = por %p94, %p95
      %s98 = sadd.s32 %s97, 1
      %p101 = scmp.eq.s32.totalorder %s21, 1
      %p102 = scmp.ne.s32.totalorder %s97, %s99
      %p103 = scmp.eq.s32.totalorder %s21, 0
      %p104 = por %p102, %p103
      %p105 = scmp.ne.s32.totalorder %s97, %s99
      %p106 = scmp.eq.s32.totalorder %s26, 1
      %p107 = por %p105, %p106
      %p108 = scmp.ne.s32.totalorder %s99, %s100
      %p109 = scmp.eq.s32.totalorder %s26, 0
      %p110 = por %p108, %p109
      %p111 = scmp.ne.s32.totalorder %s99, %s100
      %p112 = scmp.eq.s32.totalorder %s27, 1
      %p113 = por %p111, %p112
      %p115 = scmp.ne.s32.totalorder %s100, %s114
      %p116 = scmp.eq.s32.totalorder %s27, 0
      %p117 = por %p115, %p116
      %s119 = sadd.s32 %s118, 1
      %p122 = scmp.eq.s32.totalorder %s21, 1
      %p123 = scmp.ne.s32.totalorder %s118, %s120
      %p124 = scmp.eq.s32.totalorder %s21, 0
      %p125 = por %p123, %p124
      %p126 = scmp.ne.s32.totalorder %s118, %s120
      %p127 = scmp.eq.s32.totalorder %s26, 1
      %p128 = por %p126, %p127
      %p129 = scmp.ne.s32.totalorder %s120, %s121
      %p130 = scmp.eq.s32.totalorder %s26, 0
      %p131 = por %p129, %p130
      %p132 = scmp.ne.s32.totalorder %s120, %s121
      %p133 = scmp.eq.s32.totalorder %s27, 1
      %p134 = por %p132, %p133
      %p136 = scmp.ne.s32.totalorder %s121, %s135
      %p137 = scmp.eq.s32.totalorder %s27, 0
      %p138 = por %p136, %p137
      %s140 = sadd.s32 %s139, 1
      %p143 = scmp.eq.s32.totalorder %s21, 1
      %p144 = scmp.ne.s32.totalorder %s139, %s141
      %p145 = scmp.eq.s32.totalorder %s21, 0
      %p146 = por %p144, %p145
      %p147 = scmp.ne.s32.totalorder %s139, %s141
      %p148 = scmp.eq.s32.totalorder %s26, 1
      %p149 = por %p147, %p148
      %p150 = scmp.ne.s32.totalorder %s141, %s142
      %p151 = scmp.eq.s32.totalorder %s26, 0
      %p152 = por %p150, %p151
      %p153 = scmp.ne.s32.totalorder %s141, %s142
      %p154 = scmp.eq.s32.totalorder %s27, 1
      %p155 = por %p153, %p154
      %p157 = scmp.ne.s32.totalorder %s142, %s156
      %p158 = scmp.eq.s32.totalorder %s27, 0
      %p159 = por %p157, %p158
      %s161 = sadd.s32 %s160, 1
      %p164 = scmp.eq.s32.totalorder %s21, 1
      %p165 = scmp.ne.s32.totalorder %s160, %s162
      %p166 = scmp.eq.s32.totalorder %s21, 0
      %p167 = por %p165, %p166
      %p168 = scmp.ne.s32.totalorder %s160, %s162
      %p169 = scmp.eq.s32.totalorder %s26, 1
      %p170 = por %p168, %p169
      %p171 = scmp.ne.s32.totalorder %s162, %s163
      %p172 = scmp.eq.s32.totalorder %s26, 0
      %p173 = por %p171, %p172
      %p174 = scmp.ne.s32.totalorder %s162, %s163
      %p175 = scmp.eq.s32.totalorder %s27, 1
      %p176 = por %p174, %p175
      %p178 = scmp.ne.s32.totalorder %s163, %s177
      %p179 = scmp.eq.s32.totalorder %s27, 0
      %p180 = por %p178, %p179
      %s181 = ssub.s32 %s21, %s28
      %p182 = scmp.eq.s32.totalorder %s181, 0
      %s184 = sadd.s32 %s183, 1
      %s185 = scalar_select %p182, %s183, %s184
      %p188 = pneg %p182
      %p189 = scmp.eq.s32.totalorder %s21, 1
      %p190 = por %p188, %p189
      %p191 = scmp.ne.s32.totalorder %s183, %s186
      %p192 = scmp.eq.s32.totalorder %s21, 0
      %p193 = por %p191, %p192
      %p194 = scmp.ne.s32.totalorder %s183, %s186
      %p195 = scmp.eq.s32.totalorder %s26, 1
      %p196 = por %p194, %p195
      %p197 = scmp.ne.s32.totalorder %s186, %s187
      %p198 = scmp.eq.s32.totalorder %s26, 0
      %p199 = por %p197, %p198
      %p200 = scmp.ne.s32.totalorder %s186, %s187
      %p201 = scmp.eq.s32.totalorder %s27, 1
      %p202 = por %p200, %p201
      %p204 = scmp.ne.s32.totalorder %s187, %s203
      %p205 = scmp.eq.s32.totalorder %s27, 0
      %p206 = por %p204, %p205
      %p207 = scmp.le.s32.totalorder 1, %s21
      %p208 = scmp.lt.s32.totalorder %s21, 3
      %p209 = pnand %p207, %p208
      %p210 = pneg %p209
      // Predicated region
      $region9: #{tpu_custom_call.1} parent=5 // pred_check
        _
      $region10: #{tpu_custom_call.1} parent=5 // pred_check_branch
        %212 = sbr.rel (%p209) target = $region12
      $region11: #{tpu_custom_call.1} parent=5 // pred_region
        %s213 = ssub.s32 %s21, 1
        // Predicated region
        $region13: #{tpu_custom_call.1} parent=11 // pred_check
          %p214 = pneg %p68
        $region14: #{tpu_custom_call.1} parent=11 // pred_check_branch
          %216 = sbr.rel (%p214) target = $region16
        $region15: #{tpu_custom_call.1} parent=11 // pred_region
          %s218 = ssub.s32 1024, 1024
          %219 = vsyncadd [#allocation7], %s218
          %s220 = sshll.u32 [#allocation6], 4
          %s221 = int_to_ptr.vmem [resolvable:$true] %s220
          %226 = dma.hbm_to_vmem [thread:$0]  %s1, 1024, %s221, [#allocation7], 64, 64, 4
        $region16: #{tpu_custom_call.1} parent=11 // pred_fallthru
          _
        // Predicated region
        $region17: #{tpu_custom_call.1} parent=11 // pred_check
          %p227 = pneg %p89
        $region18: #{tpu_custom_call.1} parent=11 // pred_check_branch
          %229 = sbr.rel (%p227) target = $region20
        $region19: #{tpu_custom_call.1} parent=11 // pred_region
          _
        $region20: #{tpu_custom_call.1} parent=11 // pred_fallthru
          _
        // Predicated region
        $region21: #{tpu_custom_call.1} parent=11 // pred_check
          %p230 = pneg %p110
        $region22: #{tpu_custom_call.1} parent=11 // pred_check_branch
          %232 = sbr.rel (%p230) target = $region24
        $region23: #{tpu_custom_call.1} parent=11 // pred_region
          %s234 = ssub.s32 9216, 9216
          %235 = vsyncadd [#allocation7], %s234
          %s236 = sshll.u32 [#allocation8], 4
          %s237 = int_to_ptr.vmem [resolvable:$true] %s236
          %242 = dma.hbm_to_vmem [thread:$0]  %s3, 9216, %s237, [#allocation7], 64, 64, 4
        $region24: #{tpu_custom_call.1} parent=11 // pred_fallthru
          _
        // Predicated region
        $region25: #{tpu_custom_call.1} parent=11 // pred_check
          %p243 = pneg %p131
        $region26: #{tpu_custom_call.1} parent=11 // pred_check_branch
          %245 = sbr.rel (%p243) target = $region28
        $region27: #{tpu_custom_call.1} parent=11 // pred_region
          _
        $region28: #{tpu_custom_call.1} parent=11 // pred_fallthru
          _
        // Predicated region
        $region29: #{tpu_custom_call.1} parent=11 // pred_check
          %p246 = pneg %p152
        $region30: #{tpu_custom_call.1} parent=11 // pred_check_branch
          %248 = sbr.rel (%p246) target = $region32
        $region31: #{tpu_custom_call.1} parent=11 // pred_region
          %s250 = ssub.s32 1024, 1024
          %251 = vsyncadd [#allocation10], %s250
          %s252 = sshll.u32 [#allocation9], 4
          %s253 = int_to_ptr.vmem [resolvable:$true] %s252
          %258 = dma.hbm_to_vmem [thread:$0]  %s5, 1024, %s253, [#allocation10], 64, 64, 4
        $region32: #{tpu_custom_call.1} parent=11 // pred_fallthru
          _
        // Predicated region
        $region33: #{tpu_custom_call.1} parent=11 // pred_check
          %p259 = pneg %p173
        $region34: #{tpu_custom_call.1} parent=11 // pred_check_branch
          %261 = sbr.rel (%p259) target = $region36
        $region35: #{tpu_custom_call.1} parent=11 // pred_region
          _
        $region36: #{tpu_custom_call.1} parent=11 // pred_fallthru
          _
      $region12: #{tpu_custom_call.1} parent=5 // pred_fallthru
        _
      %p262 = scmp.lt.s32.totalorder %s21, 2
      // Predicated region
      $region37: #{tpu_custom_call.1} parent=5 // pred_check
        %p263 = pneg %p262
      $region38: #{tpu_custom_call.1} parent=5 // pred_check_branch
        %265 = sbr.rel (%p263) target = $region40
      $region39: #{tpu_custom_call.1} parent=5 // pred_region
        // Predicated region
        $region41: #{tpu_custom_call.1} parent=39 // pred_check
          %p266 = pneg %p41
        $region42: #{tpu_custom_call.1} parent=39 // pred_check_branch
          %268 = sbr.rel (%p266) target = $region44
        $region43: #{tpu_custom_call.1} parent=39 // pred_region
          %s269 = sand.u32 %s31, 1
          %s270 = scalar_lea.sflag [#allocation4], %s269
          %s271 = sand.u32 %s31, 1
          %s272 = smul.addr %s271, 256
          %s273 = scalar_lea.vmem [#allocation3], %s272
          %s275 = ssub.s32 4096, 4096
          %276 = vsyncadd %s270, %s275
          %s277 = smul.addr %s21, 32
          %s278 = smul.addr %s277, 128
          %s279 = scalar_lea.hbm %s0, %s278
          %s280 = sshll.u32 %s273, 4
          %s281 = int_to_ptr.vmem [resolvable:$true] %s280
          %286 = dma.hbm_to_vmem [thread:$0]  %s279, 4096, %s281, %s270, 128, 128, 8
        $region44: #{tpu_custom_call.1} parent=39 // pred_fallthru
          _
      $region40: #{tpu_custom_call.1} parent=5 // pred_fallthru
        _
      %p287 = scmp.le.s32.totalorder 1, %s21
      %p288 = scmp.lt.s32.totalorder %s21, 3
      %p289 = pnand %p287, %p288
      %p290 = pneg %p289
      // Predicated region
      $region45: #{tpu_custom_call.1} parent=5 // pred_check
        _
      $region46: #{tpu_custom_call.1} parent=5 // pred_check_branch
        %292 = sbr.rel (%p289) target = $region48
      $region47: #{tpu_custom_call.1} parent=5 // pred_region
        %s293 = ssub.s32 %s21, 1
        %s294 = sand.u32 %s34, 1
        %s295 = scalar_lea.sflag [#allocation4], %s294
        %s296 = sand.u32 %s34, 1
        %s297 = smul.addr %s296, 256
        %s298 = scalar_lea.vmem [#allocation3], %s297
        // Predicated region
        $region49: #{tpu_custom_call.1} parent=47 // pred_check
          %p299 = pneg %p47
        $region50: #{tpu_custom_call.1} parent=47 // pred_check_branch
          %301 = sbr.rel (%p299) target = $region52
        $region51: #{tpu_custom_call.1} parent=47 // pred_region
          %302 = dma.done %s295, 4096
        $region52: #{tpu_custom_call.1} parent=47 // pred_fallthru
          _
        // Predicated region
        $region53: #{tpu_custom_call.1} parent=47 // pred_check
          %p303 = pneg %p68
        $region54: #{tpu_custom_call.1} parent=47 // pred_check_branch
          %305 = sbr.rel (%p303) target = $region56
        $region55: #{tpu_custom_call.1} parent=47 // pred_region
          %306 = dma.done [#allocation7], 1024
        $region56: #{tpu_custom_call.1} parent=47 // pred_fallthru
          _
        // Predicated region
        $region57: #{tpu_custom_call.1} parent=47 // pred_check
          %p307 = pneg %p110
        $region58: #{tpu_custom_call.1} parent=47 // pred_check_branch
          %309 = sbr.rel (%p307) target = $region60
        $region59: #{tpu_custom_call.1} parent=47 // pred_region
          %310 = dma.done [#allocation7], 9216
        $region60: #{tpu_custom_call.1} parent=47 // pred_fallthru
          _
        // Predicated region
        $region61: #{tpu_custom_call.1} parent=47 // pred_check
          %p311 = pneg %p152
        $region62: #{tpu_custom_call.1} parent=47 // pred_check_branch
          %313 = sbr.rel (%p311) target = $region64
        $region63: #{tpu_custom_call.1} parent=47 // pred_region
          %314 = dma.done [#allocation10], 1024
        $region64: #{tpu_custom_call.1} parent=47 // pred_fallthru
          _
        %s315 = sand.u32 %s34, 1
        %s316 = scalar_lea.sflag [#allocation4], %s315
        %s317 = sand.u32 %s34, 1
        %s318 = smul.addr %s317, 256
        %s319 = scalar_lea.vmem [#allocation3], %s318
        %p320 = pneg %p47
        %p321 = pneg %p44
        %p322 = pneg %p68
        %p323 = pneg %p65
        %p324 = pneg %p89
        %p325 = pneg %p86
        %p326 = pneg %p110
        %p327 = pneg %p107
        %p328 = pneg %p131
        %p329 = pneg %p128
        %p330 = pneg %p152
        %p331 = pneg %p149
        %p332 = pneg %p173
        %p333 = pneg %p170
        %p334 = pneg %p199
        %p335 = pneg %p196
        %s336 = sand.u32 %s186, 1
        %s337 = scalar_lea.sflag [#allocation5], %s336
        %s338 = sand.u32 %s186, 1
        %s339 = smul.addr %s338, 256
        %s340 = scalar_lea.vmem [#allocation11], %s339
        %v344 = vld [vmem:[%s298] sm:$0xff]
        %v345 = vld [vmem:[%s298 + $0x8] sm:$0xff]
        %v346 = vld [vmem:[%s298 + $0x10] sm:$0xff]
        %v347 = vld [vmem:[%s298 + $0x18] sm:$0xff]
        %v348 = vld [vmem:[%s298 + $0x20] sm:$0xff]
        %v349 = vld [vmem:[%s298 + $0x28] sm:$0xff]
        %v350 = vld [vmem:[%s298 + $0x30] sm:$0xff]
        %v351 = vld [vmem:[%s298 + $0x38] sm:$0xff]
        %v352 = vld [vmem:[%s298 + $0x40] sm:$0xff]
        %v353 = vld [vmem:[%s298 + $0x48] sm:$0xff]
        %v354 = vld [vmem:[%s298 + $0x50] sm:$0xff]
        %v355 = vld [vmem:[%s298 + $0x58] sm:$0xff]
        %v356 = vld [vmem:[%s298 + $0x60] sm:$0xff]
        %v357 = vld [vmem:[%s298 + $0x68] sm:$0xff]
        %v358 = vld [vmem:[%s298 + $0x70] sm:$0xff]
        %v359 = vld [vmem:[%s298 + $0x78] sm:$0xff]
        %v360 = vld [vmem:[%s298 + $0x80] sm:$0xff]
        %v361 = vld [vmem:[%s298 + $0x88] sm:$0xff]
        %v362 = vld [vmem:[%s298 + $0x90] sm:$0xff]
        %v363 = vld [vmem:[%s298 + $0x98] sm:$0xff]
        %v364 = vld [vmem:[%s298 + $0xa0] sm:$0xff]
        %v365 = vld [vmem:[%s298 + $0xa8] sm:$0xff]
        %v366 = vld [vmem:[%s298 + $0xb0] sm:$0xff]
        %v367 = vld [vmem:[%s298 + $0xb8] sm:$0xff]
        %v368 = vld [vmem:[%s298 + $0xc0] sm:$0xff]
        %v369 = vld [vmem:[%s298 + $0xc8] sm:$0xff]
        %v370 = vld [vmem:[%s298 + $0xd0] sm:$0xff]
        %v371 = vld [vmem:[%s298 + $0xd8] sm:$0xff]
        %v372 = vld [vmem:[%s298 + $0xe0] sm:$0xff]
        %v373 = vld [vmem:[%s298 + $0xe8] sm:$0xff]
        %v374 = vld [vmem:[%s298 + $0xf0] sm:$0xff]
        %v375 = vld [vmem:[%s298 + $0xf8] sm:$0xff]
        %v376 = vpack.c.bf16 %v345, %v344
        %v377 = vpack.c.bf16 %v347, %v346
        %v378 = vpack.c.bf16 %v349, %v348
        %v379 = vpack.c.bf16 %v351, %v350
        %v380 = vpack.c.bf16 %v353, %v352
        %v381 = vpack.c.bf16 %v355, %v354
        %v382 = vpack.c.bf16 %v357, %v356
        %v383 = vpack.c.bf16 %v359, %v358
        %v384 = vpack.c.bf16 %v361, %v360
        %v385 = vpack.c.bf16 %v363, %v362
        %v386 = vpack.c.bf16 %v365, %v364
        %v387 = vpack.c.bf16 %v367, %v366
        %v388 = vpack.c.bf16 %v369, %v368
        %v389 = vpack.c.bf16 %v371, %v370
        %v390 = vpack.c.bf16 %v373, %v372
        %v391 = vpack.c.bf16 %v375, %v374
        %v392 = vld [vmem:[#allocation6] sm:$0xf]
        %v393 = vld [vmem:[#allocation6 + $0x4] sm:$0xf]
        %v394 = vld [vmem:[#allocation6 + $0x8] sm:$0xf]
        %v395 = vld [vmem:[#allocation6 + $0xc] sm:$0xf]
        %v396 = vld [vmem:[#allocation6 + $0x10] sm:$0xf]
        %v397 = vld [vmem:[#allocation6 + $0x14] sm:$0xf]
        %v398 = vld [vmem:[#allocation6 + $0x18] sm:$0xf]
        %v399 = vld [vmem:[#allocation6 + $0x1c] sm:$0xf]
        %v400 = vld [vmem:[#allocation6 + $0x20] sm:$0xf]
        %v401 = vld [vmem:[#allocation6 + $0x24] sm:$0xf]
        %v402 = vld [vmem:[#allocation6 + $0x28] sm:$0xf]
        %v403 = vld [vmem:[#allocation6 + $0x2c] sm:$0xf]
        %v404 = vld [vmem:[#allocation6 + $0x30] sm:$0xf]
        %v405 = vld [vmem:[#allocation6 + $0x34] sm:$0xf]
        %v406 = vld [vmem:[#allocation6 + $0x38] sm:$0xf]
        %v407 = vld [vmem:[#allocation6 + $0x3c] sm:$0xf]
        %v408 = vld [vmem:[%s2] sm:$0x1]
        %v410 = vlaneseq
        %v411 = vshrl.u32 %v410, 7
        %v412 = vsub.s32 0, %v411
        %v413 = vrot.slane %v408, %v412
        %v431 = vunpack.c.l.b16 %v392
        %v432 = vunpack.c.l.b16 %v393
        %v433 = vunpack.c.l.b16 %v394
        %v434 = vunpack.c.l.b16 %v395
        %v435 = vunpack.c.l.b16 %v396
        %v436 = vunpack.c.l.b16 %v397
        %v437 = vunpack.c.l.b16 %v398
        %v438 = vunpack.c.l.b16 %v399
        %v439 = vunpack.c.l.b16 %v400
        %v440 = vunpack.c.l.b16 %v401
        %v441 = vunpack.c.l.b16 %v402
        %v442 = vunpack.c.l.b16 %v403
        %v443 = vunpack.c.l.b16 %v404
        %v444 = vunpack.c.l.b16 %v405
        %v445 = vunpack.c.l.b16 %v406
        %v446 = vunpack.c.l.b16 %v407
        %v447 = vpack.c.b16 %v432, %v431
        %v448 = vpack.c.b16 %v434, %v433
        %v449 = vpack.c.b16 %v436, %v435
        %v450 = vpack.c.b16 %v438, %v437
        %v451 = vpack.c.b16 %v440, %v439
        %v452 = vpack.c.b16 %v442, %v441
        %v453 = vpack.c.b16 %v444, %v443
        %v454 = vpack.c.b16 %v446, %v445
        %463 = vmatprep.subr.bf16.mxu0 0
        %464 = vmatpush1.bf16.msra.mxu0 %v447
        %465 = vmatprep.subr.bf16.mxu0 0
        %466 = vmatpush1.bf16.msra.mxu0 %v448
        %467 = vmatprep.subr.bf16.mxu0 0
        %468 = vmatpush1.bf16.msra.mxu0 %v449
        %469 = vmatprep.subr.bf16.mxu0 0
        %470 = vmatpush1.bf16.msra.mxu0 %v450
        %471 = vmatprep.subr.bf16.mxu0 0
        %472 = vmatpush1.bf16.msra.mxu0 %v451
        %473 = vmatprep.subr.bf16.mxu0 0
        %474 = vmatpush1.bf16.msra.mxu0 %v452
        %475 = vmatprep.subr.bf16.mxu0 0
        %476 = vmatpush1.bf16.msra.mxu0 %v453
        %477 = vmatprep.subr.bf16.mxu0 0
        %478 = vmatpush1.bf16.msra.mxu0 %v454
        %479 = vmatprep.subr.bf16.mxu0 0
        %480 = vmatpush1.bf16.msra.mxu0 0
        %481 = vmatprep.subr.bf16.mxu0 0
        %482 = vmatpush1.bf16.msra.mxu0 0
        %483 = vmatprep.subr.bf16.mxu0 0
        %484 = vmatpush1.bf16.msra.mxu0 0
        %485 = vmatprep.subr.bf16.mxu0 0
        %486 = vmatpush1.bf16.msra.mxu0 0
        %487 = vmatprep.subr.bf16.mxu0 0
        %488 = vmatpush1.bf16.msra.mxu0 0
        %489 = vmatprep.subr.bf16.mxu0 0
        %490 = vmatpush1.bf16.msra.mxu0 0
        %491 = vmatprep.subr.bf16.mxu0 0
        %492 = vmatpush1.bf16.msra.mxu0 0
        %493 = vmatprep.subr.bf16.mxu0 0
        %494 = vmatpush1.bf16.msra.mxu0 0
        %495 = vmatprep.mubr.bf16.mxu0 0
        %496 = vmatmul.mubr.bf16.gmra.mrb[0].mxu0 %v376
        %v497 = vpop.f32.mrb[0].mxu0
        %v498 = vadd.f32 %v413, %v497
        %v499 = vpop.f32.mrb[0].mxu0
        %v500 = vpop.f32.mrb[0].mxu0
        %v501 = vadd.f32 %v413, %v500
        %v502 = vpop.f32.mrb[0].mxu0
        %503 = vmatprep.mubr.bf16.mxu0 0
        %504 = vmatmul.mubr.bf16.gmra.mrb[0].mxu0 %v377
        %v505 = vpop.f32.mrb[0].mxu0
        %v506 = vadd.f32 %v413, %v505
        %v507 = vpop.f32.mrb[0].mxu0
        %v508 = vpop.f32.mrb[0].mxu0
        %v509 = vadd.f32 %v413, %v508
        %v510 = vpop.f32.mrb[0].mxu0
        %511 = vmatprep.mubr.bf16.mxu0 0
        %512 = vmatmul.mubr.bf16.gmra.mrb[0].mxu0 %v378
        %v513 = vpop.f32.mrb[0].mxu0
        %v514 = vadd.f32 %v413, %v513
        %v515 = vpop.f32.mrb[0].mxu0
        %v516 = vpop.f32.mrb[0].mxu0
        %v517 = vadd.f32 %v413, %v516
        %v518 = vpop.f32.mrb[0].mxu0
        %519 = vmatprep.mubr.bf16.mxu0 0
        %520 = vmatmul.mubr.bf16.gmra.mrb[0].mxu0 %v379
        %v521 = vpop.f32.mrb[0].mxu0
        %v522 = vadd.f32 %v413, %v521
        %v523 = vpop.f32.mrb[0].mxu0
        %v524 = vpop.f32.mrb[0].mxu0
        %v525 = vadd.f32 %v413, %v524
        %v526 = vpop.f32.mrb[0].mxu0
        %527 = vmatprep.mubr.bf16.mxu0 0
        %528 = vmatmul.mubr.bf16.gmra.mrb[0].mxu0 %v380
        %v529 = vpop.f32.mrb[0].mxu0
        %v530 = vadd.f32 %v413, %v529
        %v531 = vpop.f32.mrb[0].mxu0
        %v532 = vpop.f32.mrb[0].mxu0
        %v533 = vadd.f32 %v413, %v532
        %v534 = vpop.f32.mrb[0].mxu0
        %535 = vmatprep.mubr.bf16.mxu0 0
        %536 = vmatmul.mubr.bf16.gmra.mrb[0].mxu0 %v381
        %v537 = vpop.f32.mrb[0].mxu0
        %v538 = vadd.f32 %v413, %v537
        %v539 = vpop.f32.mrb[0].mxu0
        %v540 = vpop.f32.mrb[0].mxu0
        %v541 = vadd.f32 %v413, %v540
        %v542 = vpop.f32.mrb[0].mxu0
        %543 = vmatprep.mubr.bf16.mxu0 0
        %544 = vmatmul.mubr.bf16.gmra.mrb[0].mxu0 %v382
        %v545 = vpop.f32.mrb[0].mxu0
        %v546 = vadd.f32 %v413, %v545
        %v547 = vpop.f32.mrb[0].mxu0
        %v548 = vpop.f32.mrb[0].mxu0
        %v549 = vadd.f32 %v413, %v548
        %v550 = vpop.f32.mrb[0].mxu0
        %551 = vmatprep.mubr.bf16.mxu0 0
        %552 = vmatmul.mubr.bf16.gmra.mrb[0].mxu0 %v383
        %v553 = vpop.f32.mrb[0].mxu0
        %v554 = vadd.f32 %v413, %v553
        %v555 = vpop.f32.mrb[0].mxu0
        %v556 = vpop.f32.mrb[0].mxu0
        %v557 = vadd.f32 %v413, %v556
        %v558 = vpop.f32.mrb[0].mxu0
        %559 = vmatprep.mubr.bf16.mxu0 0
        %560 = vmatmul.mubr.bf16.gmra.mrb[0].mxu0 %v384
        %v561 = vpop.f32.mrb[0].mxu0
        %v562 = vadd.f32 %v413, %v561
        %v563 = vpop.f32.mrb[0].mxu0
        %v564 = vpop.f32.mrb[0].mxu0
        %v565 = vadd.f32 %v413, %v564
        %v566 = vpop.f32.mrb[0].mxu0
        %567 = vmatprep.mubr.bf16.mxu0 0
        %568 = vmatmul.mubr.bf16.gmra.mrb[0].mxu0 %v385
        %v569 = vpop.f32.mrb[0].mxu0
        %v570 = vadd.f32 %v413, %v569
        %v571 = vpop.f32.mrb[0].mxu0
        %v572 = vpop.f32.mrb[0].mxu0
        %v573 = vadd.f32 %v413, %v572
        %v574 = vpop.f32.mrb[0].mxu0
        %575 = vmatprep.mubr.bf16.mxu0 0
        %576 = vmatmul.mubr.bf16.gmra.mrb[0].mxu0 %v386
        %v577 = vpop.f32.mrb[0].mxu0
        %v578 = vadd.f32 %v413, %v577
        %v579 = vpop.f32.mrb[0].mxu0
        %v580 = vpop.f32.mrb[0].mxu0
        %v581 = vadd.f32 %v413, %v580
        %v582 = vpop.f32.mrb[0].mxu0
        %583 = vmatprep.mubr.bf16.mxu0 0
        %584 = vmatmul.mubr.bf16.gmra.mrb[0].mxu0 %v387
        %v585 = vpop.f32.mrb[0].mxu0
        %v586 = vadd.f32 %v413, %v585
        %v587 = vpop.f32.mrb[0].mxu0
        %v588 = vpop.f32.mrb[0].mxu0
        %v589 = vadd.f32 %v413, %v588
        %v590 = vpop.f32.mrb[0].mxu0
        %591 = vmatprep.mubr.bf16.mxu0 0
        %592 = vmatmul.mubr.bf16.gmra.mrb[0].mxu0 %v388
        %v593 = vpop.f32.mrb[0].mxu0
        %v594 = vadd.f32 %v413, %v593
        %v595 = vpop.f32.mrb[0].mxu0
        %v596 = vpop.f32.mrb[0].mxu0
        %v597 = vadd.f32 %v413, %v596
        %v598 = vpop.f32.mrb[0].mxu0
        %599 = vmatprep.mubr.bf16.mxu0 0
        %600 = vmatmul.mubr.bf16.gmra.mrb[0].mxu0 %v389
        %v601 = vpop.f32.mrb[0].mxu0
        %v602 = vadd.f32 %v413, %v601
        %v603 = vpop.f32.mrb[0].mxu0
        %v604 = vpop.f32.mrb[0].mxu0
        %v605 = vadd.f32 %v413, %v604
        %v606 = vpop.f32.mrb[0].mxu0
        %607 = vmatprep.mubr.bf16.mxu0 0
        %608 = vmatmul.mubr.bf16.gmra.mrb[0].mxu0 %v390
        %v609 = vpop.f32.mrb[0].mxu0
        %v610 = vadd.f32 %v413, %v609
        %v611 = vpop.f32.mrb[0].mxu0
        %v612 = vpop.f32.mrb[0].mxu0
        %v613 = vadd.f32 %v413, %v612
        %v614 = vpop.f32.mrb[0].mxu0
        %615 = vmatprep.mubr.bf16.mxu0 0
        %616 = vmatmul.mubr.bf16.gmra.mrb[0].mxu0 %v391
        %v617 = vpop.f32.mrb[0].mxu0
        %v618 = vadd.f32 %v413, %v617
        %v619 = vpop.f32.mrb[0].mxu0
        %v620 = vpop.f32.mrb[0].mxu0
        %v621 = vadd.f32 %v413, %v620
        %v622 = vpop.f32.mrb[0].mxu0
        %623 = vdwg.mxu0
        %v624 = vmax.f32 %v498, 0.0
        %v625 = vmax.f32 %v501, 0.0
        %v626 = vmax.f32 %v506, 0.0
        %v627 = vmax.f32 %v509, 0.0
        %v628 = vmax.f32 %v514, 0.0
        %v629 = vmax.f32 %v517, 0.0
        %v630 = vmax.f32 %v522, 0.0
        %v631 = vmax.f32 %v525, 0.0
        %v632 = vmax.f32 %v530, 0.0
        %v633 = vmax.f32 %v533, 0.0
        %v634 = vmax.f32 %v538, 0.0
        %v635 = vmax.f32 %v541, 0.0
        %v636 = vmax.f32 %v546, 0.0
        %v637 = vmax.f32 %v549, 0.0
        %v638 = vmax.f32 %v554, 0.0
        %v639 = vmax.f32 %v557, 0.0
        %v640 = vmax.f32 %v562, 0.0
        %v641 = vmax.f32 %v565, 0.0
        %v642 = vmax.f32 %v570, 0.0
        %v643 = vmax.f32 %v573, 0.0
        %v644 = vmax.f32 %v578, 0.0
        %v645 = vmax.f32 %v581, 0.0
        %v646 = vmax.f32 %v586, 0.0
        %v647 = vmax.f32 %v589, 0.0
        %v648 = vmax.f32 %v594, 0.0
        %v649 = vmax.f32 %v597, 0.0
        %v650 = vmax.f32 %v602, 0.0
        %v651 = vmax.f32 %v605, 0.0
        %v652 = vmax.f32 %v610, 0.0
        %v653 = vmax.f32 %v613, 0.0
        %v654 = vmax.f32 %v618, 0.0
        %v655 = vmax.f32 %v621, 0.0
        %656 = vst [vmem:[#allocation2] sm:$0xf] 0
        %657 = vst [vmem:[#allocation2 + $0x4] sm:$0xf] 0
        %658 = vst [vmem:[#allocation2 + $0x8] sm:$0xf] 0
        %659 = vst [vmem:[#allocation2 + $0xc] sm:$0xf] 0
        %660 = vst [vmem:[#allocation2 + $0x10] sm:$0xf] 0
        %661 = vst [vmem:[#allocation2 + $0x14] sm:$0xf] 0
        %662 = vst [vmem:[#allocation2 + $0x18] sm:$0xf] 0
        %663 = vst [vmem:[#allocation2 + $0x1c] sm:$0xf] 0
        %664 = vst [vmem:[#allocation2 + $0x20] sm:$0xf] 0
        %665 = vst [vmem:[#allocation2 + $0x24] sm:$0xf] 0
        %666 = vst [vmem:[#allocation2 + $0x28] sm:$0xf] 0
        %667 = vst [vmem:[#allocation2 + $0x2c] sm:$0xf] 0
        %668 = vst [vmem:[#allocation2 + $0x30] sm:$0xf] 0
        %669 = vst [vmem:[#allocation2 + $0x34] sm:$0xf] 0
        %670 = vst [vmem:[#allocation2 + $0x38] sm:$0xf] 0
        %671 = vst [vmem:[#allocation2 + $0x3c] sm:$0xf] 0
        %672 = vst [vmem:[#allocation2 + $0x40] sm:$0xf] 0
        %673 = vst [vmem:[#allocation2 + $0x44] sm:$0xf] 0
        %674 = vst [vmem:[#allocation2 + $0x48] sm:$0xf] 0
        %675 = vst [vmem:[#allocation2 + $0x4c] sm:$0xf] 0
        %676 = vst [vmem:[#allocation2 + $0x50] sm:$0xf] 0
        %677 = vst [vmem:[#allocation2 + $0x54] sm:$0xf] 0
        %678 = vst [vmem:[#allocation2 + $0x58] sm:$0xf] 0
        %679 = vst [vmem:[#allocation2 + $0x5c] sm:$0xf] 0
        %680 = vst [vmem:[#allocation2 + $0x60] sm:$0xf] 0
        %681 = vst [vmem:[#allocation2 + $0x64] sm:$0xf] 0
        %682 = vst [vmem:[#allocation2 + $0x68] sm:$0xf] 0
        %683 = vst [vmem:[#allocation2 + $0x6c] sm:$0xf] 0
        %684 = vst [vmem:[#allocation2 + $0x70] sm:$0xf] 0
        %685 = vst [vmem:[#allocation2 + $0x74] sm:$0xf] 0
        %686 = vst [vmem:[#allocation2 + $0x78] sm:$0xf] 0
        %687 = vst [vmem:[#allocation2 + $0x7c] sm:$0xf] 0
        %688 = vst [vmem:[#allocation2 + $0x80] sm:$0xf] 0
        %689 = vst [vmem:[#allocation2 + $0x84] sm:$0xf] 0
        %690 = vst [vmem:[#allocation2 + $0x88] sm:$0xf] 0
        %691 = vst [vmem:[#allocation2 + $0x8c] sm:$0xf] 0
        %692 = vst [vmem:[#allocation2 + $0x90] sm:$0x1] 0
        %v693 = vpack.c.bf16 %v625, %v624
        %v694 = vpack.c.bf16 %v627, %v626
        %v695 = vpack.c.bf16 %v629, %v628
        %v696 = vpack.c.bf16 %v631, %v630
        %v697 = vpack.c.bf16 %v633, %v632
        %v698 = vpack.c.bf16 %v635, %v634
        %v699 = vpack.c.bf16 %v637, %v636
        %v700 = vpack.c.bf16 %v639, %v638
        %v701 = vpack.c.bf16 %v641, %v640
        %v702 = vpack.c.bf16 %v643, %v642
        %v703 = vpack.c.bf16 %v645, %v644
        %v704 = vpack.c.bf16 %v647, %v646
        %v705 = vpack.c.bf16 %v649, %v648
        %v706 = vpack.c.bf16 %v651, %v650
        %v707 = vpack.c.bf16 %v653, %v652
        %v708 = vpack.c.bf16 %v655, %v654
        %v725 = vunpack.c.l.b16 %v693
        %v726 = vunpack.c.h.b16 %v693
        %v727 = vunpack.c.l.b16 %v694
        %v728 = vunpack.c.h.b16 %v694
        %v729 = vunpack.c.l.b16 %v695
        %v730 = vunpack.c.h.b16 %v695
        %v731 = vunpack.c.l.b16 %v696
        %v732 = vunpack.c.h.b16 %v696
        %v733 = vunpack.c.l.b16 %v697
        %v734 = vunpack.c.h.b16 %v697
        %v735 = vunpack.c.l.b16 %v698
        %v736 = vunpack.c.h.b16 %v698
        %v737 = vunpack.c.l.b16 %v699
        %v738 = vunpack.c.h.b16 %v699
        %v739 = vunpack.c.l.b16 %v700
        %v740 = vunpack.c.h.b16 %v700
        %v741 = vunpack.c.l.b16 %v701
        %v742 = vunpack.c.h.b16 %v701
        %v743 = vunpack.c.l.b16 %v702
        %v744 = vunpack.c.h.b16 %v702
        %v745 = vunpack.c.l.b16 %v703
        %v746 = vunpack.c.h.b16 %v703
        %v747 = vunpack.c.l.b16 %v704
        %v748 = vunpack.c.h.b16 %v704
        %v749 = vunpack.c.l.b16 %v705
        %v750 = vunpack.c.h.b16 %v705
        %v751 = vunpack.c.l.b16 %v706
        %v752 = vunpack.c.h.b16 %v706
        %v753 = vunpack.c.l.b16 %v707
        %v754 = vunpack.c.h.b16 %v707
        %v755 = vunpack.c.l.b16 %v708
        %v756 = vunpack.c.h.b16 %v708
        %v757 = vpack.c.b16 %v725, %v725
        %v758 = vpack.c.b16 %v726, %v726
        %v759 = vpack.c.b16 %v727, %v727
        %v760 = vpack.c.b16 %v728, %v728
        %v761 = vpack.c.b16 %v729, %v729
        %v762 = vpack.c.b16 %v730, %v730
        %v763 = vpack.c.b16 %v731, %v731
        %v764 = vpack.c.b16 %v732, %v732
        %v765 = vpack.c.b16 %v733, %v733
        %v766 = vpack.c.b16 %v734, %v734
        %v767 = vpack.c.b16 %v735, %v735
        %v768 = vpack.c.b16 %v736, %v736
        %v769 = vpack.c.b16 %v737, %v737
        %v770 = vpack.c.b16 %v738, %v738
        %v771 = vpack.c.b16 %v739, %v739
        %v772 = vpack.c.b16 %v740, %v740
        %v773 = vpack.c.b16 %v741, %v741
        %v774 = vpack.c.b16 %v742, %v742
        %v775 = vpack.c.b16 %v743, %v743
        %v776 = vpack.c.b16 %v744, %v744
        %v777 = vpack.c.b16 %v745, %v745
        %v778 = vpack.c.b16 %v746, %v746
        %v779 = vpack.c.b16 %v747, %v747
        %v780 = vpack.c.b16 %v748, %v748
        %v781 = vpack.c.b16 %v749, %v749
        %v782 = vpack.c.b16 %v750, %v750
        %v783 = vpack.c.b16 %v751, %v751
        %v784 = vpack.c.b16 %v752, %v752
        %v785 = vpack.c.b16 %v753, %v753
        %v786 = vpack.c.b16 %v754, %v754
        %v787 = vpack.c.b16 %v755, %v755
        %v788 = vpack.c.b16 %v756, %v756
        %vm789 = vsmask.f32 256
        %vm790 = vsmask.f32 4368
        %vm791 = vmor %vm789, %vm790
        %v793 = vshrl.u32 %v757, 16
        %v795 = vrot.slane %v793, 7
        %v796 = vshll.u32 %v757, 16
        %v798 = vor.u32 %v795, %v796
        %v799 = vrot.slane %v795, 4
        %v801 = vshrl.u32 %v758, 16
        %v803 = vrot.slane %v801, 7
        %v804 = vshll.u32 %v758, 16
        %v806 = vor.u32 %v803, %v804
        %v807 = vsel %vm791, %v799, %v806
        %v808 = vrot.slane %v803, 4
        %v810 = vshrl.u32 %v759, 16
        %v812 = vrot.slane %v810, 7
        %v813 = vshll.u32 %v759, 16
        %v815 = vor.u32 %v812, %v813
        %v816 = vsel %vm791, %v808, %v815
        %v817 = vrot.slane %v812, 4
        %v819 = vshrl.u32 %v760, 16
        %v821 = vrot.slane %v819, 7
        %v822 = vshll.u32 %v760, 16
        %v824 = vor.u32 %v821, %v822
        %v825 = vsel %vm791, %v817, %v824
        %v826 = vrot.slane %v821, 4
        %v828 = vshrl.u32 %v761, 16
        %v830 = vrot.slane %v828, 7
        %v831 = vshll.u32 %v761, 16
        %v833 = vor.u32 %v830, %v831
        %v834 = vsel %vm791, %v826, %v833
        %v835 = vrot.slane %v830, 4
        %v837 = vshrl.u32 %v762, 16
        %v839 = vrot.slane %v837, 7
        %v840 = vshll.u32 %v762, 16
        %v842 = vor.u32 %v839, %v840
        %v843 = vsel %vm791, %v835, %v842
        %v844 = vrot.slane %v839, 4
        %v846 = vshrl.u32 %v763, 16
        %v848 = vrot.slane %v846, 7
        %v849 = vshll.u32 %v763, 16
        %v851 = vor.u32 %v848, %v849
        %v852 = vsel %vm791, %v844, %v851
        %v853 = vrot.slane %v848, 4
        %v855 = vshrl.u32 %v764, 16
        %v857 = vrot.slane %v855, 7
        %v858 = vshll.u32 %v764, 16
        %v860 = vor.u32 %v857, %v858
        %v861 = vsel %vm791, %v853, %v860
        %v862 = vrot.slane %v857, 4
        %v864 = vshrl.u32 %v765, 16
        %v866 = vrot.slane %v864, 7
        %v867 = vshll.u32 %v765, 16
        %v869 = vor.u32 %v866, %v867
        %v870 = vsel %vm791, %v862, %v869
        %v871 = vrot.slane %v866, 4
        %v873 = vshrl.u32 %v766, 16
        %v875 = vrot.slane %v873, 7
        %v876 = vshll.u32 %v766, 16
        %v878 = vor.u32 %v875, %v876
        %v879 = vsel %vm791, %v871, %v878
        %v880 = vrot.slane %v875, 4
        %v882 = vshrl.u32 %v767, 16
        %v884 = vrot.slane %v882, 7
        %v885 = vshll.u32 %v767, 16
        %v887 = vor.u32 %v884, %v885
        %v888 = vsel %vm791, %v880, %v887
        %v889 = vrot.slane %v884, 4
        %v891 = vshrl.u32 %v768, 16
        %v893 = vrot.slane %v891, 7
        %v894 = vshll.u32 %v768, 16
        %v896 = vor.u32 %v893, %v894
        %v897 = vsel %vm791, %v889, %v896
        %v898 = vrot.slane %v893, 4
        %v900 = vshrl.u32 %v769, 16
        %v902 = vrot.slane %v900, 7
        %v903 = vshll.u32 %v769, 16
        %v905 = vor.u32 %v902, %v903
        %v906 = vsel %vm791, %v898, %v905
        %v907 = vrot.slane %v902, 4
        %v909 = vshrl.u32 %v770, 16
        %v911 = vrot.slane %v909, 7
        %v912 = vshll.u32 %v770, 16
        %v914 = vor.u32 %v911, %v912
        %v915 = vsel %vm791, %v907, %v914
        %v916 = vrot.slane %v911, 4
        %v918 = vshrl.u32 %v771, 16
        %v920 = vrot.slane %v918, 7
        %v921 = vshll.u32 %v771, 16
        %v923 = vor.u32 %v920, %v921
        %v924 = vsel %vm791, %v916, %v923
        %v925 = vrot.slane %v920, 4
        %v927 = vshrl.u32 %v772, 16
        %v929 = vrot.slane %v927, 7
        %v930 = vshll.u32 %v772, 16
        %v932 = vor.u32 %v929, %v930
        %v933 = vsel %vm791, %v925, %v932
        %v934 = vrot.slane %v929, 4
        %v936 = vshrl.u32 %v773, 16
        %v938 = vrot.slane %v936, 7
        %v939 = vshll.u32 %v773, 16
        %v941 = vor.u32 %v938, %v939
        %v942 = vsel %vm791, %v934, %v941
        %v943 = vrot.slane %v938, 4
        %v945 = vshrl.u32 %v774, 16
        %v947 = vrot.slane %v945, 7
        %v948 = vshll.u32 %v774, 16
        %v950 = vor.u32 %v947, %v948
        %v951 = vsel %vm791, %v943, %v950
        %v952 = vrot.slane %v947, 4
        %v954 = vshrl.u32 %v775, 16
        %v956 = vrot.slane %v954, 7
        %v957 = vshll.u32 %v775, 16
        %v959 = vor.u32 %v956, %v957
        %v960 = vsel %vm791, %v952, %v959
        %v961 = vrot.slane %v956, 4
        %v963 = vshrl.u32 %v776, 16
        %v965 = vrot.slane %v963, 7
        %v966 = vshll.u32 %v776, 16
        %v968 = vor.u32 %v965, %v966
        %v969 = vsel %vm791, %v961, %v968
        %v970 = vrot.slane %v965, 4
        %v972 = vshrl.u32 %v777, 16
        %v974 = vrot.slane %v972, 7
        %v975 = vshll.u32 %v777, 16
        %v977 = vor.u32 %v974, %v975
        %v978 = vsel %vm791, %v970, %v977
        %v979 = vrot.slane %v974, 4
        %v981 = vshrl.u32 %v778, 16
        %v983 = vrot.slane %v981, 7
        %v984 = vshll.u32 %v778, 16
        %v986 = vor.u32 %v983, %v984
        %v987 = vsel %vm791, %v979, %v986
        %v988 = vrot.slane %v983, 4
        %v990 = vshrl.u32 %v779, 16
        %v992 = vrot.slane %v990, 7
        %v993 = vshll.u32 %v779, 16
        %v995 = vor.u32 %v992, %v993
        %v996 = vsel %vm791, %v988, %v995
        %v997 = vrot.slane %v992, 4
        %v999 = vshrl.u32 %v780, 16
        %v1001 = vrot.slane %v999, 7
        %v1002 = vshll.u32 %v780, 16
        %v1004 = vor.u32 %v1001, %v1002
        %v1005 = vsel %vm791, %v997, %v1004
        %v1006 = vrot.slane %v1001, 4
        %v1008 = vshrl.u32 %v781, 16
        %v1010 = vrot.slane %v1008, 7
        %v1011 = vshll.u32 %v781, 16
        %v1013 = vor.u32 %v1010, %v1011
        %v1014 = vsel %vm791, %v1006, %v1013
        %v1015 = vrot.slane %v1010, 4
        %v1017 = vshrl.u32 %v782, 16
        %v1019 = vrot.slane %v1017, 7
        %v1020 = vshll.u32 %v782, 16
        %v1022 = vor.u32 %v1019, %v1020
        %v1023 = vsel %vm791, %v1015, %v1022
        %v1024 = vrot.slane %v1019, 4
        %v1026 = vshrl.u32 %v783, 16
        %v1028 = vrot.slane %v1026, 7
        %v1029 = vshll.u32 %v783, 16
        %v1031 = vor.u32 %v1028, %v1029
        %v1032 = vsel %vm791, %v1024, %v1031
        %v1033 = vrot.slane %v1028, 4
        %v1035 = vshrl.u32 %v784, 16
        %v1037 = vrot.slane %v1035, 7
        %v1038 = vshll.u32 %v784, 16
        %v1040 = vor.u32 %v1037, %v1038
        %v1041 = vsel %vm791, %v1033, %v1040
        %v1042 = vrot.slane %v1037, 4
        %v1044 = vshrl.u32 %v785, 16
        %v1046 = vrot.slane %v1044, 7
        %v1047 = vshll.u32 %v785, 16
        %v1049 = vor.u32 %v1046, %v1047
        %v1050 = vsel %vm791, %v1042, %v1049
        %v1051 = vrot.slane %v1046, 4
        %v1053 = vshrl.u32 %v786, 16
        %v1055 = vrot.slane %v1053, 7
        %v1056 = vshll.u32 %v786, 16
        %v1058 = vor.u32 %v1055, %v1056
        %v1059 = vsel %vm791, %v1051, %v1058
        %v1060 = vrot.slane %v1055, 4
        %v1062 = vshrl.u32 %v787, 16
        %v1064 = vrot.slane %v1062, 7
        %v1065 = vshll.u32 %v787, 16
        %v1067 = vor.u32 %v1064, %v1065
        %v1068 = vsel %vm791, %v1060, %v1067
        %v1069 = vrot.slane %v1064, 4
        %v1071 = vshrl.u32 %v788, 16
        %v1073 = vrot.slane %v1071, 7
        %v1074 = vshll.u32 %v788, 16
        %v1076 = vor.u32 %v1073, %v1074
        %v1077 = vsel %vm791, %v1069, %v1076
        %v1078 = vrot.slane %v1073, 4
        %vm1112 = vcmask 1043456
        %vm1113 = vsmask.f32 7938
        %vm1114 = vmand %vm1112, %vm1113
        %v1115 = vld [vmem:[#allocation2 + $0x8] sm:$0xf]
        %v1116 = vsel %vm1114, %v798, %v1115
        %1117 = vst [vmem:[#allocation2 + $0x8] sm:$0xf] %v1116
        %1118 = vst [vmem:[#allocation2 + $0xc] sm:$0xf] %v807
        %1119 = vst [vmem:[#allocation2 + $0x10] sm:$0xf] %v816
        %1120 = vst [vmem:[#allocation2 + $0x14] sm:$0xf] %v825
        %1121 = vst [vmem:[#allocation2 + $0x18] sm:$0xf] %v834
        %1122 = vst [vmem:[#allocation2 + $0x1c] sm:$0xf] %v843
        %1123 = vst [vmem:[#allocation2 + $0x20] sm:$0xf] %v852
        %1124 = vst [vmem:[#allocation2 + $0x24] sm:$0xf] %v861
        %1125 = vst [vmem:[#allocation2 + $0x28] sm:$0xf] %v870
        %1126 = vst [vmem:[#allocation2 + $0x2c] sm:$0xf] %v879
        %1127 = vst [vmem:[#allocation2 + $0x30] sm:$0xf] %v888
        %1128 = vst [vmem:[#allocation2 + $0x34] sm:$0xf] %v897
        %1129 = vst [vmem:[#allocation2 + $0x38] sm:$0xf] %v906
        %1130 = vst [vmem:[#allocation2 + $0x3c] sm:$0xf] %v915
        %1131 = vst [vmem:[#allocation2 + $0x40] sm:$0xf] %v924
        %1132 = vst [vmem:[#allocation2 + $0x44] sm:$0xf] %v933
        %1133 = vst [vmem:[#allocation2 + $0x48] sm:$0xf] %v942
        %1134 = vst [vmem:[#allocation2 + $0x4c] sm:$0xf] %v951
        %1135 = vst [vmem:[#allocation2 + $0x50] sm:$0xf] %v960
        %1136 = vst [vmem:[#allocation2 + $0x54] sm:$0xf] %v969
        %1137 = vst [vmem:[#allocation2 + $0x58] sm:$0xf] %v978
        %1138 = vst [vmem:[#allocation2 + $0x5c] sm:$0xf] %v987
        %1139 = vst [vmem:[#allocation2 + $0x60] sm:$0xf] %v996
        %1140 = vst [vmem:[#allocation2 + $0x64] sm:$0xf] %v1005
        %1141 = vst [vmem:[#allocation2 + $0x68] sm:$0xf] %v1014
        %1142 = vst [vmem:[#allocation2 + $0x6c] sm:$0xf] %v1023
        %1143 = vst [vmem:[#allocation2 + $0x70] sm:$0xf] %v1032
        %1144 = vst [vmem:[#allocation2 + $0x74] sm:$0xf] %v1041
        %1145 = vst [vmem:[#allocation2 + $0x78] sm:$0xf] %v1050
        %1146 = vst [vmem:[#allocation2 + $0x7c] sm:$0xf] %v1059
        %1147 = vst [vmem:[#allocation2 + $0x80] sm:$0xf] %v1068
        %1148 = vst [vmem:[#allocation2 + $0x84] sm:$0xf] %v1077
        %vm1149 = vcmask 1040384
        %vm1150 = vmand %vm1149, %vm789
        %v1151 = vld [vmem:[#allocation2 + $0x88] sm:$0x1]
        %v1152 = vsel %vm1150, %v1078, %v1151
        %1153 = vst [vmem:[#allocation2 + $0x88] sm:$0x1] %v1152
        %v1154 = vlaneseq
        %v1155 = vshrl.u32 %v1154, 7
        %v1156 = vadd.s32 %v1155, 8
        %vm1157 = vcmp.ne.s32.totalorder %v1155, 0
        %vm1158 = vcmp.ne.s32.totalorder %v1156, 0
        %vm1159 = vcmp.ne.s32.totalorder %v1155, 15
        %vm1160 = vcmp.ne.s32.totalorder %v1156, 15
        %v1161 = vld [vmem:[#allocation2] sm:$0xf]
        %v1162 = vld [vmem:[#allocation2 + $0x4] sm:$0xf]
        %v1163 = vld [vmem:[#allocation2 + $0x8] sm:$0xf]
        %v1164 = vld [vmem:[#allocation2 + $0xc] sm:$0xf]
        %v1165 = vld [vmem:[#allocation2 + $0x10] sm:$0xf]
        %v1166 = vld [vmem:[#allocation2 + $0x14] sm:$0xf]
        %v1167 = vld [vmem:[#allocation2 + $0x18] sm:$0xf]
        %v1168 = vld [vmem:[#allocation2 + $0x1c] sm:$0xf]
        %v1169 = vld [vmem:[#allocation2 + $0x20] sm:$0xf]
        %v1170 = vld [vmem:[#allocation2 + $0x24] sm:$0xf]
        %v1171 = vld [vmem:[#allocation2 + $0x28] sm:$0xf]
        %v1172 = vld [vmem:[#allocation2 + $0x2c] sm:$0xf]
        %v1173 = vld [vmem:[#allocation2 + $0x30] sm:$0xf]
        %v1174 = vld [vmem:[#allocation2 + $0x34] sm:$0xf]
        %v1175 = vld [vmem:[#allocation2 + $0x38] sm:$0xf]
        %v1176 = vld [vmem:[#allocation2 + $0x3c] sm:$0xf]
        %v1177 = vld [vmem:[#allocation2 + $0x40] sm:$0xf]
        %v1178 = vld [vmem:[#allocation2 + $0x44] sm:$0xf]
        %v1179 = vld [vmem:[#allocation2 + $0x48] sm:$0xf]
        %v1180 = vld [vmem:[#allocation2 + $0x4c] sm:$0xf]
        %v1181 = vld [vmem:[#allocation2 + $0x50] sm:$0xf]
        %v1182 = vld [vmem:[#allocation2 + $0x54] sm:$0xf]
        %v1183 = vld [vmem:[#allocation2 + $0x58] sm:$0xf]
        %v1184 = vld [vmem:[#allocation2 + $0x5c] sm:$0xf]
        %v1185 = vld [vmem:[#allocation2 + $0x60] sm:$0xf]
        %v1186 = vld [vmem:[#allocation2 + $0x64] sm:$0xf]
        %v1187 = vld [vmem:[#allocation2 + $0x68] sm:$0xf]
        %v1188 = vld [vmem:[#allocation2 + $0x6c] sm:$0xf]
        %v1189 = vld [vmem:[#allocation2 + $0x70] sm:$0xf]
        %v1190 = vld [vmem:[#allocation2 + $0x74] sm:$0xf]
        %v1191 = vld [vmem:[#allocation2 + $0x78] sm:$0xf]
        %v1192 = vld [vmem:[#allocation2 + $0x7c] sm:$0xf]
        %vm1193 = vmpackc.low %vm1157, %vm1157
        %vm1194 = vmpackc.low %vm1158, %vm1158
        %v1195 = vsel %vm1193, %v1161, 0
        %v1196 = vsel %vm1194, %v1162, 0
        %v1197 = vsel %vm1193, %v1163, 0
        %v1198 = vsel %vm1194, %v1164, 0
        %v1199 = vsel %vm1193, %v1165, 0
        %v1200 = vsel %vm1194, %v1166, 0
        %v1201 = vsel %vm1193, %v1167, 0
        %v1202 = vsel %vm1194, %v1168, 0
        %v1203 = vsel %vm1193, %v1169, 0
        %v1204 = vsel %vm1194, %v1170, 0
        %v1205 = vsel %vm1193, %v1171, 0
        %v1206 = vsel %vm1194, %v1172, 0
        %v1207 = vsel %vm1193, %v1173, 0
        %v1208 = vsel %vm1194, %v1174, 0
        %v1209 = vsel %vm1193, %v1175, 0
        %v1210 = vsel %vm1194, %v1176, 0
        %v1211 = vsel %vm1193, %v1177, 0
        %v1212 = vsel %vm1194, %v1178, 0
        %v1213 = vsel %vm1193, %v1179, 0
        %v1214 = vsel %vm1194, %v1180, 0
        %v1215 = vsel %vm1193, %v1181, 0
        %v1216 = vsel %vm1194, %v1182, 0
        %v1217 = vsel %vm1193, %v1183, 0
        %v1218 = vsel %vm1194, %v1184, 0
        %v1219 = vsel %vm1193, %v1185, 0
        %v1220 = vsel %vm1194, %v1186, 0
        %v1221 = vsel %vm1193, %v1187, 0
        %v1222 = vsel %vm1194, %v1188, 0
        %v1223 = vsel %vm1193, %v1189, 0
        %v1224 = vsel %vm1194, %v1190, 0
        %v1225 = vsel %vm1193, %v1191, 0
        %v1226 = vsel %vm1194, %v1192, 0
        %v1227 = vld [vmem:[#allocation8] sm:$0xf]
        %v1228 = vld [vmem:[#allocation8 + $0x4] sm:$0xf]
        %v1229 = vld [vmem:[#allocation8 + $0x8] sm:$0xf]
        %v1230 = vld [vmem:[#allocation8 + $0xc] sm:$0xf]
        %v1231 = vld [vmem:[#allocation8 + $0x10] sm:$0xf]
        %v1232 = vld [vmem:[#allocation8 + $0x14] sm:$0xf]
        %v1233 = vld [vmem:[#allocation8 + $0x18] sm:$0xf]
        %v1234 = vld [vmem:[#allocation8 + $0x1c] sm:$0xf]
        %v1235 = vld [vmem:[#allocation8 + $0x20] sm:$0xf]
        %v1236 = vld [vmem:[#allocation8 + $0x24] sm:$0xf]
        %v1237 = vld [vmem:[#allocation8 + $0x28] sm:$0xf]
        %v1238 = vld [vmem:[#allocation8 + $0x2c] sm:$0xf]
        %v1239 = vld [vmem:[#allocation8 + $0x30] sm:$0xf]
        %v1240 = vld [vmem:[#allocation8 + $0x34] sm:$0xf]
        %v1241 = vld [vmem:[#allocation8 + $0x38] sm:$0xf]
        %v1242 = vld [vmem:[#allocation8 + $0x3c] sm:$0xf]
        %v1243 = vld [vmem:[#allocation2 + $0x80] sm:$0x1]
        %s1244 = scalar_lea.vmem [#allocation8], 64
        %v1245 = vld [vmem:[%s1244] sm:$0xf]
        %v1246 = vld [vmem:[%s1244 + $0x4] sm:$0xf]
        %v1247 = vld [vmem:[%s1244 + $0x8] sm:$0xf]
        %v1248 = vld [vmem:[%s1244 + $0xc] sm:$0xf]
        %v1249 = vld [vmem:[%s1244 + $0x10] sm:$0xf]
        %v1250 = vld [vmem:[%s1244 + $0x14] sm:$0xf]
        %v1251 = vld [vmem:[%s1244 + $0x18] sm:$0xf]
        %v1252 = vld [vmem:[%s1244 + $0x1c] sm:$0xf]
        %v1253 = vld [vmem:[%s1244 + $0x20] sm:$0xf]
        %v1254 = vld [vmem:[%s1244 + $0x24] sm:$0xf]
        %v1255 = vld [vmem:[%s1244 + $0x28] sm:$0xf]
        %v1256 = vld [vmem:[%s1244 + $0x2c] sm:$0xf]
        %v1257 = vld [vmem:[%s1244 + $0x30] sm:$0xf]
        %v1258 = vld [vmem:[%s1244 + $0x34] sm:$0xf]
        %v1259 = vld [vmem:[%s1244 + $0x38] sm:$0xf]
        %v1260 = vld [vmem:[%s1244 + $0x3c] sm:$0xf]
        %v1294 = vunpack.c.l.b16 %v1161
        %v1295 = vunpack.c.l.b16 %v1162
        %v1296 = vunpack.c.l.b16 %v1163
        %v1297 = vunpack.c.l.b16 %v1164
        %v1298 = vunpack.c.l.b16 %v1165
        %v1299 = vunpack.c.l.b16 %v1166
        %v1300 = vunpack.c.l.b16 %v1167
        %v1301 = vunpack.c.l.b16 %v1168
        %v1302 = vunpack.c.l.b16 %v1169
        %v1303 = vunpack.c.l.b16 %v1170
        %v1304 = vunpack.c.l.b16 %v1171
        %v1305 = vunpack.c.l.b16 %v1172
        %v1306 = vunpack.c.l.b16 %v1173
        %v1307 = vunpack.c.l.b16 %v1174
        %v1308 = vunpack.c.l.b16 %v1175
        %v1309 = vunpack.c.l.b16 %v1176
        %v1310 = vunpack.c.l.b16 %v1177
        %v1311 = vunpack.c.l.b16 %v1178
        %v1312 = vunpack.c.l.b16 %v1179
        %v1313 = vunpack.c.l.b16 %v1180
        %v1314 = vunpack.c.l.b16 %v1181
        %v1315 = vunpack.c.l.b16 %v1182
        %v1316 = vunpack.c.l.b16 %v1183
        %v1317 = vunpack.c.l.b16 %v1184
        %v1318 = vunpack.c.l.b16 %v1185
        %v1319 = vunpack.c.l.b16 %v1186
        %v1320 = vunpack.c.l.b16 %v1187
        %v1321 = vunpack.c.l.b16 %v1188
        %v1322 = vunpack.c.l.b16 %v1189
        %v1323 = vunpack.c.l.b16 %v1190
        %v1324 = vunpack.c.l.b16 %v1191
        %v1325 = vunpack.c.l.b16 %v1192
        %v1326 = vunpack.c.l.b16 %v1243
        %v1327 = vpack.c.b16 %v1295, %v1294
        %v1328 = vpack.c.b16 %v1297, %v1296
        %v1329 = vpack.c.b16 %v1299, %v1298
        %v1330 = vpack.c.b16 %v1301, %v1300
        %v1331 = vpack.c.b16 %v1303, %v1302
        %v1332 = vpack.c.b16 %v1305, %v1304
        %v1333 = vpack.c.b16 %v1307, %v1306
        %v1334 = vpack.c.b16 %v1309, %v1308
        %v1335 = vpack.c.b16 %v1311, %v1310
        %v1336 = vpack.c.b16 %v1313, %v1312
        %v1337 = vpack.c.b16 %v1315, %v1314
        %v1338 = vpack.c.b16 %v1317, %v1316
        %v1339 = vpack.c.b16 %v1319, %v1318
        %v1340 = vpack.c.b16 %v1321, %v1320
        %v1341 = vpack.c.b16 %v1323, %v1322
        %v1342 = vpack.c.b16 %v1325, %v1324
        %v1343 = vpack.c.b16 %v1326, %v1326
        %vm1344 = vsmask.f32 7424
        %v1346 = vshrl.u32 %v1327, 16
        %v1348 = vshll.u32 %v1327, 16
        %v1350 = vrot.slane %v1348, 1
        %v1351 = vor.u32 %v1346, %v1350
        %v1353 = vshll.u32 %v1328, 16
        %v1355 = vrot.slane %v1353, 1
        %v1356 = vsel %vm1344, %v1351, %v1355
        %v1357 = vshrl.u32 %v1328, 16
        %v1359 = vor.u32 %v1357, %v1355
        %v1361 = vshll.u32 %v1329, 16
        %v1363 = vrot.slane %v1361, 1
        %v1364 = vsel %vm1344, %v1359, %v1363
        %v1365 = vshrl.u32 %v1329, 16
        %v1367 = vor.u32 %v1365, %v1363
        %v1369 = vshll.u32 %v1330, 16
        %v1371 = vrot.slane %v1369, 1
        %v1372 = vsel %vm1344, %v1367, %v1371
        %v1373 = vshrl.u32 %v1330, 16
        %v1375 = vor.u32 %v1373, %v1371
        %v1377 = vshll.u32 %v1331, 16
        %v1379 = vrot.slane %v1377, 1
        %v1380 = vsel %vm1344, %v1375, %v1379
        %v1381 = vshrl.u32 %v1331, 16
        %v1383 = vor.u32 %v1381, %v1379
        %v1385 = vshll.u32 %v1332, 16
        %v1387 = vrot.slane %v1385, 1
        %v1388 = vsel %vm1344, %v1383, %v1387
        %v1389 = vshrl.u32 %v1332, 16
        %v1391 = vor.u32 %v1389, %v1387
        %v1393 = vshll.u32 %v1333, 16
        %v1395 = vrot.slane %v1393, 1
        %v1396 = vsel %vm1344, %v1391, %v1395
        %v1397 = vshrl.u32 %v1333, 16
        %v1399 = vor.u32 %v1397, %v1395
        %v1401 = vshll.u32 %v1334, 16
        %v1403 = vrot.slane %v1401, 1
        %v1404 = vsel %vm1344, %v1399, %v1403
        %v1405 = vshrl.u32 %v1334, 16
        %v1407 = vor.u32 %v1405, %v1403
        %v1409 = vshll.u32 %v1335, 16
        %v1411 = vrot.slane %v1409, 1
        %v1412 = vsel %vm1344, %v1407, %v1411
        %v1413 = vshrl.u32 %v1335, 16
        %v1415 = vor.u32 %v1413, %v1411
        %v1417 = vshll.u32 %v1336, 16
        %v1419 = vrot.slane %v1417, 1
        %v1420 = vsel %vm1344, %v1415, %v1419
        %v1421 = vshrl.u32 %v1336, 16
        %v1423 = vor.u32 %v1421, %v1419
        %v1425 = vshll.u32 %v1337, 16
        %v1427 = vrot.slane %v1425, 1
        %v1428 = vsel %vm1344, %v1423, %v1427
        %v1429 = vshrl.u32 %v1337, 16
        %v1431 = vor.u32 %v1429, %v1427
        %v1433 = vshll.u32 %v1338, 16
        %v1435 = vrot.slane %v1433, 1
        %v1436 = vsel %vm1344, %v1431, %v1435
        %v1437 = vshrl.u32 %v1338, 16
        %v1439 = vor.u32 %v1437, %v1435
        %v1441 = vshll.u32 %v1339, 16
        %v1443 = vrot.slane %v1441, 1
        %v1444 = vsel %vm1344, %v1439, %v1443
        %v1445 = vshrl.u32 %v1339, 16
        %v1447 = vor.u32 %v1445, %v1443
        %v1449 = vshll.u32 %v1340, 16
        %v1451 = vrot.slane %v1449, 1
        %v1452 = vsel %vm1344, %v1447, %v1451
        %v1453 = vshrl.u32 %v1340, 16
        %v1455 = vor.u32 %v1453, %v1451
        %v1457 = vshll.u32 %v1341, 16
        %v1459 = vrot.slane %v1457, 1
        %v1460 = vsel %vm1344, %v1455, %v1459
        %v1461 = vshrl.u32 %v1341, 16
        %v1463 = vor.u32 %v1461, %v1459
        %v1465 = vshll.u32 %v1342, 16
        %v1467 = vrot.slane %v1465, 1
        %v1468 = vsel %vm1344, %v1463, %v1467
        %v1469 = vshrl.u32 %v1342, 16
        %v1471 = vor.u32 %v1469, %v1467
        %v1473 = vshll.u32 %v1343, 16
        %v1475 = vrot.slane %v1473, 1
        %v1476 = vsel %vm1344, %v1471, %v1475
        %v1509 = vunpack.c.l.b16 %v1245
        %v1510 = vunpack.c.l.b16 %v1246
        %v1511 = vunpack.c.l.b16 %v1247
        %v1512 = vunpack.c.l.b16 %v1248
        %v1513 = vunpack.c.l.b16 %v1249
        %v1514 = vunpack.c.l.b16 %v1250
        %v1515 = vunpack.c.l.b16 %v1251
        %v1516 = vunpack.c.l.b16 %v1252
        %v1517 = vunpack.c.l.b16 %v1253
        %v1518 = vunpack.c.l.b16 %v1254
        %v1519 = vunpack.c.l.b16 %v1255
        %v1520 = vunpack.c.l.b16 %v1256
        %v1521 = vunpack.c.l.b16 %v1257
        %v1522 = vunpack.c.l.b16 %v1258
        %v1523 = vunpack.c.l.b16 %v1259
        %v1524 = vunpack.c.l.b16 %v1260
        %v1525 = vpack.c.b16 %v1510, %v1509
        %v1526 = vpack.c.b16 %v1512, %v1511
        %v1527 = vpack.c.b16 %v1514, %v1513
        %v1528 = vpack.c.b16 %v1516, %v1515
        %v1529 = vpack.c.b16 %v1518, %v1517
        %v1530 = vpack.c.b16 %v1520, %v1519
        %v1531 = vpack.c.b16 %v1522, %v1521
        %v1532 = vpack.c.b16 %v1524, %v1523
        %1541 = vmatprep.subr.bf16.mxu0 0
        %1542 = vmatpush1.bf16.msra.mxu0 %v1525
        %1543 = vmatprep.subr.bf16.mxu0 0
        %1544 = vmatpush1.bf16.msra.mxu0 %v1526
        %1545 = vmatprep.subr.bf16.mxu0 0
        %1546 = vmatpush1.bf16.msra.mxu0 %v1527
        %1547 = vmatprep.subr.bf16.mxu0 0
        %1548 = vmatpush1.bf16.msra.mxu0 %v1528
        %1549 = vmatprep.subr.bf16.mxu0 0
        %1550 = vmatpush1.bf16.msra.mxu0 %v1529
        %1551 = vmatprep.subr.bf16.mxu0 0
        %1552 = vmatpush1.bf16.msra.mxu0 %v1530
        %1553 = vmatprep.subr.bf16.mxu0 0
        %1554 = vmatpush1.bf16.msra.mxu0 %v1531
        %1555 = vmatprep.subr.bf16.mxu0 0
        %1556 = vmatpush1.bf16.msra.mxu0 %v1532
        %1557 = vmatprep.subr.bf16.mxu0 0
        %1558 = vmatpush1.bf16.msra.mxu0 0
        %1559 = vmatprep.subr.bf16.mxu0 0
        %1560 = vmatpush1.bf16.msra.mxu0 0
        %1561 = vmatprep.subr.bf16.mxu0 0
        %1562 = vmatpush1.bf16.msra.mxu0 0
        %1563 = vmatprep.subr.bf16.mxu0 0
        %1564 = vmatpush1.bf16.msra.mxu0 0
        %1565 = vmatprep.subr.bf16.mxu0 0
        %1566 = vmatpush1.bf16.msra.mxu0 0
        %1567 = vmatprep.subr.bf16.mxu0 0
        %1568 = vmatpush1.bf16.msra.mxu0 0
        %1569 = vmatprep.subr.bf16.mxu0 0
        %1570 = vmatpush1.bf16.msra.mxu0 0
        %1571 = vmatprep.subr.bf16.mxu0 0
        %1572 = vmatpush1.bf16.msra.mxu0 0
        %1573 = vmatprep.mubr.bf16.mxu0 0
        %1574 = vmatmul.mubr.bf16.gmra.mrb[0].mxu0 %v1356
        %v1575 = vpop.f32.mrb[0].mxu0
        %v1576 = vadd.f32 0.0, %v1575
        %v1577 = vpop.f32.mrb[0].mxu0
        %v1578 = vpop.f32.mrb[0].mxu0
        %v1579 = vadd.f32 0.0, %v1578
        %v1580 = vpop.f32.mrb[0].mxu0
        %1581 = vmatprep.mubr.bf16.mxu0 0
        %1582 = vmatmul.mubr.bf16.gmra.mrb[0].mxu0 %v1364
        %v1583 = vpop.f32.mrb[0].mxu0
        %v1584 = vadd.f32 0.0, %v1583
        %v1585 = vpop.f32.mrb[0].mxu0
        %v1586 = vpop.f32.mrb[0].mxu0
        %v1587 = vadd.f32 0.0, %v1586
        %v1588 = vpop.f32.mrb[0].mxu0
        %1589 = vmatprep.mubr.bf16.mxu0 0
        %1590 = vmatmul.mubr.bf16.gmra.mrb[0].mxu0 %v1372
        %v1591 = vpop.f32.mrb[0].mxu0
        %v1592 = vadd.f32 0.0, %v1591
        %v1593 = vpop.f32.mrb[0].mxu0
        %v1594 = vpop.f32.mrb[0].mxu0
        %v1595 = vadd.f32 0.0, %v1594
        %v1596 = vpop.f32.mrb[0].mxu0
        %1597 = vmatprep.mubr.bf16.mxu0 0
        %1598 = vmatmul.mubr.bf16.gmra.mrb[0].mxu0 %v1380
        %v1599 = vpop.f32.mrb[0].mxu0
        %v1600 = vadd.f32 0.0, %v1599
        %v1601 = vpop.f32.mrb[0].mxu0
        %v1602 = vpop.f32.mrb[0].mxu0
        %v1603 = vadd.f32 0.0, %v1602
        %v1604 = vpop.f32.mrb[0].mxu0
        %1605 = vmatprep.mubr.bf16.mxu0 0
        %1606 = vmatmul.mubr.bf16.gmra.mrb[0].mxu0 %v1388
        %v1607 = vpop.f32.mrb[0].mxu0
        %v1608 = vadd.f32 0.0, %v1607
        %v1609 = vpop.f32.mrb[0].mxu0
        %v1610 = vpop.f32.mrb[0].mxu0
        %v1611 = vadd.f32 0.0, %v1610
        %v1612 = vpop.f32.mrb[0].mxu0
        %1613 = vmatprep.mubr.bf16.mxu0 0
        %1614 = vmatmul.mubr.bf16.gmra.mrb[0].mxu0 %v1396
        %v1615 = vpop.f32.mrb[0].mxu0
        %v1616 = vadd.f32 0.0, %v1615
        %v1617 = vpop.f32.mrb[0].mxu0
        %v1618 = vpop.f32.mrb[0].mxu0
        %v1619 = vadd.f32 0.0, %v1618
        %v1620 = vpop.f32.mrb[0].mxu0
        %1621 = vmatprep.mubr.bf16.mxu0 0
        %1622 = vmatmul.mubr.bf16.gmra.mrb[0].mxu0 %v1404
        %v1623 = vpop.f32.mrb[0].mxu0
        %v1624 = vadd.f32 0.0, %v1623
        %v1625 = vpop.f32.mrb[0].mxu0
        %v1626 = vpop.f32.mrb[0].mxu0
        %v1627 = vadd.f32 0.0, %v1626
        %v1628 = vpop.f32.mrb[0].mxu0
        %1629 = vmatprep.mubr.bf16.mxu0 0
        %1630 = vmatmul.mubr.bf16.gmra.mrb[0].mxu0 %v1412
        %v1631 = vpop.f32.mrb[0].mxu0
        %v1632 = vadd.f32 0.0, %v1631
        %v1633 = vpop.f32.mrb[0].mxu0
        %v1634 = vpop.f32.mrb[0].mxu0
        %v1635 = vadd.f32 0.0, %v1634
        %v1636 = vpop.f32.mrb[0].mxu0
        %1637 = vmatprep.mubr.bf16.mxu0 0
        %1638 = vmatmul.mubr.bf16.gmra.mrb[0].mxu0 %v1420
        %v1639 = vpop.f32.mrb[0].mxu0
        %v1640 = vadd.f32 0.0, %v1639
        %v1641 = vpop.f32.mrb[0].mxu0
        %v1642 = vpop.f32.mrb[0].mxu0
        %v1643 = vadd.f32 0.0, %v1642
        %v1644 = vpop.f32.mrb[0].mxu0
        %1645 = vmatprep.mubr.bf16.mxu0 0
        %1646 = vmatmul.mubr.bf16.gmra.mrb[0].mxu0 %v1428
        %v1647 = vpop.f32.mrb[0].mxu0
        %v1648 = vadd.f32 0.0, %v1647
        %v1649 = vpop.f32.mrb[0].mxu0
        %v1650 = vpop.f32.mrb[0].mxu0
        %v1651 = vadd.f32 0.0, %v1650
        %v1652 = vpop.f32.mrb[0].mxu0
        %1653 = vmatprep.mubr.bf16.mxu0 0
        %1654 = vmatmul.mubr.bf16.gmra.mrb[0].mxu0 %v1436
        %v1655 = vpop.f32.mrb[0].mxu0
        %v1656 = vadd.f32 0.0, %v1655
        %v1657 = vpop.f32.mrb[0].mxu0
        %v1658 = vpop.f32.mrb[0].mxu0
        %v1659 = vadd.f32 0.0, %v1658
        %v1660 = vpop.f32.mrb[0].mxu0
        %1661 = vmatprep.mubr.bf16.mxu0 0
        %1662 = vmatmul.mubr.bf16.gmra.mrb[0].mxu0 %v1444
        %v1663 = vpop.f32.mrb[0].mxu0
        %v1664 = vadd.f32 0.0, %v1663
        %v1665 = vpop.f32.mrb[0].mxu0
        %v1666 = vpop.f32.mrb[0].mxu0
        %v1667 = vadd.f32 0.0, %v1666
        %v1668 = vpop.f32.mrb[0].mxu0
        %1669 = vmatprep.mubr.bf16.mxu0 0
        %1670 = vmatmul.mubr.bf16.gmra.mrb[0].mxu0 %v1452
        %v1671 = vpop.f32.mrb[0].mxu0
        %v1672 = vadd.f32 0.0, %v1671
        %v1673 = vpop.f32.mrb[0].mxu0
        %v1674 = vpop.f32.mrb[0].mxu0
        %v1675 = vadd.f32 0.0, %v1674
        %v1676 = vpop.f32.mrb[0].mxu0
        %1677 = vmatprep.mubr.bf16.mxu0 0
        %1678 = vmatmul.mubr.bf16.gmra.mrb[0].mxu0 %v1460
        %v1679 = vpop.f32.mrb[0].mxu0
        %v1680 = vadd.f32 0.0, %v1679
        %v1681 = vpop.f32.mrb[0].mxu0
        %v1682 = vpop.f32.mrb[0].mxu0
        %v1683 = vadd.f32 0.0, %v1682
        %v1684 = vpop.f32.mrb[0].mxu0
        %1685 = vmatprep.mubr.bf16.mxu0 0
        %1686 = vmatmul.mubr.bf16.gmra.mrb[0].mxu0 %v1468
        %v1687 = vpop.f32.mrb[0].mxu0
        %v1688 = vadd.f32 0.0, %v1687
        %v1689 = vpop.f32.mrb[0].mxu0
        %v1690 = vpop.f32.mrb[0].mxu0
        %v1691 = vadd.f32 0.0, %v1690
        %v1692 = vpop.f32.mrb[0].mxu0
        %1693 = vmatprep.mubr.bf16.mxu0 0
        %1694 = vmatmul.mubr.bf16.gmra.mrb[0].mxu0 %v1476
        %v1695 = vpop.f32.mrb[0].mxu0
        %v1696 = vadd.f32 0.0, %v1695
        %v1697 = vpop.f32.mrb[0].mxu0
        %v1698 = vpop.f32.mrb[0].mxu0
        %v1699 = vadd.f32 0.0, %v1698
        %v1700 = vpop.f32.mrb[0].mxu0
        %1701 = vdwg.mxu0
        %v1734 = vunpack.c.l.b16 %v1195
        %v1735 = vunpack.c.l.b16 %v1196
        %v1736 = vunpack.c.l.b16 %v1197
        %v1737 = vunpack.c.l.b16 %v1198
        %v1738 = vunpack.c.l.b16 %v1199
        %v1739 = vunpack.c.l.b16 %v1200
        %v1740 = vunpack.c.l.b16 %v1201
        %v1741 = vunpack.c.l.b16 %v1202
        %v1742 = vunpack.c.l.b16 %v1203
        %v1743 = vunpack.c.l.b16 %v1204
        %v1744 = vunpack.c.l.b16 %v1205
        %v1745 = vunpack.c.l.b16 %v1206
        %v1746 = vunpack.c.l.b16 %v1207
        %v1747 = vunpack.c.l.b16 %v1208
        %v1748 = vunpack.c.l.b16 %v1209
        %v1749 = vunpack.c.l.b16 %v1210
        %v1750 = vunpack.c.l.b16 %v1211
        %v1751 = vunpack.c.l.b16 %v1212
        %v1752 = vunpack.c.l.b16 %v1213
        %v1753 = vunpack.c.l.b16 %v1214
        %v1754 = vunpack.c.l.b16 %v1215
        %v1755 = vunpack.c.l.b16 %v1216
        %v1756 = vunpack.c.l.b16 %v1217
        %v1757 = vunpack.c.l.b16 %v1218
        %v1758 = vunpack.c.l.b16 %v1219
        %v1759 = vunpack.c.l.b16 %v1220
        %v1760 = vunpack.c.l.b16 %v1221
        %v1761 = vunpack.c.l.b16 %v1222
        %v1762 = vunpack.c.l.b16 %v1223
        %v1763 = vunpack.c.l.b16 %v1224
        %v1764 = vunpack.c.l.b16 %v1225
        %v1765 = vunpack.c.l.b16 %v1226
        %v1766 = vpack.c.b16 %v1735, %v1734
        %v1767 = vpack.c.b16 %v1737, %v1736
        %v1768 = vpack.c.b16 %v1739, %v1738
        %v1769 = vpack.c.b16 %v1741, %v1740
        %v1770 = vpack.c.b16 %v1743, %v1742
        %v1771 = vpack.c.b16 %v1745, %v1744
        %v1772 = vpack.c.b16 %v1747, %v1746
        %v1773 = vpack.c.b16 %v1749, %v1748
        %v1774 = vpack.c.b16 %v1751, %v1750
        %v1775 = vpack.c.b16 %v1753, %v1752
        %v1776 = vpack.c.b16 %v1755, %v1754
        %v1777 = vpack.c.b16 %v1757, %v1756
        %v1778 = vpack.c.b16 %v1759, %v1758
        %v1779 = vpack.c.b16 %v1761, %v1760
        %v1780 = vpack.c.b16 %v1763, %v1762
        %v1781 = vpack.c.b16 %v1765, %v1764
        %v1814 = vunpack.c.l.b16 %v1227
        %v1815 = vunpack.c.l.b16 %v1228
        %v1816 = vunpack.c.l.b16 %v1229
        %v1817 = vunpack.c.l.b16 %v1230
        %v1818 = vunpack.c.l.b16 %v1231
        %v1819 = vunpack.c.l.b16 %v1232
        %v1820 = vunpack.c.l.b16 %v1233
        %v1821 = vunpack.c.l.b16 %v1234
        %v1822 = vunpack.c.l.b16 %v1235
        %v1823 = vunpack.c.l.b16 %v1236
        %v1824 = vunpack.c.l.b16 %v1237
        %v1825 = vunpack.c.l.b16 %v1238
        %v1826 = vunpack.c.l.b16 %v1239
        %v1827 = vunpack.c.l.b16 %v1240
        %v1828 = vunpack.c.l.b16 %v1241
        %v1829 = vunpack.c.l.b16 %v1242
        %v1830 = vpack.c.b16 %v1815, %v1814
        %v1831 = vpack.c.b16 %v1817, %v1816
        %v1832 = vpack.c.b16 %v1819, %v1818
        %v1833 = vpack.c.b16 %v1821, %v1820
        %v1834 = vpack.c.b16 %v1823, %v1822
        %v1835 = vpack.c.b16 %v1825, %v1824
        %v1836 = vpack.c.b16 %v1827, %v1826
        %v1837 = vpack.c.b16 %v1829, %v1828
        %1846 = vmatprep.subr.bf16.mxu0 0
        %1847 = vmatpush1.bf16.msra.mxu0 %v1830
        %1848 = vmatprep.subr.bf16.mxu0 0
        %1849 = vmatpush1.bf16.msra.mxu0 %v1831
        %1850 = vmatprep.subr.bf16.mxu0 0
        %1851 = vmatpush1.bf16.msra.mxu0 %v1832
        %1852 = vmatprep.subr.bf16.mxu0 0
        %1853 = vmatpush1.bf16.msra.mxu0 %v1833
        %1854 = vmatprep.subr.bf16.mxu0 0
        %1855 = vmatpush1.bf16.msra.mxu0 %v1834
        %1856 = vmatprep.subr.bf16.mxu0 0
        %1857 = vmatpush1.bf16.msra.mxu0 %v1835
        %1858 = vmatprep.subr.bf16.mxu0 0
        %1859 = vmatpush1.bf16.msra.mxu0 %v1836
        %1860 = vmatprep.subr.bf16.mxu0 0
        %1861 = vmatpush1.bf16.msra.mxu0 %v1837
        %1862 = vmatprep.subr.bf16.mxu0 0
        %1863 = vmatpush1.bf16.msra.mxu0 0
        %1864 = vmatprep.subr.bf16.mxu0 0
        %1865 = vmatpush1.bf16.msra.mxu0 0
        %1866 = vmatprep.subr.bf16.mxu0 0
        %1867 = vmatpush1.bf16.msra.mxu0 0
        %1868 = vmatprep.subr.bf16.mxu0 0
        %1869 = vmatpush1.bf16.msra.mxu0 0
        %1870 = vmatprep.subr.bf16.mxu0 0
        %1871 = vmatpush1.bf16.msra.mxu0 0
        %1872 = vmatprep.subr.bf16.mxu0 0
        %1873 = vmatpush1.bf16.msra.mxu0 0
        %1874 = vmatprep.subr.bf16.mxu0 0
        %1875 = vmatpush1.bf16.msra.mxu0 0
        %1876 = vmatprep.subr.bf16.mxu0 0
        %1877 = vmatpush1.bf16.msra.mxu0 0
        %1878 = vmatprep.mubr.bf16.mxu0 0
        %1879 = vmatmul.mubr.bf16.gmra.mrb[0].mxu0 %v1766
        %v1880 = vpop.f32.mrb[0].mxu0
        %v1881 = vadd.f32 %v1576, %v1880
        %v1882 = vpop.f32.mrb[0].mxu0
        %v1883 = vpop.f32.mrb[0].mxu0
        %v1884 = vadd.f32 %v1579, %v1883
        %v1885 = vpop.f32.mrb[0].mxu0
        %1886 = vmatprep.mubr.bf16.mxu0 0
        %1887 = vmatmul.mubr.bf16.gmra.mrb[0].mxu0 %v1767
        %v1888 = vpop.f32.mrb[0].mxu0
        %v1889 = vadd.f32 %v1584, %v1888
        %v1890 = vpop.f32.mrb[0].mxu0
        %v1891 = vpop.f32.mrb[0].mxu0
        %v1892 = vadd.f32 %v1587, %v1891
        %v1893 = vpop.f32.mrb[0].mxu0
        %1894 = vmatprep.mubr.bf16.mxu0 0
        %1895 = vmatmul.mubr.bf16.gmra.mrb[0].mxu0 %v1768
        %v1896 = vpop.f32.mrb[0].mxu0
        %v1897 = vadd.f32 %v1592, %v1896
        %v1898 = vpop.f32.mrb[0].mxu0
        %v1899 = vpop.f32.mrb[0].mxu0
        %v1900 = vadd.f32 %v1595, %v1899
        %v1901 = vpop.f32.mrb[0].mxu0
        %1902 = vmatprep.mubr.bf16.mxu0 0
        %1903 = vmatmul.mubr.bf16.gmra.mrb[0].mxu0 %v1769
        %v1904 = vpop.f32.mrb[0].mxu0
        %v1905 = vadd.f32 %v1600, %v1904
        %v1906 = vpop.f32.mrb[0].mxu0
        %v1907 = vpop.f32.mrb[0].mxu0
        %v1908 = vadd.f32 %v1603, %v1907
        %v1909 = vpop.f32.mrb[0].mxu0
        %1910 = vmatprep.mubr.bf16.mxu0 0
        %1911 = vmatmul.mubr.bf16.gmra.mrb[0].mxu0 %v1770
        %v1912 = vpop.f32.mrb[0].mxu0
        %v1913 = vadd.f32 %v1608, %v1912
        %v1914 = vpop.f32.mrb[0].mxu0
        %v1915 = vpop.f32.mrb[0].mxu0
        %v1916 = vadd.f32 %v1611, %v1915
        %v1917 = vpop.f32.mrb[0].mxu0
        %1918 = vmatprep.mubr.bf16.mxu0 0
        %1919 = vmatmul.mubr.bf16.gmra.mrb[0].mxu0 %v1771
        %v1920 = vpop.f32.mrb[0].mxu0
        %v1921 = vadd.f32 %v1616, %v1920
        %v1922 = vpop.f32.mrb[0].mxu0
        %v1923 = vpop.f32.mrb[0].mxu0
        %v1924 = vadd.f32 %v1619, %v1923
        %v1925 = vpop.f32.mrb[0].mxu0
        %1926 = vmatprep.mubr.bf16.mxu0 0
        %1927 = vmatmul.mubr.bf16.gmra.mrb[0].mxu0 %v1772
        %v1928 = vpop.f32.mrb[0].mxu0
        %v1929 = vadd.f32 %v1624, %v1928
        %v1930 = vpop.f32.mrb[0].mxu0
        %v1931 = vpop.f32.mrb[0].mxu0
        %v1932 = vadd.f32 %v1627, %v1931
        %v1933 = vpop.f32.mrb[0].mxu0
        %1934 = vmatprep.mubr.bf16.mxu0 0
        %1935 = vmatmul.mubr.bf16.gmra.mrb[0].mxu0 %v1773
        %v1936 = vpop.f32.mrb[0].mxu0
        %v1937 = vadd.f32 %v1632, %v1936
        %v1938 = vpop.f32.mrb[0].mxu0
        %v1939 = vpop.f32.mrb[0].mxu0
        %v1940 = vadd.f32 %v1635, %v1939
        %v1941 = vpop.f32.mrb[0].mxu0
        %1942 = vmatprep.mubr.bf16.mxu0 0
        %1943 = vmatmul.mubr.bf16.gmra.mrb[0].mxu0 %v1774
        %v1944 = vpop.f32.mrb[0].mxu0
        %v1945 = vadd.f32 %v1640, %v1944
        %v1946 = vpop.f32.mrb[0].mxu0
        %v1947 = vpop.f32.mrb[0].mxu0
        %v1948 = vadd.f32 %v1643, %v1947
        %v1949 = vpop.f32.mrb[0].mxu0
        %1950 = vmatprep.mubr.bf16.mxu0 0
        %1951 = vmatmul.mubr.bf16.gmra.mrb[0].mxu0 %v1775
        %v1952 = vpop.f32.mrb[0].mxu0
        %v1953 = vadd.f32 %v1648, %v1952
        %v1954 = vpop.f32.mrb[0].mxu0
        %v1955 = vpop.f32.mrb[0].mxu0
        %v1956 = vadd.f32 %v1651, %v1955
        %v1957 = vpop.f32.mrb[0].mxu0
        %1958 = vmatprep.mubr.bf16.mxu0 0
        %1959 = vmatmul.mubr.bf16.gmra.mrb[0].mxu0 %v1776
        %v1960 = vpop.f32.mrb[0].mxu0
        %v1961 = vadd.f32 %v1656, %v1960
        %v1962 = vpop.f32.mrb[0].mxu0
        %v1963 = vpop.f32.mrb[0].mxu0
        %v1964 = vadd.f32 %v1659, %v1963
        %v1965 = vpop.f32.mrb[0].mxu0
        %1966 = vmatprep.mubr.bf16.mxu0 0
        %1967 = vmatmul.mubr.bf16.gmra.mrb[0].mxu0 %v1777
        %v1968 = vpop.f32.mrb[0].mxu0
        %v1969 = vadd.f32 %v1664, %v1968
        %v1970 = vpop.f32.mrb[0].mxu0
        %v1971 = vpop.f32.mrb[0].mxu0
        %v1972 = vadd.f32 %v1667, %v1971
        %v1973 = vpop.f32.mrb[0].mxu0
        %1974 = vmatprep.mubr.bf16.mxu0 0
        %1975 = vmatmul.mubr.bf16.gmra.mrb[0].mxu0 %v1778
        %v1976 = vpop.f32.mrb[0].mxu0
        %v1977 = vadd.f32 %v1672, %v1976
        %v1978 = vpop.f32.mrb[0].mxu0
        %v1979 = vpop.f32.mrb[0].mxu0
        %v1980 = vadd.f32 %v1675, %v1979
        %v1981 = vpop.f32.mrb[0].mxu0
        %1982 = vmatprep.mubr.bf16.mxu0 0
        %1983 = vmatmul.mubr.bf16.gmra.mrb[0].mxu0 %v1779
        %v1984 = vpop.f32.mrb[0].mxu0
        %v1985 = vadd.f32 %v1680, %v1984
        %v1986 = vpop.f32.mrb[0].mxu0
        %v1987 = vpop.f32.mrb[0].mxu0
        %v1988 = vadd.f32 %v1683, %v1987
        %v1989 = vpop.f32.mrb[0].mxu0
        %1990 = vmatprep.mubr.bf16.mxu0 0
        %1991 = vmatmul.mubr.bf16.gmra.mrb[0].mxu0 %v1780
        %v1992 = vpop.f32.mrb[0].mxu0
        %v1993 = vadd.f32 %v1688, %v1992
        %v1994 = vpop.f32.mrb[0].mxu0
        %v1995 = vpop.f32.mrb[0].mxu0
        %v1996 = vadd.f32 %v1691, %v1995
        %v1997 = vpop.f32.mrb[0].mxu0
        %1998 = vmatprep.mubr.bf16.mxu0 0
        %1999 = vmatmul.mubr.bf16.gmra.mrb[0].mxu0 %v1781
        %v2000 = vpop.f32.mrb[0].mxu0
        %v2001 = vadd.f32 %v1696, %v2000
        %v2002 = vpop.f32.mrb[0].mxu0
        %v2003 = vpop.f32.mrb[0].mxu0
        %v2004 = vadd.f32 %v1699, %v2003
        %v2005 = vpop.f32.mrb[0].mxu0
        %2006 = vdwg.mxu0
        %v2007 = vld [vmem:[#allocation2] sm:$0xe]
        %vm2008 = vmpackc.low %vm1159, %vm1159
        %vm2009 = vmpackc.low %vm1160, %vm1160
        %v2010 = vsel %vm2008, 65537, 0
        %v2011 = vsel %vm2009, 65537, 0
        %vm2012 = vcmask 1044484
        %vm2013 = vmor %vm1149, %vm2012
        %v2014 = vrot.slane %v2010, 7
        %v2015 = vrot.slane %v2014, 4
        %v2016 = vrot.slane %v2011, 7
        %v2017 = vsel %vm2013, %v2015, %v2016
        %v2018 = vrot.slane %v2016, 4
        %v2019 = vsel %vm2013, %v2018, %v2014
        %vm2020 = vcmp.ne.s16.totalorder %v2014, 0
        %vm2021 = vcmp.ne.s16.totalorder %v2017, 0
        %vm2022 = vcmp.ne.s16.totalorder %v2019, 0
        %vm2023 = vcmp.ne.s16.totalorder %v2018, 0
        %v2024 = vsel %vm2020, %v2007, 0
        %v2025 = vsel %vm2021, %v1162, 0
        %v2026 = vsel %vm2022, %v1163, 0
        %v2027 = vsel %vm2021, %v1164, 0
        %v2028 = vsel %vm2022, %v1165, 0
        %v2029 = vsel %vm2021, %v1166, 0
        %v2030 = vsel %vm2022, %v1167, 0
        %v2031 = vsel %vm2021, %v1168, 0
        %v2032 = vsel %vm2022, %v1169, 0
        %v2033 = vsel %vm2021, %v1170, 0
        %v2034 = vsel %vm2022, %v1171, 0
        %v2035 = vsel %vm2021, %v1172, 0
        %v2036 = vsel %vm2022, %v1173, 0
        %v2037 = vsel %vm2021, %v1174, 0
        %v2038 = vsel %vm2022, %v1175, 0
        %v2039 = vsel %vm2021, %v1176, 0
        %v2040 = vsel %vm2022, %v1177, 0
        %v2041 = vsel %vm2021, %v1178, 0
        %v2042 = vsel %vm2022, %v1179, 0
        %v2043 = vsel %vm2021, %v1180, 0
        %v2044 = vsel %vm2022, %v1181, 0
        %v2045 = vsel %vm2021, %v1182, 0
        %v2046 = vsel %vm2022, %v1183, 0
        %v2047 = vsel %vm2021, %v1184, 0
        %v2048 = vsel %vm2022, %v1185, 0
        %v2049 = vsel %vm2021, %v1186, 0
        %v2050 = vsel %vm2022, %v1187, 0
        %v2051 = vsel %vm2021, %v1188, 0
        %v2052 = vsel %vm2022, %v1189, 0
        %v2053 = vsel %vm2021, %v1190, 0
        %v2054 = vsel %vm2022, %v1191, 0
        %v2055 = vsel %vm2021, %v1192, 0
        %v2056 = vsel %vm2023, %v1243, 0
        %s2057 = scalar_lea.vmem [#allocation8], 128
        %v2058 = vld [vmem:[%s2057] sm:$0xf]
        %v2059 = vld [vmem:[%s2057 + $0x4] sm:$0xf]
        %v2060 = vld [vmem:[%s2057 + $0x8] sm:$0xf]
        %v2061 = vld [vmem:[%s2057 + $0xc] sm:$0xf]
        %v2062 = vld [vmem:[%s2057 + $0x10] sm:$0xf]
        %v2063 = vld [vmem:[%s2057 + $0x14] sm:$0xf]
        %v2064 = vld [vmem:[%s2057 + $0x18] sm:$0xf]
        %v2065 = vld [vmem:[%s2057 + $0x1c] sm:$0xf]
        %v2066 = vld [vmem:[%s2057 + $0x20] sm:$0xf]
        %v2067 = vld [vmem:[%s2057 + $0x24] sm:$0xf]
        %v2068 = vld [vmem:[%s2057 + $0x28] sm:$0xf]
        %v2069 = vld [vmem:[%s2057 + $0x2c] sm:$0xf]
        %v2070 = vld [vmem:[%s2057 + $0x30] sm:$0xf]
        %v2071 = vld [vmem:[%s2057 + $0x34] sm:$0xf]
        %v2072 = vld [vmem:[%s2057 + $0x38] sm:$0xf]
        %v2073 = vld [vmem:[%s2057 + $0x3c] sm:$0xf]
        %v2107 = vunpack.c.l.b16 %v2024
        %v2108 = vunpack.c.l.b16 %v2025
        %v2109 = vunpack.c.l.b16 %v2026
        %v2110 = vunpack.c.l.b16 %v2027
        %v2111 = vunpack.c.l.b16 %v2028
        %v2112 = vunpack.c.l.b16 %v2029
        %v2113 = vunpack.c.l.b16 %v2030
        %v2114 = vunpack.c.l.b16 %v2031
        %v2115 = vunpack.c.l.b16 %v2032
        %v2116 = vunpack.c.l.b16 %v2033
        %v2117 = vunpack.c.l.b16 %v2034
        %v2118 = vunpack.c.l.b16 %v2035
        %v2119 = vunpack.c.l.b16 %v2036
        %v2120 = vunpack.c.l.b16 %v2037
        %v2121 = vunpack.c.l.b16 %v2038
        %v2122 = vunpack.c.l.b16 %v2039
        %v2123 = vunpack.c.l.b16 %v2040
        %v2124 = vunpack.c.l.b16 %v2041
        %v2125 = vunpack.c.l.b16 %v2042
        %v2126 = vunpack.c.l.b16 %v2043
        %v2127 = vunpack.c.l.b16 %v2044
        %v2128 = vunpack.c.l.b16 %v2045
        %v2129 = vunpack.c.l.b16 %v2046
        %v2130 = vunpack.c.l.b16 %v2047
        %v2131 = vunpack.c.l.b16 %v2048
        %v2132 = vunpack.c.l.b16 %v2049
        %v2133 = vunpack.c.l.b16 %v2050
        %v2134 = vunpack.c.l.b16 %v2051
        %v2135 = vunpack.c.l.b16 %v2052
        %v2136 = vunpack.c.l.b16 %v2053
        %v2137 = vunpack.c.l.b16 %v2054
        %v2138 = vunpack.c.l.b16 %v2055
        %v2139 = vunpack.c.l.b16 %v2056
        %v2140 = vpack.c.b16 %v2108, %v2107
        %v2141 = vpack.c.b16 %v2110, %v2109
        %v2142 = vpack.c.b16 %v2112, %v2111
        %v2143 = vpack.c.b16 %v2114, %v2113
        %v2144 = vpack.c.b16 %v2116, %v2115
        %v2145 = vpack.c.b16 %v2118, %v2117
        %v2146 = vpack.c.b16 %v2120, %v2119
        %v2147 = vpack.c.b16 %v2122, %v2121
        %v2148 = vpack.c.b16 %v2124, %v2123
        %v2149 = vpack.c.b16 %v2126, %v2125
        %v2150 = vpack.c.b16 %v2128, %v2127
        %v2151 = vpack.c.b16 %v2130, %v2129
        %v2152 = vpack.c.b16 %v2132, %v2131
        %v2153 = vpack.c.b16 %v2134, %v2133
        %v2154 = vpack.c.b16 %v2136, %v2135
        %v2155 = vpack.c.b16 %v2138, %v2137
        %v2156 = vpack.c.b16 %v2139, %v2139
        %vm2157 = vcmask 1046528
        %v2158 = vrot.slane %v2140, 1
        %v2159 = vrot.slane %v2141, 1
        %v2160 = vsel %vm2157, %v2158, %v2159
        %v2161 = vrot.slane %v2142, 1
        %v2162 = vsel %vm2157, %v2159, %v2161
        %v2163 = vrot.slane %v2143, 1
        %v2164 = vsel %vm2157, %v2161, %v2163
        %v2165 = vrot.slane %v2144, 1
        %v2166 = vsel %vm2157, %v2163, %v2165
        %v2167 = vrot.slane %v2145, 1
        %v2168 = vsel %vm2157, %v2165, %v2167
        %v2169 = vrot.slane %v2146, 1
        %v2170 = vsel %vm2157, %v2167, %v2169
        %v2171 = vrot.slane %v2147, 1
        %v2172 = vsel %vm2157, %v2169, %v2171
        %v2173 = vrot.slane %v2148, 1
        %v2174 = vsel %vm2157, %v2171, %v2173
        %v2175 = vrot.slane %v2149, 1
        %v2176 = vsel %vm2157, %v2173, %v2175
        %v2177 = vrot.slane %v2150, 1
        %v2178 = vsel %vm2157, %v2175, %v2177
        %v2179 = vrot.slane %v2151, 1
        %v2180 = vsel %vm2157, %v2177, %v2179
        %v2181 = vrot.slane %v2152, 1
        %v2182 = vsel %vm2157, %v2179, %v2181
        %v2183 = vrot.slane %v2153, 1
        %v2184 = vsel %vm2157, %v2181, %v2183
        %v2185 = vrot.slane %v2154, 1
        %v2186 = vsel %vm2157, %v2183, %v2185
        %v2187 = vrot.slane %v2155, 1
        %v2188 = vsel %vm2157, %v2185, %v2187
        %v2189 = vrot.slane %v2156, 1
        %v2190 = vsel %vm2157, %v2187, %v2189
        %v2223 = vunpack.c.l.b16 %v2058
        %v2224 = vunpack.c.l.b16 %v2059
        %v2225 = vunpack.c.l.b16 %v2060
        %v2226 = vunpack.c.l.b16 %v2061
        %v2227 = vunpack.c.l.b16 %v2062
        %v2228 = vunpack.c.l.b16 %v2063
        %v2229 = vunpack.c.l.b16 %v2064
        %v2230 = vunpack.c.l.b16 %v2065
        %v2231 = vunpack.c.l.b16 %v2066
        %v2232 = vunpack.c.l.b16 %v2067
        %v2233 = vunpack.c.l.b16 %v2068
        %v2234 = vunpack.c.l.b16 %v2069
        %v2235 = vunpack.c.l.b16 %v2070
        %v2236 = vunpack.c.l.b16 %v2071
        %v2237 = vunpack.c.l.b16 %v2072
        %v2238 = vunpack.c.l.b16 %v2073
        %v2239 = vpack.c.b16 %v2224, %v2223
        %v2240 = vpack.c.b16 %v2226, %v2225
        %v2241 = vpack.c.b16 %v2228, %v2227
        %v2242 = vpack.c.b16 %v2230, %v2229
        %v2243 = vpack.c.b16 %v2232, %v2231
        %v2244 = vpack.c.b16 %v2234, %v2233
        %v2245 = vpack.c.b16 %v2236, %v2235
        %v2246 = vpack.c.b16 %v2238, %v2237
        %2255 = vmatprep.subr.bf16.mxu0 0
        %2256 = vmatpush1.bf16.msra.mxu0 %v2239
        %2257 = vmatprep.subr.bf16.mxu0 0
        %2258 = vmatpush1.bf16.msra.mxu0 %v2240
        %2259 = vmatprep.subr.bf16.mxu0 0
        %2260 = vmatpush1.bf16.msra.mxu0 %v2241
        %2261 = vmatprep.subr.bf16.mxu0 0
        %2262 = vmatpush1.bf16.msra.mxu0 %v2242
        %2263 = vmatprep.subr.bf16.mxu0 0
        %2264 = vmatpush1.bf16.msra.mxu0 %v2243
        %2265 = vmatprep.subr.bf16.mxu0 0
        %2266 = vmatpush1.bf16.msra.mxu0 %v2244
        %2267 = vmatprep.subr.bf16.mxu0 0
        %2268 = vmatpush1.bf16.msra.mxu0 %v2245
        %2269 = vmatprep.subr.bf16.mxu0 0
        %2270 = vmatpush1.bf16.msra.mxu0 %v2246
        %2271 = vmatprep.subr.bf16.mxu0 0
        %2272 = vmatpush1.bf16.msra.mxu0 0
        %2273 = vmatprep.subr.bf16.mxu0 0
        %2274 = vmatpush1.bf16.msra.mxu0 0
        %2275 = vmatprep.subr.bf16.mxu0 0
        %2276 = vmatpush1.bf16.msra.mxu0 0
        %2277 = vmatprep.subr.bf16.mxu0 0
        %2278 = vmatpush1.bf16.msra.mxu0 0
        %2279 = vmatprep.subr.bf16.mxu0 0
        %2280 = vmatpush1.bf16.msra.mxu0 0
        %2281 = vmatprep.subr.bf16.mxu0 0
        %2282 = vmatpush1.bf16.msra.mxu0 0
        %2283 = vmatprep.subr.bf16.mxu0 0
        %2284 = vmatpush1.bf16.msra.mxu0 0
        %2285 = vmatprep.subr.bf16.mxu0 0
        %2286 = vmatpush1.bf16.msra.mxu0 0
        %2287 = vmatprep.mubr.bf16.mxu0 0
        %2288 = vmatmul.mubr.bf16.gmra.mrb[0].mxu0 %v2160
        %v2289 = vpop.f32.mrb[0].mxu0
        %v2290 = vadd.f32 0.0, %v2289
        %v2291 = vpop.f32.mrb[0].mxu0
        %v2292 = vpop.f32.mrb[0].mxu0
        %v2293 = vadd.f32 0.0, %v2292
        %v2294 = vpop.f32.mrb[0].mxu0
        %2295 = vmatprep.mubr.bf16.mxu0 0
        %2296 = vmatmul.mubr.bf16.gmra.mrb[0].mxu0 %v2162
        %v2297 = vpop.f32.mrb[0].mxu0
        %v2298 = vadd.f32 0.0, %v2297
        %v2299 = vpop.f32.mrb[0].mxu0
        %v2300 = vpop.f32.mrb[0].mxu0
        %v2301 = vadd.f32 0.0, %v2300
        %v2302 = vpop.f32.mrb[0].mxu0
        %2303 = vmatprep.mubr.bf16.mxu0 0
        %2304 = vmatmul.mubr.bf16.gmra.mrb[0].mxu0 %v2164
        %v2305 = vpop.f32.mrb[0].mxu0
        %v2306 = vadd.f32 0.0, %v2305
        %v2307 = vpop.f32.mrb[0].mxu0
        %v2308 = vpop.f32.mrb[0].mxu0
        %v2309 = vadd.f32 0.0, %v2308
        %v2310 = vpop.f32.mrb[0].mxu0
        %2311 = vmatprep.mubr.bf16.mxu0 0
        %2312 = vmatmul.mubr.bf16.gmra.mrb[0].mxu0 %v2166
        %v2313 = vpop.f32.mrb[0].mxu0
        %v2314 = vadd.f32 0.0, %v2313
        %v2315 = vpop.f32.mrb[0].mxu0
        %v2316 = vpop.f32.mrb[0].mxu0
        %v2317 = vadd.f32 0.0, %v2316
        %v2318 = vpop.f32.mrb[0].mxu0
        %2319 = vmatprep.mubr.bf16.mxu0 0
        %2320 = vmatmul.mubr.bf16.gmra.mrb[0].mxu0 %v2168
        %v2321 = vpop.f32.mrb[0].mxu0
        %v2322 = vadd.f32 0.0, %v2321
        %v2323 = vpop.f32.mrb[0].mxu0
        %v2324 = vpop.f32.mrb[0].mxu0
        %v2325 = vadd.f32 0.0, %v2324
        %v2326 = vpop.f32.mrb[0].mxu0
        %2327 = vmatprep.mubr.bf16.mxu0 0
        %2328 = vmatmul.mubr.bf16.gmra.mrb[0].mxu0 %v2170
        %v2329 = vpop.f32.mrb[0].mxu0
        %v2330 = vadd.f32 0.0, %v2329
        %v2331 = vpop.f32.mrb[0].mxu0
        %v2332 = vpop.f32.mrb[0].mxu0
        %v2333 = vadd.f32 0.0, %v2332
        %v2334 = vpop.f32.mrb[0].mxu0
        %2335 = vmatprep.mubr.bf16.mxu0 0
        %2336 = vmatmul.mubr.bf16.gmra.mrb[0].mxu0 %v2172
        %v2337 = vpop.f32.mrb[0].mxu0
        %v2338 = vadd.f32 0.0, %v2337
        %v2339 = vpop.f32.mrb[0].mxu0
        %v2340 = vpop.f32.mrb[0].mxu0
        %v2341 = vadd.f32 0.0, %v2340
        %v2342 = vpop.f32.mrb[0].mxu0
        %2343 = vmatprep.mubr.bf16.mxu0 0
        %2344 = vmatmul.mubr.bf16.gmra.mrb[0].mxu0 %v2174
        %v2345 = vpop.f32.mrb[0].mxu0
        %v2346 = vadd.f32 0.0, %v2345
        %v2347 = vpop.f32.mrb[0].mxu0
        %v2348 = vpop.f32.mrb[0].mxu0
        %v2349 = vadd.f32 0.0, %v2348
        %v2350 = vpop.f32.mrb[0].mxu0
        %2351 = vmatprep.mubr.bf16.mxu0 0
        %2352 = vmatmul.mubr.bf16.gmra.mrb[0].mxu0 %v2176
        %v2353 = vpop.f32.mrb[0].mxu0
        %v2354 = vadd.f32 0.0, %v2353
        %v2355 = vpop.f32.mrb[0].mxu0
        %v2356 = vpop.f32.mrb[0].mxu0
        %v2357 = vadd.f32 0.0, %v2356
        %v2358 = vpop.f32.mrb[0].mxu0
        %2359 = vmatprep.mubr.bf16.mxu0 0
        %2360 = vmatmul.mubr.bf16.gmra.mrb[0].mxu0 %v2178
        %v2361 = vpop.f32.mrb[0].mxu0
        %v2362 = vadd.f32 0.0, %v2361
        %v2363 = vpop.f32.mrb[0].mxu0
        %v2364 = vpop.f32.mrb[0].mxu0
        %v2365 = vadd.f32 0.0, %v2364
        %v2366 = vpop.f32.mrb[0].mxu0
        %2367 = vmatprep.mubr.bf16.mxu0 0
        %2368 = vmatmul.mubr.bf16.gmra.mrb[0].mxu0 %v2180
        %v2369 = vpop.f32.mrb[0].mxu0
        %v2370 = vadd.f32 0.0, %v2369
        %v2371 = vpop.f32.mrb[0].mxu0
        %v2372 = vpop.f32.mrb[0].mxu0
        %v2373 = vadd.f32 0.0, %v2372
        %v2374 = vpop.f32.mrb[0].mxu0
        %2375 = vmatprep.mubr.bf16.mxu0 0
        %2376 = vmatmul.mubr.bf16.gmra.mrb[0].mxu0 %v2182
        %v2377 = vpop.f32.mrb[0].mxu0
        %v2378 = vadd.f32 0.0, %v2377
        %v2379 = vpop.f32.mrb[0].mxu0
        %v2380 = vpop.f32.mrb[0].mxu0
        %v2381 = vadd.f32 0.0, %v2380
        %v2382 = vpop.f32.mrb[0].mxu0
        %2383 = vmatprep.mubr.bf16.mxu0 0
        %2384 = vmatmul.mubr.bf16.gmra.mrb[0].mxu0 %v2184
        %v2385 = vpop.f32.mrb[0].mxu0
        %v2386 = vadd.f32 0.0, %v2385
        %v2387 = vpop.f32.mrb[0].mxu0
        %v2388 = vpop.f32.mrb[0].mxu0
        %v2389 = vadd.f32 0.0, %v2388
        %v2390 = vpop.f32.mrb[0].mxu0
        %2391 = vmatprep.mubr.bf16.mxu0 0
        %2392 = vmatmul.mubr.bf16.gmra.mrb[0].mxu0 %v2186
        %v2393 = vpop.f32.mrb[0].mxu0
        %v2394 = vadd.f32 0.0, %v2393
        %v2395 = vpop.f32.mrb[0].mxu0
        %v2396 = vpop.f32.mrb[0].mxu0
        %v2397 = vadd.f32 0.0, %v2396
        %v2398 = vpop.f32.mrb[0].mxu0
        %2399 = vmatprep.mubr.bf16.mxu0 0
        %2400 = vmatmul.mubr.bf16.gmra.mrb[0].mxu0 %v2188
        %v2401 = vpop.f32.mrb[0].mxu0
        %v2402 = vadd.f32 0.0, %v2401
        %v2403 = vpop.f32.mrb[0].mxu0
        %v2404 = vpop.f32.mrb[0].mxu0
        %v2405 = vadd.f32 0.0, %v2404
        %v2406 = vpop.f32.mrb[0].mxu0
        %2407 = vmatprep.mubr.bf16.mxu0 0
        %2408 = vmatmul.mubr.bf16.gmra.mrb[0].mxu0 %v2190
        %v2409 = vpop.f32.mrb[0].mxu0
        %v2410 = vadd.f32 0.0, %v2409
        %v2411 = vpop.f32.mrb[0].mxu0
        %v2412 = vpop.f32.mrb[0].mxu0
        %v2413 = vadd.f32 0.0, %v2412
        %v2414 = vpop.f32.mrb[0].mxu0
        %2415 = vdwg.mxu0
        %v2416 = vadd.f32 %v1881, %v2290
        %v2417 = vadd.f32 %v1884, %v2293
        %v2418 = vadd.f32 %v1889, %v2298
        %v2419 = vadd.f32 %v1892, %v2301
        %v2420 = vadd.f32 %v1897, %v2306
        %v2421 = vadd.f32 %v1900, %v2309
        %v2422 = vadd.f32 %v1905, %v2314
        %v2423 = vadd.f32 %v1908, %v2317
        %v2424 = vadd.f32 %v1913, %v2322
        %v2425 = vadd.f32 %v1916, %v2325
        %v2426 = vadd.f32 %v1921, %v2330
        %v2427 = vadd.f32 %v1924, %v2333
        %v2428 = vadd.f32 %v1929, %v2338
        %v2429 = vadd.f32 %v1932, %v2341
        %v2430 = vadd.f32 %v1937, %v2346
        %v2431 = vadd.f32 %v1940, %v2349
        %v2432 = vadd.f32 %v1945, %v2354
        %v2433 = vadd.f32 %v1948, %v2357
        %v2434 = vadd.f32 %v1953, %v2362
        %v2435 = vadd.f32 %v1956, %v2365
        %v2436 = vadd.f32 %v1961, %v2370
        %v2437 = vadd.f32 %v1964, %v2373
        %v2438 = vadd.f32 %v1969, %v2378
        %v2439 = vadd.f32 %v1972, %v2381
        %v2440 = vadd.f32 %v1977, %v2386
        %v2441 = vadd.f32 %v1980, %v2389
        %v2442 = vadd.f32 %v1985, %v2394
        %v2443 = vadd.f32 %v1988, %v2397
        %v2444 = vadd.f32 %v1993, %v2402
        %v2445 = vadd.f32 %v1996, %v2405
        %v2446 = vadd.f32 %v2001, %v2410
        %v2447 = vadd.f32 %v2004, %v2413
        %v2448 = vld [vmem:[#allocation2 + $0x8] sm:$0xf]
        %v2449 = vld [vmem:[#allocation2 + $0xc] sm:$0xf]
        %v2450 = vld [vmem:[#allocation2 + $0x10] sm:$0xf]
        %v2451 = vld [vmem:[#allocation2 + $0x14] sm:$0xf]
        %v2452 = vld [vmem:[#allocation2 + $0x18] sm:$0xf]
        %v2453 = vld [vmem:[#allocation2 + $0x1c] sm:$0xf]
        %v2454 = vld [vmem:[#allocation2 + $0x20] sm:$0xf]
        %v2455 = vld [vmem:[#allocation2 + $0x24] sm:$0xf]
        %v2456 = vld [vmem:[#allocation2 + $0x28] sm:$0xf]
        %v2457 = vld [vmem:[#allocation2 + $0x2c] sm:$0xf]
        %v2458 = vld [vmem:[#allocation2 + $0x30] sm:$0xf]
        %v2459 = vld [vmem:[#allocation2 + $0x34] sm:$0xf]
        %v2460 = vld [vmem:[#allocation2 + $0x38] sm:$0xf]
        %v2461 = vld [vmem:[#allocation2 + $0x3c] sm:$0xf]
        %v2462 = vld [vmem:[#allocation2 + $0x40] sm:$0xf]
        %v2463 = vld [vmem:[#allocation2 + $0x44] sm:$0xf]
        %v2464 = vld [vmem:[#allocation2 + $0x48] sm:$0xf]
        %v2465 = vld [vmem:[#allocation2 + $0x4c] sm:$0xf]
        %v2466 = vld [vmem:[#allocation2 + $0x50] sm:$0xf]
        %v2467 = vld [vmem:[#allocation2 + $0x54] sm:$0xf]
        %v2468 = vld [vmem:[#allocation2 + $0x58] sm:$0xf]
        %v2469 = vld [vmem:[#allocation2 + $0x5c] sm:$0xf]
        %v2470 = vld [vmem:[#allocation2 + $0x60] sm:$0xf]
        %v2471 = vld [vmem:[#allocation2 + $0x64] sm:$0xf]
        %v2472 = vld [vmem:[#allocation2 + $0x68] sm:$0xf]
        %v2473 = vld [vmem:[#allocation2 + $0x6c] sm:$0xf]
        %v2474 = vld [vmem:[#allocation2 + $0x70] sm:$0xf]
        %v2475 = vld [vmem:[#allocation2 + $0x74] sm:$0xf]
        %v2476 = vld [vmem:[#allocation2 + $0x78] sm:$0xf]
        %v2477 = vld [vmem:[#allocation2 + $0x7c] sm:$0xf]
        %v2478 = vld [vmem:[#allocation2 + $0x80] sm:$0xf]
        %v2479 = vld [vmem:[#allocation2 + $0x84] sm:$0xf]
        %v2480 = vsel %vm1193, %v2448, 0
        %v2481 = vsel %vm1194, %v2449, 0
        %v2482 = vsel %vm1193, %v2450, 0
        %v2483 = vsel %vm1194, %v2451, 0
        %v2484 = vsel %vm1193, %v2452, 0
        %v2485 = vsel %vm1194, %v2453, 0
        %v2486 = vsel %vm1193, %v2454, 0
        %v2487 = vsel %vm1194, %v2455, 0
        %v2488 = vsel %vm1193, %v2456, 0
        %v2489 = vsel %vm1194, %v2457, 0
        %v2490 = vsel %vm1193, %v2458, 0
        %v2491 = vsel %vm1194, %v2459, 0
        %v2492 = vsel %vm1193, %v2460, 0
        %v2493 = vsel %vm1194, %v2461, 0
        %v2494 = vsel %vm1193, %v2462, 0
        %v2495 = vsel %vm1194, %v2463, 0
        %v2496 = vsel %vm1193, %v2464, 0
        %v2497 = vsel %vm1194, %v2465, 0
        %v2498 = vsel %vm1193, %v2466, 0
        %v2499 = vsel %vm1194, %v2467, 0
        %v2500 = vsel %vm1193, %v2468, 0
        %v2501 = vsel %vm1194, %v2469, 0
        %v2502 = vsel %vm1193, %v2470, 0
        %v2503 = vsel %vm1194, %v2471, 0
        %v2504 = vsel %vm1193, %v2472, 0
        %v2505 = vsel %vm1194, %v2473, 0
        %v2506 = vsel %vm1193, %v2474, 0
        %v2507 = vsel %vm1194, %v2475, 0
        %v2508 = vsel %vm1193, %v2476, 0
        %v2509 = vsel %vm1194, %v2477, 0
        %v2510 = vsel %vm1193, %v2478, 0
        %v2511 = vsel %vm1194, %v2479, 0
        %s2512 = scalar_lea.vmem [#allocation8], 192
        %v2513 = vld [vmem:[%s2512] sm:$0xf]
        %v2514 = vld [vmem:[%s2512 + $0x4] sm:$0xf]
        %v2515 = vld [vmem:[%s2512 + $0x8] sm:$0xf]
        %v2516 = vld [vmem:[%s2512 + $0xc] sm:$0xf]
        %v2517 = vld [vmem:[%s2512 + $0x10] sm:$0xf]
        %v2518 = vld [vmem:[%s2512 + $0x14] sm:$0xf]
        %v2519 = vld [vmem:[%s2512 + $0x18] sm:$0xf]
        %v2520 = vld [vmem:[%s2512 + $0x1c] sm:$0xf]
        %v2521 = vld [vmem:[%s2512 + $0x20] sm:$0xf]
        %v2522 = vld [vmem:[%s2512 + $0x24] sm:$0xf]
        %v2523 = vld [vmem:[%s2512 + $0x28] sm:$0xf]
        %v2524 = vld [vmem:[%s2512 + $0x2c] sm:$0xf]
        %v2525 = vld [vmem:[%s2512 + $0x30] sm:$0xf]
        %v2526 = vld [vmem:[%s2512 + $0x34] sm:$0xf]
        %v2527 = vld [vmem:[%s2512 + $0x38] sm:$0xf]
        %v2528 = vld [vmem:[%s2512 + $0x3c] sm:$0xf]
        %v2561 = vunpack.c.l.b16 %v2480
        %v2562 = vunpack.c.l.b16 %v2481
        %v2563 = vunpack.c.l.b16 %v2482
        %v2564 = vunpack.c.l.b16 %v2483
        %v2565 = vunpack.c.l.b16 %v2484
        %v2566 = vunpack.c.l.b16 %v2485
        %v2567 = vunpack.c.l.b16 %v2486
        %v2568 = vunpack.c.l.b16 %v2487
        %v2569 = vunpack.c.l.b16 %v2488
        %v2570 = vunpack.c.l.b16 %v2489
        %v2571 = vunpack.c.l.b16 %v2490
        %v2572 = vunpack.c.l.b16 %v2491
        %v2573 = vunpack.c.l.b16 %v2492
        %v2574 = vunpack.c.l.b16 %v2493
        %v2575 = vunpack.c.l.b16 %v2494
        %v2576 = vunpack.c.l.b16 %v2495
        %v2577 = vunpack.c.l.b16 %v2496
        %v2578 = vunpack.c.l.b16 %v2497
        %v2579 = vunpack.c.l.b16 %v2498
        %v2580 = vunpack.c.l.b16 %v2499
        %v2581 = vunpack.c.l.b16 %v2500
        %v2582 = vunpack.c.l.b16 %v2501
        %v2583 = vunpack.c.l.b16 %v2502
        %v2584 = vunpack.c.l.b16 %v2503
        %v2585 = vunpack.c.l.b16 %v2504
        %v2586 = vunpack.c.l.b16 %v2505
        %v2587 = vunpack.c.l.b16 %v2506
        %v2588 = vunpack.c.l.b16 %v2507
        %v2589 = vunpack.c.l.b16 %v2508
        %v2590 = vunpack.c.l.b16 %v2509
        %v2591 = vunpack.c.l.b16 %v2510
        %v2592 = vunpack.c.l.b16 %v2511
        %v2593 = vpack.c.b16 %v2562, %v2561
        %v2594 = vpack.c.b16 %v2564, %v2563
        %v2595 = vpack.c.b16 %v2566, %v2565
        %v2596 = vpack.c.b16 %v2568, %v2567
        %v2597 = vpack.c.b16 %v2570, %v2569
        %v2598 = vpack.c.b16 %v2572, %v2571
        %v2599 = vpack.c.b16 %v2574, %v2573
        %v2600 = vpack.c.b16 %v2576, %v2575
        %v2601 = vpack.c.b16 %v2578, %v2577
        %v2602 = vpack.c.b16 %v2580, %v2579
        %v2603 = vpack.c.b16 %v2582, %v2581
        %v2604 = vpack.c.b16 %v2584, %v2583
        %v2605 = vpack.c.b16 %v2586, %v2585
        %v2606 = vpack.c.b16 %v2588, %v2587
        %v2607 = vpack.c.b16 %v2590, %v2589
        %v2608 = vpack.c.b16 %v2592, %v2591
        %v2641 = vunpack.c.l.b16 %v2513
        %v2642 = vunpack.c.l.b16 %v2514
        %v2643 = vunpack.c.l.b16 %v2515
        %v2644 = vunpack.c.l.b16 %v2516
        %v2645 = vunpack.c.l.b16 %v2517
        %v2646 = vunpack.c.l.b16 %v2518
        %v2647 = vunpack.c.l.b16 %v2519
        %v2648 = vunpack.c.l.b16 %v2520
        %v2649 = vunpack.c.l.b16 %v2521
        %v2650 = vunpack.c.l.b16 %v2522
        %v2651 = vunpack.c.l.b16 %v2523
        %v2652 = vunpack.c.l.b16 %v2524
        %v2653 = vunpack.c.l.b16 %v2525
        %v2654 = vunpack.c.l.b16 %v2526
        %v2655 = vunpack.c.l.b16 %v2527
        %v2656 = vunpack.c.l.b16 %v2528
        %v2657 = vpack.c.b16 %v2642, %v2641
        %v2658 = vpack.c.b16 %v2644, %v2643
        %v2659 = vpack.c.b16 %v2646, %v2645
        %v2660 = vpack.c.b16 %v2648, %v2647
        %v2661 = vpack.c.b16 %v2650, %v2649
        %v2662 = vpack.c.b16 %v2652, %v2651
        %v2663 = vpack.c.b16 %v2654, %v2653
        %v2664 = vpack.c.b16 %v2656, %v2655
        %2673 = vmatprep.subr.bf16.mxu0 0
        %2674 = vmatpush1.bf16.msra.mxu0 %v2657
        %2675 = vmatprep.subr.bf16.mxu0 0
        %2676 = vmatpush1.bf16.msra.mxu0 %v2658
        %2677 = vmatprep.subr.bf16.mxu0 0
        %2678 = vmatpush1.bf16.msra.mxu0 %v2659
        %2679 = vmatprep.subr.bf16.mxu0 0
        %2680 = vmatpush1.bf16.msra.mxu0 %v2660
        %2681 = vmatprep.subr.bf16.mxu0 0
        %2682 = vmatpush1.bf16.msra.mxu0 %v2661
        %2683 = vmatprep.subr.bf16.mxu0 0
        %2684 = vmatpush1.bf16.msra.mxu0 %v2662
        %2685 = vmatprep.subr.bf16.mxu0 0
        %2686 = vmatpush1.bf16.msra.mxu0 %v2663
        %2687 = vmatprep.subr.bf16.mxu0 0
        %2688 = vmatpush1.bf16.msra.mxu0 %v2664
        %2689 = vmatprep.subr.bf16.mxu0 0
        %2690 = vmatpush1.bf16.msra.mxu0 0
        %2691 = vmatprep.subr.bf16.mxu0 0
        %2692 = vmatpush1.bf16.msra.mxu0 0
        %2693 = vmatprep.subr.bf16.mxu0 0
        %2694 = vmatpush1.bf16.msra.mxu0 0
        %2695 = vmatprep.subr.bf16.mxu0 0
        %2696 = vmatpush1.bf16.msra.mxu0 0
        %2697 = vmatprep.subr.bf16.mxu0 0
        %2698 = vmatpush1.bf16.msra.mxu0 0
        %2699 = vmatprep.subr.bf16.mxu0 0
        %2700 = vmatpush1.bf16.msra.mxu0 0
        %2701 = vmatprep.subr.bf16.mxu0 0
        %2702 = vmatpush1.bf16.msra.mxu0 0
        %2703 = vmatprep.subr.bf16.mxu0 0
        %2704 = vmatpush1.bf16.msra.mxu0 0
        %2705 = vmatprep.mubr.bf16.mxu0 0
        %2706 = vmatmul.mubr.bf16.gmra.mrb[0].mxu0 %v2593
        %v2707 = vpop.f32.mrb[0].mxu0
        %v2708 = vadd.f32 0.0, %v2707
        %v2709 = vpop.f32.mrb[0].mxu0
        %v2710 = vpop.f32.mrb[0].mxu0
        %v2711 = vadd.f32 0.0, %v2710
        %v2712 = vpop.f32.mrb[0].mxu0
        %2713 = vmatprep.mubr.bf16.mxu0 0
        %2714 = vmatmul.mubr.bf16.gmra.mrb[0].mxu0 %v2594
        %v2715 = vpop.f32.mrb[0].mxu0
        %v2716 = vadd.f32 0.0, %v2715
        %v2717 = vpop.f32.mrb[0].mxu0
        %v2718 = vpop.f32.mrb[0].mxu0
        %v2719 = vadd.f32 0.0, %v2718
        %v2720 = vpop.f32.mrb[0].mxu0
        %2721 = vmatprep.mubr.bf16.mxu0 0
        %2722 = vmatmul.mubr.bf16.gmra.mrb[0].mxu0 %v2595
        %v2723 = vpop.f32.mrb[0].mxu0
        %v2724 = vadd.f32 0.0, %v2723
        %v2725 = vpop.f32.mrb[0].mxu0
        %v2726 = vpop.f32.mrb[0].mxu0
        %v2727 = vadd.f32 0.0, %v2726
        %v2728 = vpop.f32.mrb[0].mxu0
        %2729 = vmatprep.mubr.bf16.mxu0 0
        %2730 = vmatmul.mubr.bf16.gmra.mrb[0].mxu0 %v2596
        %v2731 = vpop.f32.mrb[0].mxu0
        %v2732 = vadd.f32 0.0, %v2731
        %v2733 = vpop.f32.mrb[0].mxu0
        %v2734 = vpop.f32.mrb[0].mxu0
        %v2735 = vadd.f32 0.0, %v2734
        %v2736 = vpop.f32.mrb[0].mxu0
        %2737 = vmatprep.mubr.bf16.mxu0 0
        %2738 = vmatmul.mubr.bf16.gmra.mrb[0].mxu0 %v2597
        %v2739 = vpop.f32.mrb[0].mxu0
        %v2740 = vadd.f32 0.0, %v2739
        %v2741 = vpop.f32.mrb[0].mxu0
        %v2742 = vpop.f32.mrb[0].mxu0
        %v2743 = vadd.f32 0.0, %v2742
        %v2744 = vpop.f32.mrb[0].mxu0
        %2745 = vmatprep.mubr.bf16.mxu0 0
        %2746 = vmatmul.mubr.bf16.gmra.mrb[0].mxu0 %v2598
        %v2747 = vpop.f32.mrb[0].mxu0
        %v2748 = vadd.f32 0.0, %v2747
        %v2749 = vpop.f32.mrb[0].mxu0
        %v2750 = vpop.f32.mrb[0].mxu0
        %v2751 = vadd.f32 0.0, %v2750
        %v2752 = vpop.f32.mrb[0].mxu0
        %2753 = vmatprep.mubr.bf16.mxu0 0
        %2754 = vmatmul.mubr.bf16.gmra.mrb[0].mxu0 %v2599
        %v2755 = vpop.f32.mrb[0].mxu0
        %v2756 = vadd.f32 0.0, %v2755
        %v2757 = vpop.f32.mrb[0].mxu0
        %v2758 = vpop.f32.mrb[0].mxu0
        %v2759 = vadd.f32 0.0, %v2758
        %v2760 = vpop.f32.mrb[0].mxu0
        %2761 = vmatprep.mubr.bf16.mxu0 0
        %2762 = vmatmul.mubr.bf16.gmra.mrb[0].mxu0 %v2600
        %v2763 = vpop.f32.mrb[0].mxu0
        %v2764 = vadd.f32 0.0, %v2763
        %v2765 = vpop.f32.mrb[0].mxu0
        %v2766 = vpop.f32.mrb[0].mxu0
        %v2767 = vadd.f32 0.0, %v2766
        %v2768 = vpop.f32.mrb[0].mxu0
        %2769 = vmatprep.mubr.bf16.mxu0 0
        %2770 = vmatmul.mubr.bf16.gmra.mrb[0].mxu0 %v2601
        %v2771 = vpop.f32.mrb[0].mxu0
        %v2772 = vadd.f32 0.0, %v2771
        %v2773 = vpop.f32.mrb[0].mxu0
        %v2774 = vpop.f32.mrb[0].mxu0
        %v2775 = vadd.f32 0.0, %v2774
        %v2776 = vpop.f32.mrb[0].mxu0
        %2777 = vmatprep.mubr.bf16.mxu0 0
        %2778 = vmatmul.mubr.bf16.gmra.mrb[0].mxu0 %v2602
        %v2779 = vpop.f32.mrb[0].mxu0
        %v2780 = vadd.f32 0.0, %v2779
        %v2781 = vpop.f32.mrb[0].mxu0
        %v2782 = vpop.f32.mrb[0].mxu0
        %v2783 = vadd.f32 0.0, %v2782
        %v2784 = vpop.f32.mrb[0].mxu0
        %2785 = vmatprep.mubr.bf16.mxu0 0
        %2786 = vmatmul.mubr.bf16.gmra.mrb[0].mxu0 %v2603
        %v2787 = vpop.f32.mrb[0].mxu0
        %v2788 = vadd.f32 0.0, %v2787
        %v2789 = vpop.f32.mrb[0].mxu0
        %v2790 = vpop.f32.mrb[0].mxu0
        %v2791 = vadd.f32 0.0, %v2790
        %v2792 = vpop.f32.mrb[0].mxu0
        %2793 = vmatprep.mubr.bf16.mxu0 0
        %2794 = vmatmul.mubr.bf16.gmra.mrb[0].mxu0 %v2604
        %v2795 = vpop.f32.mrb[0].mxu0
        %v2796 = vadd.f32 0.0, %v2795
        %v2797 = vpop.f32.mrb[0].mxu0
        %v2798 = vpop.f32.mrb[0].mxu0
        %v2799 = vadd.f32 0.0, %v2798
        %v2800 = vpop.f32.mrb[0].mxu0
        %2801 = vmatprep.mubr.bf16.mxu0 0
        %2802 = vmatmul.mubr.bf16.gmra.mrb[0].mxu0 %v2605
        %v2803 = vpop.f32.mrb[0].mxu0
        %v2804 = vadd.f32 0.0, %v2803
        %v2805 = vpop.f32.mrb[0].mxu0
        %v2806 = vpop.f32.mrb[0].mxu0
        %v2807 = vadd.f32 0.0, %v2806
        %v2808 = vpop.f32.mrb[0].mxu0
        %2809 = vmatprep.mubr.bf16.mxu0 0
        %2810 = vmatmul.mubr.bf16.gmra.mrb[0].mxu0 %v2606
        %v2811 = vpop.f32.mrb[0].mxu0
        %v2812 = vadd.f32 0.0, %v2811
        %v2813 = vpop.f32.mrb[0].mxu0
        %v2814 = vpop.f32.mrb[0].mxu0
        %v2815 = vadd.f32 0.0, %v2814
        %v2816 = vpop.f32.mrb[0].mxu0
        %2817 = vmatprep.mubr.bf16.mxu0 0
        %2818 = vmatmul.mubr.bf16.gmra.mrb[0].mxu0 %v2607
        %v2819 = vpop.f32.mrb[0].mxu0
        %v2820 = vadd.f32 0.0, %v2819
        %v2821 = vpop.f32.mrb[0].mxu0
        %v2822 = vpop.f32.mrb[0].mxu0
        %v2823 = vadd.f32 0.0, %v2822
        %v2824 = vpop.f32.mrb[0].mxu0
        %2825 = vmatprep.mubr.bf16.mxu0 0
        %2826 = vmatmul.mubr.bf16.gmra.mrb[0].mxu0 %v2608
        %v2827 = vpop.f32.mrb[0].mxu0
        %v2828 = vadd.f32 0.0, %v2827
        %v2829 = vpop.f32.mrb[0].mxu0
        %v2830 = vpop.f32.mrb[0].mxu0
        %v2831 = vadd.f32 0.0, %v2830
        %v2832 = vpop.f32.mrb[0].mxu0
        %2833 = vdwg.mxu0
        %v2834 = vadd.f32 %v2416, %v2708
        %v2835 = vadd.f32 %v2417, %v2711
        %v2836 = vadd.f32 %v2418, %v2716
        %v2837 = vadd.f32 %v2419, %v2719
        %v2838 = vadd.f32 %v2420, %v2724
        %v2839 = vadd.f32 %v2421, %v2727
        %v2840 = vadd.f32 %v2422, %v2732
        %v2841 = vadd.f32 %v2423, %v2735
        %v2842 = vadd.f32 %v2424, %v2740
        %v2843 = vadd.f32 %v2425, %v2743
        %v2844 = vadd.f32 %v2426, %v2748
        %v2845 = vadd.f32 %v2427, %v2751
        %v2846 = vadd.f32 %v2428, %v2756
        %v2847 = vadd.f32 %v2429, %v2759
        %v2848 = vadd.f32 %v2430, %v2764
        %v2849 = vadd.f32 %v2431, %v2767
        %v2850 = vadd.f32 %v2432, %v2772
        %v2851 = vadd.f32 %v2433, %v2775
        %v2852 = vadd.f32 %v2434, %v2780
        %v2853 = vadd.f32 %v2435, %v2783
        %v2854 = vadd.f32 %v2436, %v2788
        %v2855 = vadd.f32 %v2437, %v2791
        %v2856 = vadd.f32 %v2438, %v2796
        %v2857 = vadd.f32 %v2439, %v2799
        %v2858 = vadd.f32 %v2440, %v2804
        %v2859 = vadd.f32 %v2441, %v2807
        %v2860 = vadd.f32 %v2442, %v2812
        %v2861 = vadd.f32 %v2443, %v2815
        %v2862 = vadd.f32 %v2444, %v2820
        %v2863 = vadd.f32 %v2445, %v2823
        %v2864 = vadd.f32 %v2446, %v2828
        %v2865 = vadd.f32 %v2447, %v2831
        %v2866 = vld [vmem:[#allocation2 + $0x8] sm:$0xf]
        %v2867 = vld [vmem:[#allocation2 + $0xc] sm:$0xf]
        %v2868 = vld [vmem:[#allocation2 + $0x10] sm:$0xf]
        %v2869 = vld [vmem:[#allocation2 + $0x14] sm:$0xf]
        %v2870 = vld [vmem:[#allocation2 + $0x18] sm:$0xf]
        %v2871 = vld [vmem:[#allocation2 + $0x1c] sm:$0xf]
        %v2872 = vld [vmem:[#allocation2 + $0x20] sm:$0xf]
        %v2873 = vld [vmem:[#allocation2 + $0x24] sm:$0xf]
        %v2874 = vld [vmem:[#allocation2 + $0x28] sm:$0xf]
        %v2875 = vld [vmem:[#allocation2 + $0x2c] sm:$0xf]
        %v2876 = vld [vmem:[#allocation2 + $0x30] sm:$0xf]
        %v2877 = vld [vmem:[#allocation2 + $0x34] sm:$0xf]
        %v2878 = vld [vmem:[#allocation2 + $0x38] sm:$0xf]
        %v2879 = vld [vmem:[#allocation2 + $0x3c] sm:$0xf]
        %v2880 = vld [vmem:[#allocation2 + $0x40] sm:$0xf]
        %v2881 = vld [vmem:[#allocation2 + $0x44] sm:$0xf]
        %v2882 = vld [vmem:[#allocation2 + $0x48] sm:$0xf]
        %v2883 = vld [vmem:[#allocation2 + $0x4c] sm:$0xf]
        %v2884 = vld [vmem:[#allocation2 + $0x50] sm:$0xf]
        %v2885 = vld [vmem:[#allocation2 + $0x54] sm:$0xf]
        %v2886 = vld [vmem:[#allocation2 + $0x58] sm:$0xf]
        %v2887 = vld [vmem:[#allocation2 + $0x5c] sm:$0xf]
        %v2888 = vld [vmem:[#allocation2 + $0x60] sm:$0xf]
        %v2889 = vld [vmem:[#allocation2 + $0x64] sm:$0xf]
        %v2890 = vld [vmem:[#allocation2 + $0x68] sm:$0xf]
        %v2891 = vld [vmem:[#allocation2 + $0x6c] sm:$0xf]
        %v2892 = vld [vmem:[#allocation2 + $0x70] sm:$0xf]
        %v2893 = vld [vmem:[#allocation2 + $0x74] sm:$0xf]
        %v2894 = vld [vmem:[#allocation2 + $0x78] sm:$0xf]
        %v2895 = vld [vmem:[#allocation2 + $0x7c] sm:$0xf]
        %v2896 = vld [vmem:[#allocation2 + $0x80] sm:$0xf]
        %v2897 = vld [vmem:[#allocation2 + $0x84] sm:$0xf]
        %v2898 = vld [vmem:[#allocation2 + $0x88] sm:$0x1]
        %s2899 = scalar_lea.vmem [#allocation8], 256
        %v2900 = vld [vmem:[%s2899] sm:$0xf]
        %v2901 = vld [vmem:[%s2899 + $0x4] sm:$0xf]
        %v2902 = vld [vmem:[%s2899 + $0x8] sm:$0xf]
        %v2903 = vld [vmem:[%s2899 + $0xc] sm:$0xf]
        %v2904 = vld [vmem:[%s2899 + $0x10] sm:$0xf]
        %v2905 = vld [vmem:[%s2899 + $0x14] sm:$0xf]
        %v2906 = vld [vmem:[%s2899 + $0x18] sm:$0xf]
        %v2907 = vld [vmem:[%s2899 + $0x1c] sm:$0xf]
        %v2908 = vld [vmem:[%s2899 + $0x20] sm:$0xf]
        %v2909 = vld [vmem:[%s2899 + $0x24] sm:$0xf]
        %v2910 = vld [vmem:[%s2899 + $0x28] sm:$0xf]
        %v2911 = vld [vmem:[%s2899 + $0x2c] sm:$0xf]
        %v2912 = vld [vmem:[%s2899 + $0x30] sm:$0xf]
        %v2913 = vld [vmem:[%s2899 + $0x34] sm:$0xf]
        %v2914 = vld [vmem:[%s2899 + $0x38] sm:$0xf]
        %v2915 = vld [vmem:[%s2899 + $0x3c] sm:$0xf]
        %v2949 = vunpack.c.l.b16 %v2866
        %v2950 = vunpack.c.l.b16 %v2867
        %v2951 = vunpack.c.l.b16 %v2868
        %v2952 = vunpack.c.l.b16 %v2869
        %v2953 = vunpack.c.l.b16 %v2870
        %v2954 = vunpack.c.l.b16 %v2871
        %v2955 = vunpack.c.l.b16 %v2872
        %v2956 = vunpack.c.l.b16 %v2873
        %v2957 = vunpack.c.l.b16 %v2874
        %v2958 = vunpack.c.l.b16 %v2875
        %v2959 = vunpack.c.l.b16 %v2876
        %v2960 = vunpack.c.l.b16 %v2877
        %v2961 = vunpack.c.l.b16 %v2878
        %v2962 = vunpack.c.l.b16 %v2879
        %v2963 = vunpack.c.l.b16 %v2880
        %v2964 = vunpack.c.l.b16 %v2881
        %v2965 = vunpack.c.l.b16 %v2882
        %v2966 = vunpack.c.l.b16 %v2883
        %v2967 = vunpack.c.l.b16 %v2884
        %v2968 = vunpack.c.l.b16 %v2885
        %v2969 = vunpack.c.l.b16 %v2886
        %v2970 = vunpack.c.l.b16 %v2887
        %v2971 = vunpack.c.l.b16 %v2888
        %v2972 = vunpack.c.l.b16 %v2889
        %v2973 = vunpack.c.l.b16 %v2890
        %v2974 = vunpack.c.l.b16 %v2891
        %v2975 = vunpack.c.l.b16 %v2892
        %v2976 = vunpack.c.l.b16 %v2893
        %v2977 = vunpack.c.l.b16 %v2894
        %v2978 = vunpack.c.l.b16 %v2895
        %v2979 = vunpack.c.l.b16 %v2896
        %v2980 = vunpack.c.l.b16 %v2897
        %v2981 = vunpack.c.l.b16 %v2898
        %v2982 = vpack.c.b16 %v2950, %v2949
        %v2983 = vpack.c.b16 %v2952, %v2951
        %v2984 = vpack.c.b16 %v2954, %v2953
        %v2985 = vpack.c.b16 %v2956, %v2955
        %v2986 = vpack.c.b16 %v2958, %v2957
        %v2987 = vpack.c.b16 %v2960, %v2959
        %v2988 = vpack.c.b16 %v2962, %v2961
        %v2989 = vpack.c.b16 %v2964, %v2963
        %v2990 = vpack.c.b16 %v2966, %v2965
        %v2991 = vpack.c.b16 %v2968, %v2967
        %v2992 = vpack.c.b16 %v2970, %v2969
        %v2993 = vpack.c.b16 %v2972, %v2971
        %v2994 = vpack.c.b16 %v2974, %v2973
        %v2995 = vpack.c.b16 %v2976, %v2975
        %v2996 = vpack.c.b16 %v2978, %v2977
        %v2997 = vpack.c.b16 %v2980, %v2979
        %v2998 = vpack.c.b16 %v2981, %v2981
        %v3000 = vshrl.u32 %v2982, 16
        %v3002 = vshll.u32 %v2982, 16
        %v3004 = vrot.slane %v3002, 1
        %v3005 = vor.u32 %v3000, %v3004
        %v3007 = vshll.u32 %v2983, 16
        %v3009 = vrot.slane %v3007, 1
        %v3010 = vsel %vm1344, %v3005, %v3009
        %v3011 = vshrl.u32 %v2983, 16
        %v3013 = vor.u32 %v3011, %v3009
        %v3015 = vshll.u32 %v2984, 16
        %v3017 = vrot.slane %v3015, 1
        %v3018 = vsel %vm1344, %v3013, %v3017
        %v3019 = vshrl.u32 %v2984, 16
        %v3021 = vor.u32 %v3019, %v3017
        %v3023 = vshll.u32 %v2985, 16
        %v3025 = vrot.slane %v3023, 1
        %v3026 = vsel %vm1344, %v3021, %v3025
        %v3027 = vshrl.u32 %v2985, 16
        %v3029 = vor.u32 %v3027, %v3025
        %v3031 = vshll.u32 %v2986, 16
        %v3033 = vrot.slane %v3031, 1
        %v3034 = vsel %vm1344, %v3029, %v3033
        %v3035 = vshrl.u32 %v2986, 16
        %v3037 = vor.u32 %v3035, %v3033
        %v3039 = vshll.u32 %v2987, 16
        %v3041 = vrot.slane %v3039, 1
        %v3042 = vsel %vm1344, %v3037, %v3041
        %v3043 = vshrl.u32 %v2987, 16
        %v3045 = vor.u32 %v3043, %v3041
        %v3047 = vshll.u32 %v2988, 16
        %v3049 = vrot.slane %v3047, 1
        %v3050 = vsel %vm1344, %v3045, %v3049
        %v3051 = vshrl.u32 %v2988, 16
        %v3053 = vor.u32 %v3051, %v3049
        %v3055 = vshll.u32 %v2989, 16
        %v3057 = vrot.slane %v3055, 1
        %v3058 = vsel %vm1344, %v3053, %v3057
        %v3059 = vshrl.u32 %v2989, 16
        %v3061 = vor.u32 %v3059, %v3057
        %v3063 = vshll.u32 %v2990, 16
        %v3065 = vrot.slane %v3063, 1
        %v3066 = vsel %vm1344, %v3061, %v3065
        %v3067 = vshrl.u32 %v2990, 16
        %v3069 = vor.u32 %v3067, %v3065
        %v3071 = vshll.u32 %v2991, 16
        %v3073 = vrot.slane %v3071, 1
        %v3074 = vsel %vm1344, %v3069, %v3073
        %v3075 = vshrl.u32 %v2991, 16
        %v3077 = vor.u32 %v3075, %v3073
        %v3079 = vshll.u32 %v2992, 16
        %v3081 = vrot.slane %v3079, 1
        %v3082 = vsel %vm1344, %v3077, %v3081
        %v3083 = vshrl.u32 %v2992, 16
        %v3085 = vor.u32 %v3083, %v3081
        %v3087 = vshll.u32 %v2993, 16
        %v3089 = vrot.slane %v3087, 1
        %v3090 = vsel %vm1344, %v3085, %v3089
        %v3091 = vshrl.u32 %v2993, 16
        %v3093 = vor.u32 %v3091, %v3089
        %v3095 = vshll.u32 %v2994, 16
        %v3097 = vrot.slane %v3095, 1
        %v3098 = vsel %vm1344, %v3093, %v3097
        %v3099 = vshrl.u32 %v2994, 16
        %v3101 = vor.u32 %v3099, %v3097
        %v3103 = vshll.u32 %v2995, 16
        %v3105 = vrot.slane %v3103, 1
        %v3106 = vsel %vm1344, %v3101, %v3105
        %v3107 = vshrl.u32 %v2995, 16
        %v3109 = vor.u32 %v3107, %v3105
        %v3111 = vshll.u32 %v2996, 16
        %v3113 = vrot.slane %v3111, 1
        %v3114 = vsel %vm1344, %v3109, %v3113
        %v3115 = vshrl.u32 %v2996, 16
        %v3117 = vor.u32 %v3115, %v3113
        %v3119 = vshll.u32 %v2997, 16
        %v3121 = vrot.slane %v3119, 1
        %v3122 = vsel %vm1344, %v3117, %v3121
        %v3123 = vshrl.u32 %v2997, 16
        %v3125 = vor.u32 %v3123, %v3121
        %v3127 = vshll.u32 %v2998, 16
        %v3129 = vrot.slane %v3127, 1
        %v3130 = vsel %vm1344, %v3125, %v3129
        %v3163 = vunpack.c.l.b16 %v2900
        %v3164 = vunpack.c.l.b16 %v2901
        %v3165 = vunpack.c.l.b16 %v2902
        %v3166 = vunpack.c.l.b16 %v2903
        %v3167 = vunpack.c.l.b16 %v2904
        %v3168 = vunpack.c.l.b16 %v2905
        %v3169 = vunpack.c.l.b16 %v2906
        %v3170 = vunpack.c.l.b16 %v2907
        %v3171 = vunpack.c.l.b16 %v2908
        %v3172 = vunpack.c.l.b16 %v2909
        %v3173 = vunpack.c.l.b16 %v2910
        %v3174 = vunpack.c.l.b16 %v2911
        %v3175 = vunpack.c.l.b16 %v2912
        %v3176 = vunpack.c.l.b16 %v2913
        %v3177 = vunpack.c.l.b16 %v2914
        %v3178 = vunpack.c.l.b16 %v2915
        %v3179 = vpack.c.b16 %v3164, %v3163
        %v3180 = vpack.c.b16 %v3166, %v3165
        %v3181 = vpack.c.b16 %v3168, %v3167
        %v3182 = vpack.c.b16 %v3170, %v3169
        %v3183 = vpack.c.b16 %v3172, %v3171
        %v3184 = vpack.c.b16 %v3174, %v3173
        %v3185 = vpack.c.b16 %v3176, %v3175
        %v3186 = vpack.c.b16 %v3178, %v3177
        %3195 = vmatprep.subr.bf16.mxu0 0
        %3196 = vmatpush1.bf16.msra.mxu0 %v3179
        %3197 = vmatprep.subr.bf16.mxu0 0
        %3198 = vmatpush1.bf16.msra.mxu0 %v3180
        %3199 = vmatprep.subr.bf16.mxu0 0
        %3200 = vmatpush1.bf16.msra.mxu0 %v3181
        %3201 = vmatprep.subr.bf16.mxu0 0
        %3202 = vmatpush1.bf16.msra.mxu0 %v3182
        %3203 = vmatprep.subr.bf16.mxu0 0
        %3204 = vmatpush1.bf16.msra.mxu0 %v3183
        %3205 = vmatprep.subr.bf16.mxu0 0
        %3206 = vmatpush1.bf16.msra.mxu0 %v3184
        %3207 = vmatprep.subr.bf16.mxu0 0
        %3208 = vmatpush1.bf16.msra.mxu0 %v3185
        %3209 = vmatprep.subr.bf16.mxu0 0
        %3210 = vmatpush1.bf16.msra.mxu0 %v3186
        %3211 = vmatprep.subr.bf16.mxu0 0
        %3212 = vmatpush1.bf16.msra.mxu0 0
        %3213 = vmatprep.subr.bf16.mxu0 0
        %3214 = vmatpush1.bf16.msra.mxu0 0
        %3215 = vmatprep.subr.bf16.mxu0 0
        %3216 = vmatpush1.bf16.msra.mxu0 0
        %3217 = vmatprep.subr.bf16.mxu0 0
        %3218 = vmatpush1.bf16.msra.mxu0 0
        %3219 = vmatprep.subr.bf16.mxu0 0
        %3220 = vmatpush1.bf16.msra.mxu0 0
        %3221 = vmatprep.subr.bf16.mxu0 0
        %3222 = vmatpush1.bf16.msra.mxu0 0
        %3223 = vmatprep.subr.bf16.mxu0 0
        %3224 = vmatpush1.bf16.msra.mxu0 0
        %3225 = vmatprep.subr.bf16.mxu0 0
        %3226 = vmatpush1.bf16.msra.mxu0 0
        %3227 = vmatprep.mubr.bf16.mxu0 0
        %3228 = vmatmul.mubr.bf16.gmra.mrb[0].mxu0 %v3010
        %v3229 = vpop.f32.mrb[0].mxu0
        %v3230 = vadd.f32 0.0, %v3229
        %v3231 = vpop.f32.mrb[0].mxu0
        %v3232 = vpop.f32.mrb[0].mxu0
        %v3233 = vadd.f32 0.0, %v3232
        %v3234 = vpop.f32.mrb[0].mxu0
        %3235 = vmatprep.mubr.bf16.mxu0 0
        %3236 = vmatmul.mubr.bf16.gmra.mrb[0].mxu0 %v3018
        %v3237 = vpop.f32.mrb[0].mxu0
        %v3238 = vadd.f32 0.0, %v3237
        %v3239 = vpop.f32.mrb[0].mxu0
        %v3240 = vpop.f32.mrb[0].mxu0
        %v3241 = vadd.f32 0.0, %v3240
        %v3242 = vpop.f32.mrb[0].mxu0
        %3243 = vmatprep.mubr.bf16.mxu0 0
        %3244 = vmatmul.mubr.bf16.gmra.mrb[0].mxu0 %v3026
        %v3245 = vpop.f32.mrb[0].mxu0
        %v3246 = vadd.f32 0.0, %v3245
        %v3247 = vpop.f32.mrb[0].mxu0
        %v3248 = vpop.f32.mrb[0].mxu0
        %v3249 = vadd.f32 0.0, %v3248
        %v3250 = vpop.f32.mrb[0].mxu0
        %3251 = vmatprep.mubr.bf16.mxu0 0
        %3252 = vmatmul.mubr.bf16.gmra.mrb[0].mxu0 %v3034
        %v3253 = vpop.f32.mrb[0].mxu0
        %v3254 = vadd.f32 0.0, %v3253
        %v3255 = vpop.f32.mrb[0].mxu0
        %v3256 = vpop.f32.mrb[0].mxu0
        %v3257 = vadd.f32 0.0, %v3256
        %v3258 = vpop.f32.mrb[0].mxu0
        %3259 = vmatprep.mubr.bf16.mxu0 0
        %3260 = vmatmul.mubr.bf16.gmra.mrb[0].mxu0 %v3042
        %v3261 = vpop.f32.mrb[0].mxu0
        %v3262 = vadd.f32 0.0, %v3261
        %v3263 = vpop.f32.mrb[0].mxu0
        %v3264 = vpop.f32.mrb[0].mxu0
        %v3265 = vadd.f32 0.0, %v3264
        %v3266 = vpop.f32.mrb[0].mxu0
        %3267 = vmatprep.mubr.bf16.mxu0 0
        %3268 = vmatmul.mubr.bf16.gmra.mrb[0].mxu0 %v3050
        %v3269 = vpop.f32.mrb[0].mxu0
        %v3270 = vadd.f32 0.0, %v3269
        %v3271 = vpop.f32.mrb[0].mxu0
        %v3272 = vpop.f32.mrb[0].mxu0
        %v3273 = vadd.f32 0.0, %v3272
        %v3274 = vpop.f32.mrb[0].mxu0
        %3275 = vmatprep.mubr.bf16.mxu0 0
        %3276 = vmatmul.mubr.bf16.gmra.mrb[0].mxu0 %v3058
        %v3277 = vpop.f32.mrb[0].mxu0
        %v3278 = vadd.f32 0.0, %v3277
        %v3279 = vpop.f32.mrb[0].mxu0
        %v3280 = vpop.f32.mrb[0].mxu0
        %v3281 = vadd.f32 0.0, %v3280
        %v3282 = vpop.f32.mrb[0].mxu0
        %3283 = vmatprep.mubr.bf16.mxu0 0
        %3284 = vmatmul.mubr.bf16.gmra.mrb[0].mxu0 %v3066
        %v3285 = vpop.f32.mrb[0].mxu0
        %v3286 = vadd.f32 0.0, %v3285
        %v3287 = vpop.f32.mrb[0].mxu0
        %v3288 = vpop.f32.mrb[0].mxu0
        %v3289 = vadd.f32 0.0, %v3288
        %v3290 = vpop.f32.mrb[0].mxu0
        %3291 = vmatprep.mubr.bf16.mxu0 0
        %3292 = vmatmul.mubr.bf16.gmra.mrb[0].mxu0 %v3074
        %v3293 = vpop.f32.mrb[0].mxu0
        %v3294 = vadd.f32 0.0, %v3293
        %v3295 = vpop.f32.mrb[0].mxu0
        %v3296 = vpop.f32.mrb[0].mxu0
        %v3297 = vadd.f32 0.0, %v3296
        %v3298 = vpop.f32.mrb[0].mxu0
        %3299 = vmatprep.mubr.bf16.mxu0 0
        %3300 = vmatmul.mubr.bf16.gmra.mrb[0].mxu0 %v3082
        %v3301 = vpop.f32.mrb[0].mxu0
        %v3302 = vadd.f32 0.0, %v3301
        %v3303 = vpop.f32.mrb[0].mxu0
        %v3304 = vpop.f32.mrb[0].mxu0
        %v3305 = vadd.f32 0.0, %v3304
        %v3306 = vpop.f32.mrb[0].mxu0
        %3307 = vmatprep.mubr.bf16.mxu0 0
        %3308 = vmatmul.mubr.bf16.gmra.mrb[0].mxu0 %v3090
        %v3309 = vpop.f32.mrb[0].mxu0
        %v3310 = vadd.f32 0.0, %v3309
        %v3311 = vpop.f32.mrb[0].mxu0
        %v3312 = vpop.f32.mrb[0].mxu0
        %v3313 = vadd.f32 0.0, %v3312
        %v3314 = vpop.f32.mrb[0].mxu0
        %3315 = vmatprep.mubr.bf16.mxu0 0
        %3316 = vmatmul.mubr.bf16.gmra.mrb[0].mxu0 %v3098
        %v3317 = vpop.f32.mrb[0].mxu0
        %v3318 = vadd.f32 0.0, %v3317
        %v3319 = vpop.f32.mrb[0].mxu0
        %v3320 = vpop.f32.mrb[0].mxu0
        %v3321 = vadd.f32 0.0, %v3320
        %v3322 = vpop.f32.mrb[0].mxu0
        %3323 = vmatprep.mubr.bf16.mxu0 0
        %3324 = vmatmul.mubr.bf16.gmra.mrb[0].mxu0 %v3106
        %v3325 = vpop.f32.mrb[0].mxu0
        %v3326 = vadd.f32 0.0, %v3325
        %v3327 = vpop.f32.mrb[0].mxu0
        %v3328 = vpop.f32.mrb[0].mxu0
        %v3329 = vadd.f32 0.0, %v3328
        %v3330 = vpop.f32.mrb[0].mxu0
        %3331 = vmatprep.mubr.bf16.mxu0 0
        %3332 = vmatmul.mubr.bf16.gmra.mrb[0].mxu0 %v3114
        %v3333 = vpop.f32.mrb[0].mxu0
        %v3334 = vadd.f32 0.0, %v3333
        %v3335 = vpop.f32.mrb[0].mxu0
        %v3336 = vpop.f32.mrb[0].mxu0
        %v3337 = vadd.f32 0.0, %v3336
        %v3338 = vpop.f32.mrb[0].mxu0
        %3339 = vmatprep.mubr.bf16.mxu0 0
        %3340 = vmatmul.mubr.bf16.gmra.mrb[0].mxu0 %v3122
        %v3341 = vpop.f32.mrb[0].mxu0
        %v3342 = vadd.f32 0.0, %v3341
        %v3343 = vpop.f32.mrb[0].mxu0
        %v3344 = vpop.f32.mrb[0].mxu0
        %v3345 = vadd.f32 0.0, %v3344
        %v3346 = vpop.f32.mrb[0].mxu0
        %3347 = vmatprep.mubr.bf16.mxu0 0
        %3348 = vmatmul.mubr.bf16.gmra.mrb[0].mxu0 %v3130
        %v3349 = vpop.f32.mrb[0].mxu0
        %v3350 = vadd.f32 0.0, %v3349
        %v3351 = vpop.f32.mrb[0].mxu0
        %v3352 = vpop.f32.mrb[0].mxu0
        %v3353 = vadd.f32 0.0, %v3352
        %v3354 = vpop.f32.mrb[0].mxu0
        %3355 = vdwg.mxu0
        %v3356 = vadd.f32 %v2834, %v3230
        %v3357 = vadd.f32 %v2835, %v3233
        %v3358 = vadd.f32 %v2836, %v3238
        %v3359 = vadd.f32 %v2837, %v3241
        %v3360 = vadd.f32 %v2838, %v3246
        %v3361 = vadd.f32 %v2839, %v3249
        %v3362 = vadd.f32 %v2840, %v3254
        %v3363 = vadd.f32 %v2841, %v3257
        %v3364 = vadd.f32 %v2842, %v3262
        %v3365 = vadd.f32 %v2843, %v3265
        %v3366 = vadd.f32 %v2844, %v3270
        %v3367 = vadd.f32 %v2845, %v3273
        %v3368 = vadd.f32 %v2846, %v3278
        %v3369 = vadd.f32 %v2847, %v3281
        %v3370 = vadd.f32 %v2848, %v3286
        %v3371 = vadd.f32 %v2849, %v3289
        %v3372 = vadd.f32 %v2850, %v3294
        %v3373 = vadd.f32 %v2851, %v3297
        %v3374 = vadd.f32 %v2852, %v3302
        %v3375 = vadd.f32 %v2853, %v3305
        %v3376 = vadd.f32 %v2854, %v3310
        %v3377 = vadd.f32 %v2855, %v3313
        %v3378 = vadd.f32 %v2856, %v3318
        %v3379 = vadd.f32 %v2857, %v3321
        %v3380 = vadd.f32 %v2858, %v3326
        %v3381 = vadd.f32 %v2859, %v3329
        %v3382 = vadd.f32 %v2860, %v3334
        %v3383 = vadd.f32 %v2861, %v3337
        %v3384 = vadd.f32 %v2862, %v3342
        %v3385 = vadd.f32 %v2863, %v3345
        %v3386 = vadd.f32 %v2864, %v3350
        %v3387 = vadd.f32 %v2865, %v3353
        %v3388 = vld [vmem:[#allocation2 + $0x8] sm:$0xe]
        %v3389 = vsel %vm2020, %v3388, 0
        %v3390 = vsel %vm2021, %v2867, 0
        %v3391 = vsel %vm2022, %v2868, 0
        %v3392 = vsel %vm2021, %v2869, 0
        %v3393 = vsel %vm2022, %v2870, 0
        %v3394 = vsel %vm2021, %v2871, 0
        %v3395 = vsel %vm2022, %v2872, 0
        %v3396 = vsel %vm2021, %v2873, 0
        %v3397 = vsel %vm2022, %v2874, 0
        %v3398 = vsel %vm2021, %v2875, 0
        %v3399 = vsel %vm2022, %v2876, 0
        %v3400 = vsel %vm2021, %v2877, 0
        %v3401 = vsel %vm2022, %v2878, 0
        %v3402 = vsel %vm2021, %v2879, 0
        %v3403 = vsel %vm2022, %v2880, 0
        %v3404 = vsel %vm2021, %v2881, 0
        %v3405 = vsel %vm2022, %v2882, 0
        %v3406 = vsel %vm2021, %v2883, 0
        %v3407 = vsel %vm2022, %v2884, 0
        %v3408 = vsel %vm2021, %v2885, 0
        %v3409 = vsel %vm2022, %v2886, 0
        %v3410 = vsel %vm2021, %v2887, 0
        %v3411 = vsel %vm2022, %v2888, 0
        %v3412 = vsel %vm2021, %v2889, 0
        %v3413 = vsel %vm2022, %v2890, 0
        %v3414 = vsel %vm2021, %v2891, 0
        %v3415 = vsel %vm2022, %v2892, 0
        %v3416 = vsel %vm2021, %v2893, 0
        %v3417 = vsel %vm2022, %v2894, 0
        %v3418 = vsel %vm2021, %v2895, 0
        %v3419 = vsel %vm2022, %v2896, 0
        %v3420 = vsel %vm2021, %v2897, 0
        %v3421 = vsel %vm2023, %v2898, 0
        %s3422 = scalar_lea.vmem [#allocation8], 320
        %v3423 = vld [vmem:[%s3422] sm:$0xf]
        %v3424 = vld [vmem:[%s3422 + $0x4] sm:$0xf]
        %v3425 = vld [vmem:[%s3422 + $0x8] sm:$0xf]
        %v3426 = vld [vmem:[%s3422 + $0xc] sm:$0xf]
        %v3427 = vld [vmem:[%s3422 + $0x10] sm:$0xf]
        %v3428 = vld [vmem:[%s3422 + $0x14] sm:$0xf]
        %v3429 = vld [vmem:[%s3422 + $0x18] sm:$0xf]
        %v3430 = vld [vmem:[%s3422 + $0x1c] sm:$0xf]
        %v3431 = vld [vmem:[%s3422 + $0x20] sm:$0xf]
        %v3432 = vld [vmem:[%s3422 + $0x24] sm:$0xf]
        %v3433 = vld [vmem:[%s3422 + $0x28] sm:$0xf]
        %v3434 = vld [vmem:[%s3422 + $0x2c] sm:$0xf]
        %v3435 = vld [vmem:[%s3422 + $0x30] sm:$0xf]
        %v3436 = vld [vmem:[%s3422 + $0x34] sm:$0xf]
        %v3437 = vld [vmem:[%s3422 + $0x38] sm:$0xf]
        %v3438 = vld [vmem:[%s3422 + $0x3c] sm:$0xf]
        %v3472 = vunpack.c.l.b16 %v3389
        %v3473 = vunpack.c.l.b16 %v3390
        %v3474 = vunpack.c.l.b16 %v3391
        %v3475 = vunpack.c.l.b16 %v3392
        %v3476 = vunpack.c.l.b16 %v3393
        %v3477 = vunpack.c.l.b16 %v3394
        %v3478 = vunpack.c.l.b16 %v3395
        %v3479 = vunpack.c.l.b16 %v3396
        %v3480 = vunpack.c.l.b16 %v3397
        %v3481 = vunpack.c.l.b16 %v3398
        %v3482 = vunpack.c.l.b16 %v3399
        %v3483 = vunpack.c.l.b16 %v3400
        %v3484 = vunpack.c.l.b16 %v3401
        %v3485 = vunpack.c.l.b16 %v3402
        %v3486 = vunpack.c.l.b16 %v3403
        %v3487 = vunpack.c.l.b16 %v3404
        %v3488 = vunpack.c.l.b16 %v3405
        %v3489 = vunpack.c.l.b16 %v3406
        %v3490 = vunpack.c.l.b16 %v3407
        %v3491 = vunpack.c.l.b16 %v3408
        %v3492 = vunpack.c.l.b16 %v3409
        %v3493 = vunpack.c.l.b16 %v3410
        %v3494 = vunpack.c.l.b16 %v3411
        %v3495 = vunpack.c.l.b16 %v3412
        %v3496 = vunpack.c.l.b16 %v3413
        %v3497 = vunpack.c.l.b16 %v3414
        %v3498 = vunpack.c.l.b16 %v3415
        %v3499 = vunpack.c.l.b16 %v3416
        %v3500 = vunpack.c.l.b16 %v3417
        %v3501 = vunpack.c.l.b16 %v3418
        %v3502 = vunpack.c.l.b16 %v3419
        %v3503 = vunpack.c.l.b16 %v3420
        %v3504 = vunpack.c.l.b16 %v3421
        %v3505 = vpack.c.b16 %v3473, %v3472
        %v3506 = vpack.c.b16 %v3475, %v3474
        %v3507 = vpack.c.b16 %v3477, %v3476
        %v3508 = vpack.c.b16 %v3479, %v3478
        %v3509 = vpack.c.b16 %v3481, %v3480
        %v3510 = vpack.c.b16 %v3483, %v3482
        %v3511 = vpack.c.b16 %v3485, %v3484
        %v3512 = vpack.c.b16 %v3487, %v3486
        %v3513 = vpack.c.b16 %v3489, %v3488
        %v3514 = vpack.c.b16 %v3491, %v3490
        %v3515 = vpack.c.b16 %v3493, %v3492
        %v3516 = vpack.c.b16 %v3495, %v3494
        %v3517 = vpack.c.b16 %v3497, %v3496
        %v3518 = vpack.c.b16 %v3499, %v3498
        %v3519 = vpack.c.b16 %v3501, %v3500
        %v3520 = vpack.c.b16 %v3503, %v3502
        %v3521 = vpack.c.b16 %v3504, %v3504
        %v3522 = vrot.slane %v3505, 1
        %v3523 = vrot.slane %v3506, 1
        %v3524 = vsel %vm2157, %v3522, %v3523
        %v3525 = vrot.slane %v3507, 1
        %v3526 = vsel %vm2157, %v3523, %v3525
        %v3527 = vrot.slane %v3508, 1
        %v3528 = vsel %vm2157, %v3525, %v3527
        %v3529 = vrot.slane %v3509, 1
        %v3530 = vsel %vm2157, %v3527, %v3529
        %v3531 = vrot.slane %v3510, 1
        %v3532 = vsel %vm2157, %v3529, %v3531
        %v3533 = vrot.slane %v3511, 1
        %v3534 = vsel %vm2157, %v3531, %v3533
        %v3535 = vrot.slane %v3512, 1
        %v3536 = vsel %vm2157, %v3533, %v3535
        %v3537 = vrot.slane %v3513, 1
        %v3538 = vsel %vm2157, %v3535, %v3537
        %v3539 = vrot.slane %v3514, 1
        %v3540 = vsel %vm2157, %v3537, %v3539
        %v3541 = vrot.slane %v3515, 1
        %v3542 = vsel %vm2157, %v3539, %v3541
        %v3543 = vrot.slane %v3516, 1
        %v3544 = vsel %vm2157, %v3541, %v3543
        %v3545 = vrot.slane %v3517, 1
        %v3546 = vsel %vm2157, %v3543, %v3545
        %v3547 = vrot.slane %v3518, 1
        %v3548 = vsel %vm2157, %v3545, %v3547
        %v3549 = vrot.slane %v3519, 1
        %v3550 = vsel %vm2157, %v3547, %v3549
        %v3551 = vrot.slane %v3520, 1
        %v3552 = vsel %vm2157, %v3549, %v3551
        %v3553 = vrot.slane %v3521, 1
        %v3554 = vsel %vm2157, %v3551, %v3553
        %v3587 = vunpack.c.l.b16 %v3423
        %v3588 = vunpack.c.l.b16 %v3424
        %v3589 = vunpack.c.l.b16 %v3425
        %v3590 = vunpack.c.l.b16 %v3426
        %v3591 = vunpack.c.l.b16 %v3427
        %v3592 = vunpack.c.l.b16 %v3428
        %v3593 = vunpack.c.l.b16 %v3429
        %v3594 = vunpack.c.l.b16 %v3430
        %v3595 = vunpack.c.l.b16 %v3431
        %v3596 = vunpack.c.l.b16 %v3432
        %v3597 = vunpack.c.l.b16 %v3433
        %v3598 = vunpack.c.l.b16 %v3434
        %v3599 = vunpack.c.l.b16 %v3435
        %v3600 = vunpack.c.l.b16 %v3436
        %v3601 = vunpack.c.l.b16 %v3437
        %v3602 = vunpack.c.l.b16 %v3438
        %v3603 = vpack.c.b16 %v3588, %v3587
        %v3604 = vpack.c.b16 %v3590, %v3589
        %v3605 = vpack.c.b16 %v3592, %v3591
        %v3606 = vpack.c.b16 %v3594, %v3593
        %v3607 = vpack.c.b16 %v3596, %v3595
        %v3608 = vpack.c.b16 %v3598, %v3597
        %v3609 = vpack.c.b16 %v3600, %v3599
        %v3610 = vpack.c.b16 %v3602, %v3601
        %3619 = vmatprep.subr.bf16.mxu0 0
        %3620 = vmatpush1.bf16.msra.mxu0 %v3603
        %3621 = vmatprep.subr.bf16.mxu0 0
        %3622 = vmatpush1.bf16.msra.mxu0 %v3604
        %3623 = vmatprep.subr.bf16.mxu0 0
        %3624 = vmatpush1.bf16.msra.mxu0 %v3605
        %3625 = vmatprep.subr.bf16.mxu0 0
        %3626 = vmatpush1.bf16.msra.mxu0 %v3606
        %3627 = vmatprep.subr.bf16.mxu0 0
        %3628 = vmatpush1.bf16.msra.mxu0 %v3607
        %3629 = vmatprep.subr.bf16.mxu0 0
        %3630 = vmatpush1.bf16.msra.mxu0 %v3608
        %3631 = vmatprep.subr.bf16.mxu0 0
        %3632 = vmatpush1.bf16.msra.mxu0 %v3609
        %3633 = vmatprep.subr.bf16.mxu0 0
        %3634 = vmatpush1.bf16.msra.mxu0 %v3610
        %3635 = vmatprep.subr.bf16.mxu0 0
        %3636 = vmatpush1.bf16.msra.mxu0 0
        %3637 = vmatprep.subr.bf16.mxu0 0
        %3638 = vmatpush1.bf16.msra.mxu0 0
        %3639 = vmatprep.subr.bf16.mxu0 0
        %3640 = vmatpush1.bf16.msra.mxu0 0
        %3641 = vmatprep.subr.bf16.mxu0 0
        %3642 = vmatpush1.bf16.msra.mxu0 0
        %3643 = vmatprep.subr.bf16.mxu0 0
        %3644 = vmatpush1.bf16.msra.mxu0 0
        %3645 = vmatprep.subr.bf16.mxu0 0
        %3646 = vmatpush1.bf16.msra.mxu0 0
        %3647 = vmatprep.subr.bf16.mxu0 0
        %3648 = vmatpush1.bf16.msra.mxu0 0
        %3649 = vmatprep.subr.bf16.mxu0 0
        %3650 = vmatpush1.bf16.msra.mxu0 0
        %3651 = vmatprep.mubr.bf16.mxu0 0
        %3652 = vmatmul.mubr.bf16.gmra.mrb[0].mxu0 %v3524
        %v3653 = vpop.f32.mrb[0].mxu0
        %v3654 = vadd.f32 0.0, %v3653
        %v3655 = vpop.f32.mrb[0].mxu0
        %v3656 = vpop.f32.mrb[0].mxu0
        %v3657 = vadd.f32 0.0, %v3656
        %v3658 = vpop.f32.mrb[0].mxu0
        %3659 = vmatprep.mubr.bf16.mxu0 0
        %3660 = vmatmul.mubr.bf16.gmra.mrb[0].mxu0 %v3526
        %v3661 = vpop.f32.mrb[0].mxu0
        %v3662 = vadd.f32 0.0, %v3661
        %v3663 = vpop.f32.mrb[0].mxu0
        %v3664 = vpop.f32.mrb[0].mxu0
        %v3665 = vadd.f32 0.0, %v3664
        %v3666 = vpop.f32.mrb[0].mxu0
        %3667 = vmatprep.mubr.bf16.mxu0 0
        %3668 = vmatmul.mubr.bf16.gmra.mrb[0].mxu0 %v3528
        %v3669 = vpop.f32.mrb[0].mxu0
        %v3670 = vadd.f32 0.0, %v3669
        %v3671 = vpop.f32.mrb[0].mxu0
        %v3672 = vpop.f32.mrb[0].mxu0
        %v3673 = vadd.f32 0.0, %v3672
        %v3674 = vpop.f32.mrb[0].mxu0
        %3675 = vmatprep.mubr.bf16.mxu0 0
        %3676 = vmatmul.mubr.bf16.gmra.mrb[0].mxu0 %v3530
        %v3677 = vpop.f32.mrb[0].mxu0
        %v3678 = vadd.f32 0.0, %v3677
        %v3679 = vpop.f32.mrb[0].mxu0
        %v3680 = vpop.f32.mrb[0].mxu0
        %v3681 = vadd.f32 0.0, %v3680
        %v3682 = vpop.f32.mrb[0].mxu0
        %3683 = vmatprep.mubr.bf16.mxu0 0
        %3684 = vmatmul.mubr.bf16.gmra.mrb[0].mxu0 %v3532
        %v3685 = vpop.f32.mrb[0].mxu0
        %v3686 = vadd.f32 0.0, %v3685
        %v3687 = vpop.f32.mrb[0].mxu0
        %v3688 = vpop.f32.mrb[0].mxu0
        %v3689 = vadd.f32 0.0, %v3688
        %v3690 = vpop.f32.mrb[0].mxu0
        %3691 = vmatprep.mubr.bf16.mxu0 0
        %3692 = vmatmul.mubr.bf16.gmra.mrb[0].mxu0 %v3534
        %v3693 = vpop.f32.mrb[0].mxu0
        %v3694 = vadd.f32 0.0, %v3693
        %v3695 = vpop.f32.mrb[0].mxu0
        %v3696 = vpop.f32.mrb[0].mxu0
        %v3697 = vadd.f32 0.0, %v3696
        %v3698 = vpop.f32.mrb[0].mxu0
        %3699 = vmatprep.mubr.bf16.mxu0 0
        %3700 = vmatmul.mubr.bf16.gmra.mrb[0].mxu0 %v3536
        %v3701 = vpop.f32.mrb[0].mxu0
        %v3702 = vadd.f32 0.0, %v3701
        %v3703 = vpop.f32.mrb[0].mxu0
        %v3704 = vpop.f32.mrb[0].mxu0
        %v3705 = vadd.f32 0.0, %v3704
        %v3706 = vpop.f32.mrb[0].mxu0
        %3707 = vmatprep.mubr.bf16.mxu0 0
        %3708 = vmatmul.mubr.bf16.gmra.mrb[0].mxu0 %v3538
        %v3709 = vpop.f32.mrb[0].mxu0
        %v3710 = vadd.f32 0.0, %v3709
        %v3711 = vpop.f32.mrb[0].mxu0
        %v3712 = vpop.f32.mrb[0].mxu0
        %v3713 = vadd.f32 0.0, %v3712
        %v3714 = vpop.f32.mrb[0].mxu0
        %3715 = vmatprep.mubr.bf16.mxu0 0
        %3716 = vmatmul.mubr.bf16.gmra.mrb[0].mxu0 %v3540
        %v3717 = vpop.f32.mrb[0].mxu0
        %v3718 = vadd.f32 0.0, %v3717
        %v3719 = vpop.f32.mrb[0].mxu0
        %v3720 = vpop.f32.mrb[0].mxu0
        %v3721 = vadd.f32 0.0, %v3720
        %v3722 = vpop.f32.mrb[0].mxu0
        %3723 = vmatprep.mubr.bf16.mxu0 0
        %3724 = vmatmul.mubr.bf16.gmra.mrb[0].mxu0 %v3542
        %v3725 = vpop.f32.mrb[0].mxu0
        %v3726 = vadd.f32 0.0, %v3725
        %v3727 = vpop.f32.mrb[0].mxu0
        %v3728 = vpop.f32.mrb[0].mxu0
        %v3729 = vadd.f32 0.0, %v3728
        %v3730 = vpop.f32.mrb[0].mxu0
        %3731 = vmatprep.mubr.bf16.mxu0 0
        %3732 = vmatmul.mubr.bf16.gmra.mrb[0].mxu0 %v3544
        %v3733 = vpop.f32.mrb[0].mxu0
        %v3734 = vadd.f32 0.0, %v3733
        %v3735 = vpop.f32.mrb[0].mxu0
        %v3736 = vpop.f32.mrb[0].mxu0
        %v3737 = vadd.f32 0.0, %v3736
        %v3738 = vpop.f32.mrb[0].mxu0
        %3739 = vmatprep.mubr.bf16.mxu0 0
        %3740 = vmatmul.mubr.bf16.gmra.mrb[0].mxu0 %v3546
        %v3741 = vpop.f32.mrb[0].mxu0
        %v3742 = vadd.f32 0.0, %v3741
        %v3743 = vpop.f32.mrb[0].mxu0
        %v3744 = vpop.f32.mrb[0].mxu0
        %v3745 = vadd.f32 0.0, %v3744
        %v3746 = vpop.f32.mrb[0].mxu0
        %3747 = vmatprep.mubr.bf16.mxu0 0
        %3748 = vmatmul.mubr.bf16.gmra.mrb[0].mxu0 %v3548
        %v3749 = vpop.f32.mrb[0].mxu0
        %v3750 = vadd.f32 0.0, %v3749
        %v3751 = vpop.f32.mrb[0].mxu0
        %v3752 = vpop.f32.mrb[0].mxu0
        %v3753 = vadd.f32 0.0, %v3752
        %v3754 = vpop.f32.mrb[0].mxu0
        %3755 = vmatprep.mubr.bf16.mxu0 0
        %3756 = vmatmul.mubr.bf16.gmra.mrb[0].mxu0 %v3550
        %v3757 = vpop.f32.mrb[0].mxu0
        %v3758 = vadd.f32 0.0, %v3757
        %v3759 = vpop.f32.mrb[0].mxu0
        %v3760 = vpop.f32.mrb[0].mxu0
        %v3761 = vadd.f32 0.0, %v3760
        %v3762 = vpop.f32.mrb[0].mxu0
        %3763 = vmatprep.mubr.bf16.mxu0 0
        %3764 = vmatmul.mubr.bf16.gmra.mrb[0].mxu0 %v3552
        %v3765 = vpop.f32.mrb[0].mxu0
        %v3766 = vadd.f32 0.0, %v3765
        %v3767 = vpop.f32.mrb[0].mxu0
        %v3768 = vpop.f32.mrb[0].mxu0
        %v3769 = vadd.f32 0.0, %v3768
        %v3770 = vpop.f32.mrb[0].mxu0
        %3771 = vmatprep.mubr.bf16.mxu0 0
        %3772 = vmatmul.mubr.bf16.gmra.mrb[0].mxu0 %v3554
        %v3773 = vpop.f32.mrb[0].mxu0
        %v3774 = vadd.f32 0.0, %v3773
        %v3775 = vpop.f32.mrb[0].mxu0
        %v3776 = vpop.f32.mrb[0].mxu0
        %v3777 = vadd.f32 0.0, %v3776
        %v3778 = vpop.f32.mrb[0].mxu0
        %3779 = vdwg.mxu0
        %v3780 = vadd.f32 %v3356, %v3654
        %v3781 = vadd.f32 %v3357, %v3657
        %v3782 = vadd.f32 %v3358, %v3662
        %v3783 = vadd.f32 %v3359, %v3665
        %v3784 = vadd.f32 %v3360, %v3670
        %v3785 = vadd.f32 %v3361, %v3673
        %v3786 = vadd.f32 %v3362, %v3678
        %v3787 = vadd.f32 %v3363, %v3681
        %v3788 = vadd.f32 %v3364, %v3686
        %v3789 = vadd.f32 %v3365, %v3689
        %v3790 = vadd.f32 %v3366, %v3694
        %v3791 = vadd.f32 %v3367, %v3697
        %v3792 = vadd.f32 %v3368, %v3702
        %v3793 = vadd.f32 %v3369, %v3705
        %v3794 = vadd.f32 %v3370, %v3710
        %v3795 = vadd.f32 %v3371, %v3713
        %v3796 = vadd.f32 %v3372, %v3718
        %v3797 = vadd.f32 %v3373, %v3721
        %v3798 = vadd.f32 %v3374, %v3726
        %v3799 = vadd.f32 %v3375, %v3729
        %v3800 = vadd.f32 %v3376, %v3734
        %v3801 = vadd.f32 %v3377, %v3737
        %v3802 = vadd.f32 %v3378, %v3742
        %v3803 = vadd.f32 %v3379, %v3745
        %v3804 = vadd.f32 %v3380, %v3750
        %v3805 = vadd.f32 %v3381, %v3753
        %v3806 = vadd.f32 %v3382, %v3758
        %v3807 = vadd.f32 %v3383, %v3761
        %v3808 = vadd.f32 %v3384, %v3766
        %v3809 = vadd.f32 %v3385, %v3769
        %v3810 = vadd.f32 %v3386, %v3774
        %v3811 = vadd.f32 %v3387, %v3777
        %v3812 = vld [vmem:[#allocation2 + $0x10] sm:$0xf]
        %v3813 = vld [vmem:[#allocation2 + $0x14] sm:$0xf]
        %v3814 = vld [vmem:[#allocation2 + $0x18] sm:$0xf]
        %v3815 = vld [vmem:[#allocation2 + $0x1c] sm:$0xf]
        %v3816 = vld [vmem:[#allocation2 + $0x20] sm:$0xf]
        %v3817 = vld [vmem:[#allocation2 + $0x24] sm:$0xf]
        %v3818 = vld [vmem:[#allocation2 + $0x28] sm:$0xf]
        %v3819 = vld [vmem:[#allocation2 + $0x2c] sm:$0xf]
        %v3820 = vld [vmem:[#allocation2 + $0x30] sm:$0xf]
        %v3821 = vld [vmem:[#allocation2 + $0x34] sm:$0xf]
        %v3822 = vld [vmem:[#allocation2 + $0x38] sm:$0xf]
        %v3823 = vld [vmem:[#allocation2 + $0x3c] sm:$0xf]
        %v3824 = vld [vmem:[#allocation2 + $0x40] sm:$0xf]
        %v3825 = vld [vmem:[#allocation2 + $0x44] sm:$0xf]
        %v3826 = vld [vmem:[#allocation2 + $0x48] sm:$0xf]
        %v3827 = vld [vmem:[#allocation2 + $0x4c] sm:$0xf]
        %v3828 = vld [vmem:[#allocation2 + $0x50] sm:$0xf]
        %v3829 = vld [vmem:[#allocation2 + $0x54] sm:$0xf]
        %v3830 = vld [vmem:[#allocation2 + $0x58] sm:$0xf]
        %v3831 = vld [vmem:[#allocation2 + $0x5c] sm:$0xf]
        %v3832 = vld [vmem:[#allocation2 + $0x60] sm:$0xf]
        %v3833 = vld [vmem:[#allocation2 + $0x64] sm:$0xf]
        %v3834 = vld [vmem:[#allocation2 + $0x68] sm:$0xf]
        %v3835 = vld [vmem:[#allocation2 + $0x6c] sm:$0xf]
        %v3836 = vld [vmem:[#allocation2 + $0x70] sm:$0xf]
        %v3837 = vld [vmem:[#allocation2 + $0x74] sm:$0xf]
        %v3838 = vld [vmem:[#allocation2 + $0x78] sm:$0xf]
        %v3839 = vld [vmem:[#allocation2 + $0x7c] sm:$0xf]
        %v3840 = vld [vmem:[#allocation2 + $0x80] sm:$0xf]
        %v3841 = vld [vmem:[#allocation2 + $0x84] sm:$0xf]
        %v3842 = vld [vmem:[#allocation2 + $0x88] sm:$0xf]
        %v3843 = vld [vmem:[#allocation2 + $0x8c] sm:$0xf]
        %v3844 = vsel %vm1193, %v3812, 0
        %v3845 = vsel %vm1194, %v3813, 0
        %v3846 = vsel %vm1193, %v3814, 0
        %v3847 = vsel %vm1194, %v3815, 0
        %v3848 = vsel %vm1193, %v3816, 0
        %v3849 = vsel %vm1194, %v3817, 0
        %v3850 = vsel %vm1193, %v3818, 0
        %v3851 = vsel %vm1194, %v3819, 0
        %v3852 = vsel %vm1193, %v3820, 0
        %v3853 = vsel %vm1194, %v3821, 0
        %v3854 = vsel %vm1193, %v3822, 0
        %v3855 = vsel %vm1194, %v3823, 0
        %v3856 = vsel %vm1193, %v3824, 0
        %v3857 = vsel %vm1194, %v3825, 0
        %v3858 = vsel %vm1193, %v3826, 0
        %v3859 = vsel %vm1194, %v3827, 0
        %v3860 = vsel %vm1193, %v3828, 0
        %v3861 = vsel %vm1194, %v3829, 0
        %v3862 = vsel %vm1193, %v3830, 0
        %v3863 = vsel %vm1194, %v3831, 0
        %v3864 = vsel %vm1193, %v3832, 0
        %v3865 = vsel %vm1194, %v3833, 0
        %v3866 = vsel %vm1193, %v3834, 0
        %v3867 = vsel %vm1194, %v3835, 0
        %v3868 = vsel %vm1193, %v3836, 0
        %v3869 = vsel %vm1194, %v3837, 0
        %v3870 = vsel %vm1193, %v3838, 0
        %v3871 = vsel %vm1194, %v3839, 0
        %v3872 = vsel %vm1193, %v3840, 0
        %v3873 = vsel %vm1194, %v3841, 0
        %v3874 = vsel %vm1193, %v3842, 0
        %v3875 = vsel %vm1194, %v3843, 0
        %s3876 = scalar_lea.vmem [#allocation8], 384
        %v3877 = vld [vmem:[%s3876] sm:$0xf]
        %v3878 = vld [vmem:[%s3876 + $0x4] sm:$0xf]
        %v3879 = vld [vmem:[%s3876 + $0x8] sm:$0xf]
        %v3880 = vld [vmem:[%s3876 + $0xc] sm:$0xf]
        %v3881 = vld [vmem:[%s3876 + $0x10] sm:$0xf]
        %v3882 = vld [vmem:[%s3876 + $0x14] sm:$0xf]
        %v3883 = vld [vmem:[%s3876 + $0x18] sm:$0xf]
        %v3884 = vld [vmem:[%s3876 + $0x1c] sm:$0xf]
        %v3885 = vld [vmem:[%s3876 + $0x20] sm:$0xf]
        %v3886 = vld [vmem:[%s3876 + $0x24] sm:$0xf]
        %v3887 = vld [vmem:[%s3876 + $0x28] sm:$0xf]
        %v3888 = vld [vmem:[%s3876 + $0x2c] sm:$0xf]
        %v3889 = vld [vmem:[%s3876 + $0x30] sm:$0xf]
        %v3890 = vld [vmem:[%s3876 + $0x34] sm:$0xf]
        %v3891 = vld [vmem:[%s3876 + $0x38] sm:$0xf]
        %v3892 = vld [vmem:[%s3876 + $0x3c] sm:$0xf]
        %v3925 = vunpack.c.l.b16 %v3844
        %v3926 = vunpack.c.l.b16 %v3845
        %v3927 = vunpack.c.l.b16 %v3846
        %v3928 = vunpack.c.l.b16 %v3847
        %v3929 = vunpack.c.l.b16 %v3848
        %v3930 = vunpack.c.l.b16 %v3849
        %v3931 = vunpack.c.l.b16 %v3850
        %v3932 = vunpack.c.l.b16 %v3851
        %v3933 = vunpack.c.l.b16 %v3852
        %v3934 = vunpack.c.l.b16 %v3853
        %v3935 = vunpack.c.l.b16 %v3854
        %v3936 = vunpack.c.l.b16 %v3855
        %v3937 = vunpack.c.l.b16 %v3856
        %v3938 = vunpack.c.l.b16 %v3857
        %v3939 = vunpack.c.l.b16 %v3858
        %v3940 = vunpack.c.l.b16 %v3859
        %v3941 = vunpack.c.l.b16 %v3860
        %v3942 = vunpack.c.l.b16 %v3861
        %v3943 = vunpack.c.l.b16 %v3862
        %v3944 = vunpack.c.l.b16 %v3863
        %v3945 = vunpack.c.l.b16 %v3864
        %v3946 = vunpack.c.l.b16 %v3865
        %v3947 = vunpack.c.l.b16 %v3866
        %v3948 = vunpack.c.l.b16 %v3867
        %v3949 = vunpack.c.l.b16 %v3868
        %v3950 = vunpack.c.l.b16 %v3869
        %v3951 = vunpack.c.l.b16 %v3870
        %v3952 = vunpack.c.l.b16 %v3871
        %v3953 = vunpack.c.l.b16 %v3872
        %v3954 = vunpack.c.l.b16 %v3873
        %v3955 = vunpack.c.l.b16 %v3874
        %v3956 = vunpack.c.l.b16 %v3875
        %v3957 = vpack.c.b16 %v3926, %v3925
        %v3958 = vpack.c.b16 %v3928, %v3927
        %v3959 = vpack.c.b16 %v3930, %v3929
        %v3960 = vpack.c.b16 %v3932, %v3931
        %v3961 = vpack.c.b16 %v3934, %v3933
        %v3962 = vpack.c.b16 %v3936, %v3935
        %v3963 = vpack.c.b16 %v3938, %v3937
        %v3964 = vpack.c.b16 %v3940, %v3939
        %v3965 = vpack.c.b16 %v3942, %v3941
        %v3966 = vpack.c.b16 %v3944, %v3943
        %v3967 = vpack.c.b16 %v3946, %v3945
        %v3968 = vpack.c.b16 %v3948, %v3947
        %v3969 = vpack.c.b16 %v3950, %v3949
        %v3970 = vpack.c.b16 %v3952, %v3951
        %v3971 = vpack.c.b16 %v3954, %v3953
        %v3972 = vpack.c.b16 %v3956, %v3955
        %v4005 = vunpack.c.l.b16 %v3877
        %v4006 = vunpack.c.l.b16 %v3878
        %v4007 = vunpack.c.l.b16 %v3879
        %v4008 = vunpack.c.l.b16 %v3880
        %v4009 = vunpack.c.l.b16 %v3881
        %v4010 = vunpack.c.l.b16 %v3882
        %v4011 = vunpack.c.l.b16 %v3883
        %v4012 = vunpack.c.l.b16 %v3884
        %v4013 = vunpack.c.l.b16 %v3885
        %v4014 = vunpack.c.l.b16 %v3886
        %v4015 = vunpack.c.l.b16 %v3887
        %v4016 = vunpack.c.l.b16 %v3888
        %v4017 = vunpack.c.l.b16 %v3889
        %v4018 = vunpack.c.l.b16 %v3890
        %v4019 = vunpack.c.l.b16 %v3891
        %v4020 = vunpack.c.l.b16 %v3892
        %v4021 = vpack.c.b16 %v4006, %v4005
        %v4022 = vpack.c.b16 %v4008, %v4007
        %v4023 = vpack.c.b16 %v4010, %v4009
        %v4024 = vpack.c.b16 %v4012, %v4011
        %v4025 = vpack.c.b16 %v4014, %v4013
        %v4026 = vpack.c.b16 %v4016, %v4015
        %v4027 = vpack.c.b16 %v4018, %v4017
        %v4028 = vpack.c.b16 %v4020, %v4019
        %4037 = vmatprep.subr.bf16.mxu0 0
        %4038 = vmatpush1.bf16.msra.mxu0 %v4021
        %4039 = vmatprep.subr.bf16.mxu0 0
        %4040 = vmatpush1.bf16.msra.mxu0 %v4022
        %4041 = vmatprep.subr.bf16.mxu0 0
        %4042 = vmatpush1.bf16.msra.mxu0 %v4023
        %4043 = vmatprep.subr.bf16.mxu0 0
        %4044 = vmatpush1.bf16.msra.mxu0 %v4024
        %4045 = vmatprep.subr.bf16.mxu0 0
        %4046 = vmatpush1.bf16.msra.mxu0 %v4025
        %4047 = vmatprep.subr.bf16.mxu0 0
        %4048 = vmatpush1.bf16.msra.mxu0 %v4026
        %4049 = vmatprep.subr.bf16.mxu0 0
        %4050 = vmatpush1.bf16.msra.mxu0 %v4027
        %4051 = vmatprep.subr.bf16.mxu0 0
        %4052 = vmatpush1.bf16.msra.mxu0 %v4028
        %4053 = vmatprep.subr.bf16.mxu0 0
        %4054 = vmatpush1.bf16.msra.mxu0 0
        %4055 = vmatprep.subr.bf16.mxu0 0
        %4056 = vmatpush1.bf16.msra.mxu0 0
        %4057 = vmatprep.subr.bf16.mxu0 0
        %4058 = vmatpush1.bf16.msra.mxu0 0
        %4059 = vmatprep.subr.bf16.mxu0 0
        %4060 = vmatpush1.bf16.msra.mxu0 0
        %4061 = vmatprep.subr.bf16.mxu0 0
        %4062 = vmatpush1.bf16.msra.mxu0 0
        %4063 = vmatprep.subr.bf16.mxu0 0
        %4064 = vmatpush1.bf16.msra.mxu0 0
        %4065 = vmatprep.subr.bf16.mxu0 0
        %4066 = vmatpush1.bf16.msra.mxu0 0
        %4067 = vmatprep.subr.bf16.mxu0 0
        %4068 = vmatpush1.bf16.msra.mxu0 0
        %4069 = vmatprep.mubr.bf16.mxu0 0
        %4070 = vmatmul.mubr.bf16.gmra.mrb[0].mxu0 %v3957
        %v4071 = vpop.f32.mrb[0].mxu0
        %v4072 = vadd.f32 0.0, %v4071
        %v4073 = vpop.f32.mrb[0].mxu0
        %v4074 = vpop.f32.mrb[0].mxu0
        %v4075 = vadd.f32 0.0, %v4074
        %v4076 = vpop.f32.mrb[0].mxu0
        %4077 = vmatprep.mubr.bf16.mxu0 0
        %4078 = vmatmul.mubr.bf16.gmra.mrb[0].mxu0 %v3958
        %v4079 = vpop.f32.mrb[0].mxu0
        %v4080 = vadd.f32 0.0, %v4079
        %v4081 = vpop.f32.mrb[0].mxu0
        %v4082 = vpop.f32.mrb[0].mxu0
        %v4083 = vadd.f32 0.0, %v4082
        %v4084 = vpop.f32.mrb[0].mxu0
        %4085 = vmatprep.mubr.bf16.mxu0 0
        %4086 = vmatmul.mubr.bf16.gmra.mrb[0].mxu0 %v3959
        %v4087 = vpop.f32.mrb[0].mxu0
        %v4088 = vadd.f32 0.0, %v4087
        %v4089 = vpop.f32.mrb[0].mxu0
        %v4090 = vpop.f32.mrb[0].mxu0
        %v4091 = vadd.f32 0.0, %v4090
        %v4092 = vpop.f32.mrb[0].mxu0
        %4093 = vmatprep.mubr.bf16.mxu0 0
        %4094 = vmatmul.mubr.bf16.gmra.mrb[0].mxu0 %v3960
        %v4095 = vpop.f32.mrb[0].mxu0
        %v4096 = vadd.f32 0.0, %v4095
        %v4097 = vpop.f32.mrb[0].mxu0
        %v4098 = vpop.f32.mrb[0].mxu0
        %v4099 = vadd.f32 0.0, %v4098
        %v4100 = vpop.f32.mrb[0].mxu0
        %4101 = vmatprep.mubr.bf16.mxu0 0
        %4102 = vmatmul.mubr.bf16.gmra.mrb[0].mxu0 %v3961
        %v4103 = vpop.f32.mrb[0].mxu0
        %v4104 = vadd.f32 0.0, %v4103
        %v4105 = vpop.f32.mrb[0].mxu0
        %v4106 = vpop.f32.mrb[0].mxu0
        %v4107 = vadd.f32 0.0, %v4106
        %v4108 = vpop.f32.mrb[0].mxu0
        %4109 = vmatprep.mubr.bf16.mxu0 0
        %4110 = vmatmul.mubr.bf16.gmra.mrb[0].mxu0 %v3962
        %v4111 = vpop.f32.mrb[0].mxu0
        %v4112 = vadd.f32 0.0, %v4111
        %v4113 = vpop.f32.mrb[0].mxu0
        %v4114 = vpop.f32.mrb[0].mxu0
        %v4115 = vadd.f32 0.0, %v4114
        %v4116 = vpop.f32.mrb[0].mxu0
        %4117 = vmatprep.mubr.bf16.mxu0 0
        %4118 = vmatmul.mubr.bf16.gmra.mrb[0].mxu0 %v3963
        %v4119 = vpop.f32.mrb[0].mxu0
        %v4120 = vadd.f32 0.0, %v4119
        %v4121 = vpop.f32.mrb[0].mxu0
        %v4122 = vpop.f32.mrb[0].mxu0
        %v4123 = vadd.f32 0.0, %v4122
        %v4124 = vpop.f32.mrb[0].mxu0
        %4125 = vmatprep.mubr.bf16.mxu0 0
        %4126 = vmatmul.mubr.bf16.gmra.mrb[0].mxu0 %v3964
        %v4127 = vpop.f32.mrb[0].mxu0
        %v4128 = vadd.f32 0.0, %v4127
        %v4129 = vpop.f32.mrb[0].mxu0
        %v4130 = vpop.f32.mrb[0].mxu0
        %v4131 = vadd.f32 0.0, %v4130
        %v4132 = vpop.f32.mrb[0].mxu0
        %4133 = vmatprep.mubr.bf16.mxu0 0
        %4134 = vmatmul.mubr.bf16.gmra.mrb[0].mxu0 %v3965
        %v4135 = vpop.f32.mrb[0].mxu0
        %v4136 = vadd.f32 0.0, %v4135
        %v4137 = vpop.f32.mrb[0].mxu0
        %v4138 = vpop.f32.mrb[0].mxu0
        %v4139 = vadd.f32 0.0, %v4138
        %v4140 = vpop.f32.mrb[0].mxu0
        %4141 = vmatprep.mubr.bf16.mxu0 0
        %4142 = vmatmul.mubr.bf16.gmra.mrb[0].mxu0 %v3966
        %v4143 = vpop.f32.mrb[0].mxu0
        %v4144 = vadd.f32 0.0, %v4143
        %v4145 = vpop.f32.mrb[0].mxu0
        %v4146 = vpop.f32.mrb[0].mxu0
        %v4147 = vadd.f32 0.0, %v4146
        %v4148 = vpop.f32.mrb[0].mxu0
        %4149 = vmatprep.mubr.bf16.mxu0 0
        %4150 = vmatmul.mubr.bf16.gmra.mrb[0].mxu0 %v3967
        %v4151 = vpop.f32.mrb[0].mxu0
        %v4152 = vadd.f32 0.0, %v4151
        %v4153 = vpop.f32.mrb[0].mxu0
        %v4154 = vpop.f32.mrb[0].mxu0
        %v4155 = vadd.f32 0.0, %v4154
        %v4156 = vpop.f32.mrb[0].mxu0
        %4157 = vmatprep.mubr.bf16.mxu0 0
        %4158 = vmatmul.mubr.bf16.gmra.mrb[0].mxu0 %v3968
        %v4159 = vpop.f32.mrb[0].mxu0
        %v4160 = vadd.f32 0.0, %v4159
        %v4161 = vpop.f32.mrb[0].mxu0
        %v4162 = vpop.f32.mrb[0].mxu0
        %v4163 = vadd.f32 0.0, %v4162
        %v4164 = vpop.f32.mrb[0].mxu0
        %4165 = vmatprep.mubr.bf16.mxu0 0
        %4166 = vmatmul.mubr.bf16.gmra.mrb[0].mxu0 %v3969
        %v4167 = vpop.f32.mrb[0].mxu0
        %v4168 = vadd.f32 0.0, %v4167
        %v4169 = vpop.f32.mrb[0].mxu0
        %v4170 = vpop.f32.mrb[0].mxu0
        %v4171 = vadd.f32 0.0, %v4170
        %v4172 = vpop.f32.mrb[0].mxu0
        %4173 = vmatprep.mubr.bf16.mxu0 0
        %4174 = vmatmul.mubr.bf16.gmra.mrb[0].mxu0 %v3970
        %v4175 = vpop.f32.mrb[0].mxu0
        %v4176 = vadd.f32 0.0, %v4175
        %v4177 = vpop.f32.mrb[0].mxu0
        %v4178 = vpop.f32.mrb[0].mxu0
        %v4179 = vadd.f32 0.0, %v4178
        %v4180 = vpop.f32.mrb[0].mxu0
        %4181 = vmatprep.mubr.bf16.mxu0 0
        %4182 = vmatmul.mubr.bf16.gmra.mrb[0].mxu0 %v3971
        %v4183 = vpop.f32.mrb[0].mxu0
        %v4184 = vadd.f32 0.0, %v4183
        %v4185 = vpop.f32.mrb[0].mxu0
        %v4186 = vpop.f32.mrb[0].mxu0
        %v4187 = vadd.f32 0.0, %v4186
        %v4188 = vpop.f32.mrb[0].mxu0
        %4189 = vmatprep.mubr.bf16.mxu0 0
        %4190 = vmatmul.mubr.bf16.gmra.mrb[0].mxu0 %v3972
        %v4191 = vpop.f32.mrb[0].mxu0
        %v4192 = vadd.f32 0.0, %v4191
        %v4193 = vpop.f32.mrb[0].mxu0
        %v4194 = vpop.f32.mrb[0].mxu0
        %v4195 = vadd.f32 0.0, %v4194
        %v4196 = vpop.f32.mrb[0].mxu0
        %4197 = vdwg.mxu0
        %v4198 = vadd.f32 %v3780, %v4072
        %v4199 = vadd.f32 %v3781, %v4075
        %v4200 = vadd.f32 %v3782, %v4080
        %v4201 = vadd.f32 %v3783, %v4083
        %v4202 = vadd.f32 %v3784, %v4088
        %v4203 = vadd.f32 %v3785, %v4091
        %v4204 = vadd.f32 %v3786, %v4096
        %v4205 = vadd.f32 %v3787, %v4099
        %v4206 = vadd.f32 %v3788, %v4104
        %v4207 = vadd.f32 %v3789, %v4107
        %v4208 = vadd.f32 %v3790, %v4112
        %v4209 = vadd.f32 %v3791, %v4115
        %v4210 = vadd.f32 %v3792, %v4120
        %v4211 = vadd.f32 %v3793, %v4123
        %v4212 = vadd.f32 %v3794, %v4128
        %v4213 = vadd.f32 %v3795, %v4131
        %v4214 = vadd.f32 %v3796, %v4136
        %v4215 = vadd.f32 %v3797, %v4139
        %v4216 = vadd.f32 %v3798, %v4144
        %v4217 = vadd.f32 %v3799, %v4147
        %v4218 = vadd.f32 %v3800, %v4152
        %v4219 = vadd.f32 %v3801, %v4155
        %v4220 = vadd.f32 %v3802, %v4160
        %v4221 = vadd.f32 %v3803, %v4163
        %v4222 = vadd.f32 %v3804, %v4168
        %v4223 = vadd.f32 %v3805, %v4171
        %v4224 = vadd.f32 %v3806, %v4176
        %v4225 = vadd.f32 %v3807, %v4179
        %v4226 = vadd.f32 %v3808, %v4184
        %v4227 = vadd.f32 %v3809, %v4187
        %v4228 = vadd.f32 %v3810, %v4192
        %v4229 = vadd.f32 %v3811, %v4195
        %v4230 = vld [vmem:[#allocation2 + $0x10] sm:$0xf]
        %v4231 = vld [vmem:[#allocation2 + $0x14] sm:$0xf]
        %v4232 = vld [vmem:[#allocation2 + $0x18] sm:$0xf]
        %v4233 = vld [vmem:[#allocation2 + $0x1c] sm:$0xf]
        %v4234 = vld [vmem:[#allocation2 + $0x20] sm:$0xf]
        %v4235 = vld [vmem:[#allocation2 + $0x24] sm:$0xf]
        %v4236 = vld [vmem:[#allocation2 + $0x28] sm:$0xf]
        %v4237 = vld [vmem:[#allocation2 + $0x2c] sm:$0xf]
        %v4238 = vld [vmem:[#allocation2 + $0x30] sm:$0xf]
        %v4239 = vld [vmem:[#allocation2 + $0x34] sm:$0xf]
        %v4240 = vld [vmem:[#allocation2 + $0x38] sm:$0xf]
        %v4241 = vld [vmem:[#allocation2 + $0x3c] sm:$0xf]
        %v4242 = vld [vmem:[#allocation2 + $0x40] sm:$0xf]
        %v4243 = vld [vmem:[#allocation2 + $0x44] sm:$0xf]
        %v4244 = vld [vmem:[#allocation2 + $0x48] sm:$0xf]
        %v4245 = vld [vmem:[#allocation2 + $0x4c] sm:$0xf]
        %v4246 = vld [vmem:[#allocation2 + $0x50] sm:$0xf]
        %v4247 = vld [vmem:[#allocation2 + $0x54] sm:$0xf]
        %v4248 = vld [vmem:[#allocation2 + $0x58] sm:$0xf]
        %v4249 = vld [vmem:[#allocation2 + $0x5c] sm:$0xf]
        %v4250 = vld [vmem:[#allocation2 + $0x60] sm:$0xf]
        %v4251 = vld [vmem:[#allocation2 + $0x64] sm:$0xf]
        %v4252 = vld [vmem:[#allocation2 + $0x68] sm:$0xf]
        %v4253 = vld [vmem:[#allocation2 + $0x6c] sm:$0xf]
        %v4254 = vld [vmem:[#allocation2 + $0x70] sm:$0xf]
        %v4255 = vld [vmem:[#allocation2 + $0x74] sm:$0xf]
        %v4256 = vld [vmem:[#allocation2 + $0x78] sm:$0xf]
        %v4257 = vld [vmem:[#allocation2 + $0x7c] sm:$0xf]
        %v4258 = vld [vmem:[#allocation2 + $0x80] sm:$0xf]
        %v4259 = vld [vmem:[#allocation2 + $0x84] sm:$0xf]
        %v4260 = vld [vmem:[#allocation2 + $0x88] sm:$0xf]
        %v4261 = vld [vmem:[#allocation2 + $0x8c] sm:$0xf]
        %v4262 = vld [vmem:[#allocation2 + $0x90] sm:$0x1]
        %s4263 = scalar_lea.vmem [#allocation8], 448
        %v4264 = vld [vmem:[%s4263] sm:$0xf]
        %v4265 = vld [vmem:[%s4263 + $0x4] sm:$0xf]
        %v4266 = vld [vmem:[%s4263 + $0x8] sm:$0xf]
        %v4267 = vld [vmem:[%s4263 + $0xc] sm:$0xf]
        %v4268 = vld [vmem:[%s4263 + $0x10] sm:$0xf]
        %v4269 = vld [vmem:[%s4263 + $0x14] sm:$0xf]
        %v4270 = vld [vmem:[%s4263 + $0x18] sm:$0xf]
        %v4271 = vld [vmem:[%s4263 + $0x1c] sm:$0xf]
        %v4272 = vld [vmem:[%s4263 + $0x20] sm:$0xf]
        %v4273 = vld [vmem:[%s4263 + $0x24] sm:$0xf]
        %v4274 = vld [vmem:[%s4263 + $0x28] sm:$0xf]
        %v4275 = vld [vmem:[%s4263 + $0x2c] sm:$0xf]
        %v4276 = vld [vmem:[%s4263 + $0x30] sm:$0xf]
        %v4277 = vld [vmem:[%s4263 + $0x34] sm:$0xf]
        %v4278 = vld [vmem:[%s4263 + $0x38] sm:$0xf]
        %v4279 = vld [vmem:[%s4263 + $0x3c] sm:$0xf]
        %v4313 = vunpack.c.l.b16 %v4230
        %v4314 = vunpack.c.l.b16 %v4231
        %v4315 = vunpack.c.l.b16 %v4232
        %v4316 = vunpack.c.l.b16 %v4233
        %v4317 = vunpack.c.l.b16 %v4234
        %v4318 = vunpack.c.l.b16 %v4235
        %v4319 = vunpack.c.l.b16 %v4236
        %v4320 = vunpack.c.l.b16 %v4237
        %v4321 = vunpack.c.l.b16 %v4238
        %v4322 = vunpack.c.l.b16 %v4239
        %v4323 = vunpack.c.l.b16 %v4240
        %v4324 = vunpack.c.l.b16 %v4241
        %v4325 = vunpack.c.l.b16 %v4242
        %v4326 = vunpack.c.l.b16 %v4243
        %v4327 = vunpack.c.l.b16 %v4244
        %v4328 = vunpack.c.l.b16 %v4245
        %v4329 = vunpack.c.l.b16 %v4246
        %v4330 = vunpack.c.l.b16 %v4247
        %v4331 = vunpack.c.l.b16 %v4248
        %v4332 = vunpack.c.l.b16 %v4249
        %v4333 = vunpack.c.l.b16 %v4250
        %v4334 = vunpack.c.l.b16 %v4251
        %v4335 = vunpack.c.l.b16 %v4252
        %v4336 = vunpack.c.l.b16 %v4253
        %v4337 = vunpack.c.l.b16 %v4254
        %v4338 = vunpack.c.l.b16 %v4255
        %v4339 = vunpack.c.l.b16 %v4256
        %v4340 = vunpack.c.l.b16 %v4257
        %v4341 = vunpack.c.l.b16 %v4258
        %v4342 = vunpack.c.l.b16 %v4259
        %v4343 = vunpack.c.l.b16 %v4260
        %v4344 = vunpack.c.l.b16 %v4261
        %v4345 = vunpack.c.l.b16 %v4262
        %v4346 = vpack.c.b16 %v4314, %v4313
        %v4347 = vpack.c.b16 %v4316, %v4315
        %v4348 = vpack.c.b16 %v4318, %v4317
        %v4349 = vpack.c.b16 %v4320, %v4319
        %v4350 = vpack.c.b16 %v4322, %v4321
        %v4351 = vpack.c.b16 %v4324, %v4323
        %v4352 = vpack.c.b16 %v4326, %v4325
        %v4353 = vpack.c.b16 %v4328, %v4327
        %v4354 = vpack.c.b16 %v4330, %v4329
        %v4355 = vpack.c.b16 %v4332, %v4331
        %v4356 = vpack.c.b16 %v4334, %v4333
        %v4357 = vpack.c.b16 %v4336, %v4335
        %v4358 = vpack.c.b16 %v4338, %v4337
        %v4359 = vpack.c.b16 %v4340, %v4339
        %v4360 = vpack.c.b16 %v4342, %v4341
        %v4361 = vpack.c.b16 %v4344, %v4343
        %v4362 = vpack.c.b16 %v4345, %v4345
        %v4364 = vshrl.u32 %v4346, 16
        %v4366 = vshll.u32 %v4346, 16
        %v4368 = vrot.slane %v4366, 1
        %v4369 = vor.u32 %v4364, %v4368
        %v4371 = vshll.u32 %v4347, 16
        %v4373 = vrot.slane %v4371, 1
        %v4374 = vsel %vm1344, %v4369, %v4373
        %v4375 = vshrl.u32 %v4347, 16
        %v4377 = vor.u32 %v4375, %v4373
        %v4379 = vshll.u32 %v4348, 16
        %v4381 = vrot.slane %v4379, 1
        %v4382 = vsel %vm1344, %v4377, %v4381
        %v4383 = vshrl.u32 %v4348, 16
        %v4385 = vor.u32 %v4383, %v4381
        %v4387 = vshll.u32 %v4349, 16
        %v4389 = vrot.slane %v4387, 1
        %v4390 = vsel %vm1344, %v4385, %v4389
        %v4391 = vshrl.u32 %v4349, 16
        %v4393 = vor.u32 %v4391, %v4389
        %v4395 = vshll.u32 %v4350, 16
        %v4397 = vrot.slane %v4395, 1
        %v4398 = vsel %vm1344, %v4393, %v4397
        %v4399 = vshrl.u32 %v4350, 16
        %v4401 = vor.u32 %v4399, %v4397
        %v4403 = vshll.u32 %v4351, 16
        %v4405 = vrot.slane %v4403, 1
        %v4406 = vsel %vm1344, %v4401, %v4405
        %v4407 = vshrl.u32 %v4351, 16
        %v4409 = vor.u32 %v4407, %v4405
        %v4411 = vshll.u32 %v4352, 16
        %v4413 = vrot.slane %v4411, 1
        %v4414 = vsel %vm1344, %v4409, %v4413
        %v4415 = vshrl.u32 %v4352, 16
        %v4417 = vor.u32 %v4415, %v4413
        %v4419 = vshll.u32 %v4353, 16
        %v4421 = vrot.slane %v4419, 1
        %v4422 = vsel %vm1344, %v4417, %v4421
        %v4423 = vshrl.u32 %v4353, 16
        %v4425 = vor.u32 %v4423, %v4421
        %v4427 = vshll.u32 %v4354, 16
        %v4429 = vrot.slane %v4427, 1
        %v4430 = vsel %vm1344, %v4425, %v4429
        %v4431 = vshrl.u32 %v4354, 16
        %v4433 = vor.u32 %v4431, %v4429
        %v4435 = vshll.u32 %v4355, 16
        %v4437 = vrot.slane %v4435, 1
        %v4438 = vsel %vm1344, %v4433, %v4437
        %v4439 = vshrl.u32 %v4355, 16
        %v4441 = vor.u32 %v4439, %v4437
        %v4443 = vshll.u32 %v4356, 16
        %v4445 = vrot.slane %v4443, 1
        %v4446 = vsel %vm1344, %v4441, %v4445
        %v4447 = vshrl.u32 %v4356, 16
        %v4449 = vor.u32 %v4447, %v4445
        %v4451 = vshll.u32 %v4357, 16
        %v4453 = vrot.slane %v4451, 1
        %v4454 = vsel %vm1344, %v4449, %v4453
        %v4455 = vshrl.u32 %v4357, 16
        %v4457 = vor.u32 %v4455, %v4453
        %v4459 = vshll.u32 %v4358, 16
        %v4461 = vrot.slane %v4459, 1
        %v4462 = vsel %vm1344, %v4457, %v4461
        %v4463 = vshrl.u32 %v4358, 16
        %v4465 = vor.u32 %v4463, %v4461
        %v4467 = vshll.u32 %v4359, 16
        %v4469 = vrot.slane %v4467, 1
        %v4470 = vsel %vm1344, %v4465, %v4469
        %v4471 = vshrl.u32 %v4359, 16
        %v4473 = vor.u32 %v4471, %v4469
        %v4475 = vshll.u32 %v4360, 16
        %v4477 = vrot.slane %v4475, 1
        %v4478 = vsel %vm1344, %v4473, %v4477
        %v4479 = vshrl.u32 %v4360, 16
        %v4481 = vor.u32 %v4479, %v4477
        %v4483 = vshll.u32 %v4361, 16
        %v4485 = vrot.slane %v4483, 1
        %v4486 = vsel %vm1344, %v4481, %v4485
        %v4487 = vshrl.u32 %v4361, 16
        %v4489 = vor.u32 %v4487, %v4485
        %v4491 = vshll.u32 %v4362, 16
        %v4493 = vrot.slane %v4491, 1
        %v4494 = vsel %vm1344, %v4489, %v4493
        %v4527 = vunpack.c.l.b16 %v4264
        %v4528 = vunpack.c.l.b16 %v4265
        %v4529 = vunpack.c.l.b16 %v4266
        %v4530 = vunpack.c.l.b16 %v4267
        %v4531 = vunpack.c.l.b16 %v4268
        %v4532 = vunpack.c.l.b16 %v4269
        %v4533 = vunpack.c.l.b16 %v4270
        %v4534 = vunpack.c.l.b16 %v4271
        %v4535 = vunpack.c.l.b16 %v4272
        %v4536 = vunpack.c.l.b16 %v4273
        %v4537 = vunpack.c.l.b16 %v4274
        %v4538 = vunpack.c.l.b16 %v4275
        %v4539 = vunpack.c.l.b16 %v4276
        %v4540 = vunpack.c.l.b16 %v4277
        %v4541 = vunpack.c.l.b16 %v4278
        %v4542 = vunpack.c.l.b16 %v4279
        %v4543 = vpack.c.b16 %v4528, %v4527
        %v4544 = vpack.c.b16 %v4530, %v4529
        %v4545 = vpack.c.b16 %v4532, %v4531
        %v4546 = vpack.c.b16 %v4534, %v4533
        %v4547 = vpack.c.b16 %v4536, %v4535
        %v4548 = vpack.c.b16 %v4538, %v4537
        %v4549 = vpack.c.b16 %v4540, %v4539
        %v4550 = vpack.c.b16 %v4542, %v4541
        %4559 = vmatprep.subr.bf16.mxu0 0
        %4560 = vmatpush1.bf16.msra.mxu0 %v4543
        %4561 = vmatprep.subr.bf16.mxu0 0
        %4562 = vmatpush1.bf16.msra.mxu0 %v4544
        %4563 = vmatprep.subr.bf16.mxu0 0
        %4564 = vmatpush1.bf16.msra.mxu0 %v4545
        %4565 = vmatprep.subr.bf16.mxu0 0
        %4566 = vmatpush1.bf16.msra.mxu0 %v4546
        %4567 = vmatprep.subr.bf16.mxu0 0
        %4568 = vmatpush1.bf16.msra.mxu0 %v4547
        %4569 = vmatprep.subr.bf16.mxu0 0
        %4570 = vmatpush1.bf16.msra.mxu0 %v4548
        %4571 = vmatprep.subr.bf16.mxu0 0
        %4572 = vmatpush1.bf16.msra.mxu0 %v4549
        %4573 = vmatprep.subr.bf16.mxu0 0
        %4574 = vmatpush1.bf16.msra.mxu0 %v4550
        %4575 = vmatprep.subr.bf16.mxu0 0
        %4576 = vmatpush1.bf16.msra.mxu0 0
        %4577 = vmatprep.subr.bf16.mxu0 0
        %4578 = vmatpush1.bf16.msra.mxu0 0
        %4579 = vmatprep.subr.bf16.mxu0 0
        %4580 = vmatpush1.bf16.msra.mxu0 0
        %4581 = vmatprep.subr.bf16.mxu0 0
        %4582 = vmatpush1.bf16.msra.mxu0 0
        %4583 = vmatprep.subr.bf16.mxu0 0
        %4584 = vmatpush1.bf16.msra.mxu0 0
        %4585 = vmatprep.subr.bf16.mxu0 0
        %4586 = vmatpush1.bf16.msra.mxu0 0
        %4587 = vmatprep.subr.bf16.mxu0 0
        %4588 = vmatpush1.bf16.msra.mxu0 0
        %4589 = vmatprep.subr.bf16.mxu0 0
        %4590 = vmatpush1.bf16.msra.mxu0 0
        %4591 = vmatprep.mubr.bf16.mxu0 0
        %4592 = vmatmul.mubr.bf16.gmra.mrb[0].mxu0 %v4374
        %v4593 = vpop.f32.mrb[0].mxu0
        %v4594 = vadd.f32 0.0, %v4593
        %v4595 = vpop.f32.mrb[0].mxu0
        %v4596 = vpop.f32.mrb[0].mxu0
        %v4597 = vadd.f32 0.0, %v4596
        %v4598 = vpop.f32.mrb[0].mxu0
        %4599 = vmatprep.mubr.bf16.mxu0 0
        %4600 = vmatmul.mubr.bf16.gmra.mrb[0].mxu0 %v4382
        %v4601 = vpop.f32.mrb[0].mxu0
        %v4602 = vadd.f32 0.0, %v4601
        %v4603 = vpop.f32.mrb[0].mxu0
        %v4604 = vpop.f32.mrb[0].mxu0
        %v4605 = vadd.f32 0.0, %v4604
        %v4606 = vpop.f32.mrb[0].mxu0
        %4607 = vmatprep.mubr.bf16.mxu0 0
        %4608 = vmatmul.mubr.bf16.gmra.mrb[0].mxu0 %v4390
        %v4609 = vpop.f32.mrb[0].mxu0
        %v4610 = vadd.f32 0.0, %v4609
        %v4611 = vpop.f32.mrb[0].mxu0
        %v4612 = vpop.f32.mrb[0].mxu0
        %v4613 = vadd.f32 0.0, %v4612
        %v4614 = vpop.f32.mrb[0].mxu0
        %4615 = vmatprep.mubr.bf16.mxu0 0
        %4616 = vmatmul.mubr.bf16.gmra.mrb[0].mxu0 %v4398
        %v4617 = vpop.f32.mrb[0].mxu0
        %v4618 = vadd.f32 0.0, %v4617
        %v4619 = vpop.f32.mrb[0].mxu0
        %v4620 = vpop.f32.mrb[0].mxu0
        %v4621 = vadd.f32 0.0, %v4620
        %v4622 = vpop.f32.mrb[0].mxu0
        %4623 = vmatprep.mubr.bf16.mxu0 0
        %4624 = vmatmul.mubr.bf16.gmra.mrb[0].mxu0 %v4406
        %v4625 = vpop.f32.mrb[0].mxu0
        %v4626 = vadd.f32 0.0, %v4625
        %v4627 = vpop.f32.mrb[0].mxu0
        %v4628 = vpop.f32.mrb[0].mxu0
        %v4629 = vadd.f32 0.0, %v4628
        %v4630 = vpop.f32.mrb[0].mxu0
        %4631 = vmatprep.mubr.bf16.mxu0 0
        %4632 = vmatmul.mubr.bf16.gmra.mrb[0].mxu0 %v4414
        %v4633 = vpop.f32.mrb[0].mxu0
        %v4634 = vadd.f32 0.0, %v4633
        %v4635 = vpop.f32.mrb[0].mxu0
        %v4636 = vpop.f32.mrb[0].mxu0
        %v4637 = vadd.f32 0.0, %v4636
        %v4638 = vpop.f32.mrb[0].mxu0
        %4639 = vmatprep.mubr.bf16.mxu0 0
        %4640 = vmatmul.mubr.bf16.gmra.mrb[0].mxu0 %v4422
        %v4641 = vpop.f32.mrb[0].mxu0
        %v4642 = vadd.f32 0.0, %v4641
        %v4643 = vpop.f32.mrb[0].mxu0
        %v4644 = vpop.f32.mrb[0].mxu0
        %v4645 = vadd.f32 0.0, %v4644
        %v4646 = vpop.f32.mrb[0].mxu0
        %4647 = vmatprep.mubr.bf16.mxu0 0
        %4648 = vmatmul.mubr.bf16.gmra.mrb[0].mxu0 %v4430
        %v4649 = vpop.f32.mrb[0].mxu0
        %v4650 = vadd.f32 0.0, %v4649
        %v4651 = vpop.f32.mrb[0].mxu0
        %v4652 = vpop.f32.mrb[0].mxu0
        %v4653 = vadd.f32 0.0, %v4652
        %v4654 = vpop.f32.mrb[0].mxu0
        %4655 = vmatprep.mubr.bf16.mxu0 0
        %4656 = vmatmul.mubr.bf16.gmra.mrb[0].mxu0 %v4438
        %v4657 = vpop.f32.mrb[0].mxu0
        %v4658 = vadd.f32 0.0, %v4657
        %v4659 = vpop.f32.mrb[0].mxu0
        %v4660 = vpop.f32.mrb[0].mxu0
        %v4661 = vadd.f32 0.0, %v4660
        %v4662 = vpop.f32.mrb[0].mxu0
        %4663 = vmatprep.mubr.bf16.mxu0 0
        %4664 = vmatmul.mubr.bf16.gmra.mrb[0].mxu0 %v4446
        %v4665 = vpop.f32.mrb[0].mxu0
        %v4666 = vadd.f32 0.0, %v4665
        %v4667 = vpop.f32.mrb[0].mxu0
        %v4668 = vpop.f32.mrb[0].mxu0
        %v4669 = vadd.f32 0.0, %v4668
        %v4670 = vpop.f32.mrb[0].mxu0
        %4671 = vmatprep.mubr.bf16.mxu0 0
        %4672 = vmatmul.mubr.bf16.gmra.mrb[0].mxu0 %v4454
        %v4673 = vpop.f32.mrb[0].mxu0
        %v4674 = vadd.f32 0.0, %v4673
        %v4675 = vpop.f32.mrb[0].mxu0
        %v4676 = vpop.f32.mrb[0].mxu0
        %v4677 = vadd.f32 0.0, %v4676
        %v4678 = vpop.f32.mrb[0].mxu0
        %4679 = vmatprep.mubr.bf16.mxu0 0
        %4680 = vmatmul.mubr.bf16.gmra.mrb[0].mxu0 %v4462
        %v4681 = vpop.f32.mrb[0].mxu0
        %v4682 = vadd.f32 0.0, %v4681
        %v4683 = vpop.f32.mrb[0].mxu0
        %v4684 = vpop.f32.mrb[0].mxu0
        %v4685 = vadd.f32 0.0, %v4684
        %v4686 = vpop.f32.mrb[0].mxu0
        %4687 = vmatprep.mubr.bf16.mxu0 0
        %4688 = vmatmul.mubr.bf16.gmra.mrb[0].mxu0 %v4470
        %v4689 = vpop.f32.mrb[0].mxu0
        %v4690 = vadd.f32 0.0, %v4689
        %v4691 = vpop.f32.mrb[0].mxu0
        %v4692 = vpop.f32.mrb[0].mxu0
        %v4693 = vadd.f32 0.0, %v4692
        %v4694 = vpop.f32.mrb[0].mxu0
        %4695 = vmatprep.mubr.bf16.mxu0 0
        %4696 = vmatmul.mubr.bf16.gmra.mrb[0].mxu0 %v4478
        %v4697 = vpop.f32.mrb[0].mxu0
        %v4698 = vadd.f32 0.0, %v4697
        %v4699 = vpop.f32.mrb[0].mxu0
        %v4700 = vpop.f32.mrb[0].mxu0
        %v4701 = vadd.f32 0.0, %v4700
        %v4702 = vpop.f32.mrb[0].mxu0
        %4703 = vmatprep.mubr.bf16.mxu0 0
        %4704 = vmatmul.mubr.bf16.gmra.mrb[0].mxu0 %v4486
        %v4705 = vpop.f32.mrb[0].mxu0
        %v4706 = vadd.f32 0.0, %v4705
        %v4707 = vpop.f32.mrb[0].mxu0
        %v4708 = vpop.f32.mrb[0].mxu0
        %v4709 = vadd.f32 0.0, %v4708
        %v4710 = vpop.f32.mrb[0].mxu0
        %4711 = vmatprep.mubr.bf16.mxu0 0
        %4712 = vmatmul.mubr.bf16.gmra.mrb[0].mxu0 %v4494
        %v4713 = vpop.f32.mrb[0].mxu0
        %v4714 = vadd.f32 0.0, %v4713
        %v4715 = vpop.f32.mrb[0].mxu0
        %v4716 = vpop.f32.mrb[0].mxu0
        %v4717 = vadd.f32 0.0, %v4716
        %v4718 = vpop.f32.mrb[0].mxu0
        %4719 = vdwg.mxu0
        %v4720 = vadd.f32 %v4198, %v4594
        %v4721 = vadd.f32 %v4199, %v4597
        %v4722 = vadd.f32 %v4200, %v4602
        %v4723 = vadd.f32 %v4201, %v4605
        %v4724 = vadd.f32 %v4202, %v4610
        %v4725 = vadd.f32 %v4203, %v4613
        %v4726 = vadd.f32 %v4204, %v4618
        %v4727 = vadd.f32 %v4205, %v4621
        %v4728 = vadd.f32 %v4206, %v4626
        %v4729 = vadd.f32 %v4207, %v4629
        %v4730 = vadd.f32 %v4208, %v4634
        %v4731 = vadd.f32 %v4209, %v4637
        %v4732 = vadd.f32 %v4210, %v4642
        %v4733 = vadd.f32 %v4211, %v4645
        %v4734 = vadd.f32 %v4212, %v4650
        %v4735 = vadd.f32 %v4213, %v4653
        %v4736 = vadd.f32 %v4214, %v4658
        %v4737 = vadd.f32 %v4215, %v4661
        %v4738 = vadd.f32 %v4216, %v4666
        %v4739 = vadd.f32 %v4217, %v4669
        %v4740 = vadd.f32 %v4218, %v4674
        %v4741 = vadd.f32 %v4219, %v4677
        %v4742 = vadd.f32 %v4220, %v4682
        %v4743 = vadd.f32 %v4221, %v4685
        %v4744 = vadd.f32 %v4222, %v4690
        %v4745 = vadd.f32 %v4223, %v4693
        %v4746 = vadd.f32 %v4224, %v4698
        %v4747 = vadd.f32 %v4225, %v4701
        %v4748 = vadd.f32 %v4226, %v4706
        %v4749 = vadd.f32 %v4227, %v4709
        %v4750 = vadd.f32 %v4228, %v4714
        %v4751 = vadd.f32 %v4229, %v4717
        %v4752 = vld [vmem:[#allocation2 + $0x10] sm:$0xe]
        %v4753 = vsel %vm2020, %v4752, 0
        %v4754 = vsel %vm2021, %v4231, 0
        %v4755 = vsel %vm2022, %v4232, 0
        %v4756 = vsel %vm2021, %v4233, 0
        %v4757 = vsel %vm2022, %v4234, 0
        %v4758 = vsel %vm2021, %v4235, 0
        %v4759 = vsel %vm2022, %v4236, 0
        %v4760 = vsel %vm2021, %v4237, 0
        %v4761 = vsel %vm2022, %v4238, 0
        %v4762 = vsel %vm2021, %v4239, 0
        %v4763 = vsel %vm2022, %v4240, 0
        %v4764 = vsel %vm2021, %v4241, 0
        %v4765 = vsel %vm2022, %v4242, 0
        %v4766 = vsel %vm2021, %v4243, 0
        %v4767 = vsel %vm2022, %v4244, 0
        %v4768 = vsel %vm2021, %v4245, 0
        %v4769 = vsel %vm2022, %v4246, 0
        %v4770 = vsel %vm2021, %v4247, 0
        %v4771 = vsel %vm2022, %v4248, 0
        %v4772 = vsel %vm2021, %v4249, 0
        %v4773 = vsel %vm2022, %v4250, 0
        %v4774 = vsel %vm2021, %v4251, 0
        %v4775 = vsel %vm2022, %v4252, 0
        %v4776 = vsel %vm2021, %v4253, 0
        %v4777 = vsel %vm2022, %v4254, 0
        %v4778 = vsel %vm2021, %v4255, 0
        %v4779 = vsel %vm2022, %v4256, 0
        %v4780 = vsel %vm2021, %v4257, 0
        %v4781 = vsel %vm2022, %v4258, 0
        %v4782 = vsel %vm2021, %v4259, 0
        %v4783 = vsel %vm2022, %v4260, 0
        %v4784 = vsel %vm2021, %v4261, 0
        %v4785 = vsel %vm2023, %v4262, 0
        %s4786 = scalar_lea.vmem [#allocation8], 512
        %v4787 = vld [vmem:[%s4786] sm:$0xf]
        %v4788 = vld [vmem:[%s4786 + $0x4] sm:$0xf]
        %v4789 = vld [vmem:[%s4786 + $0x8] sm:$0xf]
        %v4790 = vld [vmem:[%s4786 + $0xc] sm:$0xf]
        %v4791 = vld [vmem:[%s4786 + $0x10] sm:$0xf]
        %v4792 = vld [vmem:[%s4786 + $0x14] sm:$0xf]
        %v4793 = vld [vmem:[%s4786 + $0x18] sm:$0xf]
        %v4794 = vld [vmem:[%s4786 + $0x1c] sm:$0xf]
        %v4795 = vld [vmem:[%s4786 + $0x20] sm:$0xf]
        %v4796 = vld [vmem:[%s4786 + $0x24] sm:$0xf]
        %v4797 = vld [vmem:[%s4786 + $0x28] sm:$0xf]
        %v4798 = vld [vmem:[%s4786 + $0x2c] sm:$0xf]
        %v4799 = vld [vmem:[%s4786 + $0x30] sm:$0xf]
        %v4800 = vld [vmem:[%s4786 + $0x34] sm:$0xf]
        %v4801 = vld [vmem:[%s4786 + $0x38] sm:$0xf]
        %v4802 = vld [vmem:[%s4786 + $0x3c] sm:$0xf]
        %v4836 = vunpack.c.l.b16 %v4753
        %v4837 = vunpack.c.l.b16 %v4754
        %v4838 = vunpack.c.l.b16 %v4755
        %v4839 = vunpack.c.l.b16 %v4756
        %v4840 = vunpack.c.l.b16 %v4757
        %v4841 = vunpack.c.l.b16 %v4758
        %v4842 = vunpack.c.l.b16 %v4759
        %v4843 = vunpack.c.l.b16 %v4760
        %v4844 = vunpack.c.l.b16 %v4761
        %v4845 = vunpack.c.l.b16 %v4762
        %v4846 = vunpack.c.l.b16 %v4763
        %v4847 = vunpack.c.l.b16 %v4764
        %v4848 = vunpack.c.l.b16 %v4765
        %v4849 = vunpack.c.l.b16 %v4766
        %v4850 = vunpack.c.l.b16 %v4767
        %v4851 = vunpack.c.l.b16 %v4768
        %v4852 = vunpack.c.l.b16 %v4769
        %v4853 = vunpack.c.l.b16 %v4770
        %v4854 = vunpack.c.l.b16 %v4771
        %v4855 = vunpack.c.l.b16 %v4772
        %v4856 = vunpack.c.l.b16 %v4773
        %v4857 = vunpack.c.l.b16 %v4774
        %v4858 = vunpack.c.l.b16 %v4775
        %v4859 = vunpack.c.l.b16 %v4776
        %v4860 = vunpack.c.l.b16 %v4777
        %v4861 = vunpack.c.l.b16 %v4778
        %v4862 = vunpack.c.l.b16 %v4779
        %v4863 = vunpack.c.l.b16 %v4780
        %v4864 = vunpack.c.l.b16 %v4781
        %v4865 = vunpack.c.l.b16 %v4782
        %v4866 = vunpack.c.l.b16 %v4783
        %v4867 = vunpack.c.l.b16 %v4784
        %v4868 = vunpack.c.l.b16 %v4785
        %v4869 = vpack.c.b16 %v4837, %v4836
        %v4870 = vpack.c.b16 %v4839, %v4838
        %v4871 = vpack.c.b16 %v4841, %v4840
        %v4872 = vpack.c.b16 %v4843, %v4842
        %v4873 = vpack.c.b16 %v4845, %v4844
        %v4874 = vpack.c.b16 %v4847, %v4846
        %v4875 = vpack.c.b16 %v4849, %v4848
        %v4876 = vpack.c.b16 %v4851, %v4850
        %v4877 = vpack.c.b16 %v4853, %v4852
        %v4878 = vpack.c.b16 %v4855, %v4854
        %v4879 = vpack.c.b16 %v4857, %v4856
        %v4880 = vpack.c.b16 %v4859, %v4858
        %v4881 = vpack.c.b16 %v4861, %v4860
        %v4882 = vpack.c.b16 %v4863, %v4862
        %v4883 = vpack.c.b16 %v4865, %v4864
        %v4884 = vpack.c.b16 %v4867, %v4866
        %v4885 = vpack.c.b16 %v4868, %v4868
        %v4886 = vrot.slane %v4869, 1
        %v4887 = vrot.slane %v4870, 1
        %v4888 = vsel %vm2157, %v4886, %v4887
        %v4889 = vrot.slane %v4871, 1
        %v4890 = vsel %vm2157, %v4887, %v4889
        %v4891 = vrot.slane %v4872, 1
        %v4892 = vsel %vm2157, %v4889, %v4891
        %v4893 = vrot.slane %v4873, 1
        %v4894 = vsel %vm2157, %v4891, %v4893
        %v4895 = vrot.slane %v4874, 1
        %v4896 = vsel %vm2157, %v4893, %v4895
        %v4897 = vrot.slane %v4875, 1
        %v4898 = vsel %vm2157, %v4895, %v4897
        %v4899 = vrot.slane %v4876, 1
        %v4900 = vsel %vm2157, %v4897, %v4899
        %v4901 = vrot.slane %v4877, 1
        %v4902 = vsel %vm2157, %v4899, %v4901
        %v4903 = vrot.slane %v4878, 1
        %v4904 = vsel %vm2157, %v4901, %v4903
        %v4905 = vrot.slane %v4879, 1
        %v4906 = vsel %vm2157, %v4903, %v4905
        %v4907 = vrot.slane %v4880, 1
        %v4908 = vsel %vm2157, %v4905, %v4907
        %v4909 = vrot.slane %v4881, 1
        %v4910 = vsel %vm2157, %v4907, %v4909
        %v4911 = vrot.slane %v4882, 1
        %v4912 = vsel %vm2157, %v4909, %v4911
        %v4913 = vrot.slane %v4883, 1
        %v4914 = vsel %vm2157, %v4911, %v4913
        %v4915 = vrot.slane %v4884, 1
        %v4916 = vsel %vm2157, %v4913, %v4915
        %v4917 = vrot.slane %v4885, 1
        %v4918 = vsel %vm2157, %v4915, %v4917
        %v4951 = vunpack.c.l.b16 %v4787
        %v4952 = vunpack.c.l.b16 %v4788
        %v4953 = vunpack.c.l.b16 %v4789
        %v4954 = vunpack.c.l.b16 %v4790
        %v4955 = vunpack.c.l.b16 %v4791
        %v4956 = vunpack.c.l.b16 %v4792
        %v4957 = vunpack.c.l.b16 %v4793
        %v4958 = vunpack.c.l.b16 %v4794
        %v4959 = vunpack.c.l.b16 %v4795
        %v4960 = vunpack.c.l.b16 %v4796
        %v4961 = vunpack.c.l.b16 %v4797
        %v4962 = vunpack.c.l.b16 %v4798
        %v4963 = vunpack.c.l.b16 %v4799
        %v4964 = vunpack.c.l.b16 %v4800
        %v4965 = vunpack.c.l.b16 %v4801
        %v4966 = vunpack.c.l.b16 %v4802
        %v4967 = vpack.c.b16 %v4952, %v4951
        %v4968 = vpack.c.b16 %v4954, %v4953
        %v4969 = vpack.c.b16 %v4956, %v4955
        %v4970 = vpack.c.b16 %v4958, %v4957
        %v4971 = vpack.c.b16 %v4960, %v4959
        %v4972 = vpack.c.b16 %v4962, %v4961
        %v4973 = vpack.c.b16 %v4964, %v4963
        %v4974 = vpack.c.b16 %v4966, %v4965
        %4983 = vmatprep.subr.bf16.mxu0 0
        %4984 = vmatpush1.bf16.msra.mxu0 %v4967
        %4985 = vmatprep.subr.bf16.mxu0 0
        %4986 = vmatpush1.bf16.msra.mxu0 %v4968
        %4987 = vmatprep.subr.bf16.mxu0 0
        %4988 = vmatpush1.bf16.msra.mxu0 %v4969
        %4989 = vmatprep.subr.bf16.mxu0 0
        %4990 = vmatpush1.bf16.msra.mxu0 %v4970
        %4991 = vmatprep.subr.bf16.mxu0 0
        %4992 = vmatpush1.bf16.msra.mxu0 %v4971
        %4993 = vmatprep.subr.bf16.mxu0 0
        %4994 = vmatpush1.bf16.msra.mxu0 %v4972
        %4995 = vmatprep.subr.bf16.mxu0 0
        %4996 = vmatpush1.bf16.msra.mxu0 %v4973
        %4997 = vmatprep.subr.bf16.mxu0 0
        %4998 = vmatpush1.bf16.msra.mxu0 %v4974
        %4999 = vmatprep.subr.bf16.mxu0 0
        %5000 = vmatpush1.bf16.msra.mxu0 0
        %5001 = vmatprep.subr.bf16.mxu0 0
        %5002 = vmatpush1.bf16.msra.mxu0 0
        %5003 = vmatprep.subr.bf16.mxu0 0
        %5004 = vmatpush1.bf16.msra.mxu0 0
        %5005 = vmatprep.subr.bf16.mxu0 0
        %5006 = vmatpush1.bf16.msra.mxu0 0
        %5007 = vmatprep.subr.bf16.mxu0 0
        %5008 = vmatpush1.bf16.msra.mxu0 0
        %5009 = vmatprep.subr.bf16.mxu0 0
        %5010 = vmatpush1.bf16.msra.mxu0 0
        %5011 = vmatprep.subr.bf16.mxu0 0
        %5012 = vmatpush1.bf16.msra.mxu0 0
        %5013 = vmatprep.subr.bf16.mxu0 0
        %5014 = vmatpush1.bf16.msra.mxu0 0
        %5015 = vmatprep.mubr.bf16.mxu0 0
        %5016 = vmatmul.mubr.bf16.gmra.mrb[0].mxu0 %v4888
        %v5017 = vpop.f32.mrb[0].mxu0
        %v5018 = vadd.f32 0.0, %v5017
        %v5019 = vpop.f32.mrb[0].mxu0
        %v5020 = vpop.f32.mrb[0].mxu0
        %v5021 = vadd.f32 0.0, %v5020
        %v5022 = vpop.f32.mrb[0].mxu0
        %5023 = vmatprep.mubr.bf16.mxu0 0
        %5024 = vmatmul.mubr.bf16.gmra.mrb[0].mxu0 %v4890
        %v5025 = vpop.f32.mrb[0].mxu0
        %v5026 = vadd.f32 0.0, %v5025
        %v5027 = vpop.f32.mrb[0].mxu0
        %v5028 = vpop.f32.mrb[0].mxu0
        %v5029 = vadd.f32 0.0, %v5028
        %v5030 = vpop.f32.mrb[0].mxu0
        %5031 = vmatprep.mubr.bf16.mxu0 0
        %5032 = vmatmul.mubr.bf16.gmra.mrb[0].mxu0 %v4892
        %v5033 = vpop.f32.mrb[0].mxu0
        %v5034 = vadd.f32 0.0, %v5033
        %v5035 = vpop.f32.mrb[0].mxu0
        %v5036 = vpop.f32.mrb[0].mxu0
        %v5037 = vadd.f32 0.0, %v5036
        %v5038 = vpop.f32.mrb[0].mxu0
        %5039 = vmatprep.mubr.bf16.mxu0 0
        %5040 = vmatmul.mubr.bf16.gmra.mrb[0].mxu0 %v4894
        %v5041 = vpop.f32.mrb[0].mxu0
        %v5042 = vadd.f32 0.0, %v5041
        %v5043 = vpop.f32.mrb[0].mxu0
        %v5044 = vpop.f32.mrb[0].mxu0
        %v5045 = vadd.f32 0.0, %v5044
        %v5046 = vpop.f32.mrb[0].mxu0
        %5047 = vmatprep.mubr.bf16.mxu0 0
        %5048 = vmatmul.mubr.bf16.gmra.mrb[0].mxu0 %v4896
        %v5049 = vpop.f32.mrb[0].mxu0
        %v5050 = vadd.f32 0.0, %v5049
        %v5051 = vpop.f32.mrb[0].mxu0
        %v5052 = vpop.f32.mrb[0].mxu0
        %v5053 = vadd.f32 0.0, %v5052
        %v5054 = vpop.f32.mrb[0].mxu0
        %5055 = vmatprep.mubr.bf16.mxu0 0
        %5056 = vmatmul.mubr.bf16.gmra.mrb[0].mxu0 %v4898
        %v5057 = vpop.f32.mrb[0].mxu0
        %v5058 = vadd.f32 0.0, %v5057
        %v5059 = vpop.f32.mrb[0].mxu0
        %v5060 = vpop.f32.mrb[0].mxu0
        %v5061 = vadd.f32 0.0, %v5060
        %v5062 = vpop.f32.mrb[0].mxu0
        %5063 = vmatprep.mubr.bf16.mxu0 0
        %5064 = vmatmul.mubr.bf16.gmra.mrb[0].mxu0 %v4900
        %v5065 = vpop.f32.mrb[0].mxu0
        %v5066 = vadd.f32 0.0, %v5065
        %v5067 = vpop.f32.mrb[0].mxu0
        %v5068 = vpop.f32.mrb[0].mxu0
        %v5069 = vadd.f32 0.0, %v5068
        %v5070 = vpop.f32.mrb[0].mxu0
        %5071 = vmatprep.mubr.bf16.mxu0 0
        %5072 = vmatmul.mubr.bf16.gmra.mrb[0].mxu0 %v4902
        %v5073 = vpop.f32.mrb[0].mxu0
        %v5074 = vadd.f32 0.0, %v5073
        %v5075 = vpop.f32.mrb[0].mxu0
        %v5076 = vpop.f32.mrb[0].mxu0
        %v5077 = vadd.f32 0.0, %v5076
        %v5078 = vpop.f32.mrb[0].mxu0
        %5079 = vmatprep.mubr.bf16.mxu0 0
        %5080 = vmatmul.mubr.bf16.gmra.mrb[0].mxu0 %v4904
        %v5081 = vpop.f32.mrb[0].mxu0
        %v5082 = vadd.f32 0.0, %v5081
        %v5083 = vpop.f32.mrb[0].mxu0
        %v5084 = vpop.f32.mrb[0].mxu0
        %v5085 = vadd.f32 0.0, %v5084
        %v5086 = vpop.f32.mrb[0].mxu0
        %5087 = vmatprep.mubr.bf16.mxu0 0
        %5088 = vmatmul.mubr.bf16.gmra.mrb[0].mxu0 %v4906
        %v5089 = vpop.f32.mrb[0].mxu0
        %v5090 = vadd.f32 0.0, %v5089
        %v5091 = vpop.f32.mrb[0].mxu0
        %v5092 = vpop.f32.mrb[0].mxu0
        %v5093 = vadd.f32 0.0, %v5092
        %v5094 = vpop.f32.mrb[0].mxu0
        %5095 = vmatprep.mubr.bf16.mxu0 0
        %5096 = vmatmul.mubr.bf16.gmra.mrb[0].mxu0 %v4908
        %v5097 = vpop.f32.mrb[0].mxu0
        %v5098 = vadd.f32 0.0, %v5097
        %v5099 = vpop.f32.mrb[0].mxu0
        %v5100 = vpop.f32.mrb[0].mxu0
        %v5101 = vadd.f32 0.0, %v5100
        %v5102 = vpop.f32.mrb[0].mxu0
        %5103 = vmatprep.mubr.bf16.mxu0 0
        %5104 = vmatmul.mubr.bf16.gmra.mrb[0].mxu0 %v4910
        %v5105 = vpop.f32.mrb[0].mxu0
        %v5106 = vadd.f32 0.0, %v5105
        %v5107 = vpop.f32.mrb[0].mxu0
        %v5108 = vpop.f32.mrb[0].mxu0
        %v5109 = vadd.f32 0.0, %v5108
        %v5110 = vpop.f32.mrb[0].mxu0
        %5111 = vmatprep.mubr.bf16.mxu0 0
        %5112 = vmatmul.mubr.bf16.gmra.mrb[0].mxu0 %v4912
        %v5113 = vpop.f32.mrb[0].mxu0
        %v5114 = vadd.f32 0.0, %v5113
        %v5115 = vpop.f32.mrb[0].mxu0
        %v5116 = vpop.f32.mrb[0].mxu0
        %v5117 = vadd.f32 0.0, %v5116
        %v5118 = vpop.f32.mrb[0].mxu0
        %5119 = vmatprep.mubr.bf16.mxu0 0
        %5120 = vmatmul.mubr.bf16.gmra.mrb[0].mxu0 %v4914
        %v5121 = vpop.f32.mrb[0].mxu0
        %v5122 = vadd.f32 0.0, %v5121
        %v5123 = vpop.f32.mrb[0].mxu0
        %v5124 = vpop.f32.mrb[0].mxu0
        %v5125 = vadd.f32 0.0, %v5124
        %v5126 = vpop.f32.mrb[0].mxu0
        %5127 = vmatprep.mubr.bf16.mxu0 0
        %5128 = vmatmul.mubr.bf16.gmra.mrb[0].mxu0 %v4916
        %v5129 = vpop.f32.mrb[0].mxu0
        %v5130 = vadd.f32 0.0, %v5129
        %v5131 = vpop.f32.mrb[0].mxu0
        %v5132 = vpop.f32.mrb[0].mxu0
        %v5133 = vadd.f32 0.0, %v5132
        %v5134 = vpop.f32.mrb[0].mxu0
        %5135 = vmatprep.mubr.bf16.mxu0 0
        %5136 = vmatmul.mubr.bf16.gmra.mrb[0].mxu0 %v4918
        %v5137 = vpop.f32.mrb[0].mxu0
        %v5138 = vadd.f32 0.0, %v5137
        %v5139 = vpop.f32.mrb[0].mxu0
        %v5140 = vpop.f32.mrb[0].mxu0
        %v5141 = vadd.f32 0.0, %v5140
        %v5142 = vpop.f32.mrb[0].mxu0
        %5143 = vdwg.mxu0
        %v5144 = vadd.f32 %v4720, %v5018
        %v5145 = vadd.f32 %v4721, %v5021
        %v5146 = vadd.f32 %v4722, %v5026
        %v5147 = vadd.f32 %v4723, %v5029
        %v5148 = vadd.f32 %v4724, %v5034
        %v5149 = vadd.f32 %v4725, %v5037
        %v5150 = vadd.f32 %v4726, %v5042
        %v5151 = vadd.f32 %v4727, %v5045
        %v5152 = vadd.f32 %v4728, %v5050
        %v5153 = vadd.f32 %v4729, %v5053
        %v5154 = vadd.f32 %v4730, %v5058
        %v5155 = vadd.f32 %v4731, %v5061
        %v5156 = vadd.f32 %v4732, %v5066
        %v5157 = vadd.f32 %v4733, %v5069
        %v5158 = vadd.f32 %v4734, %v5074
        %v5159 = vadd.f32 %v4735, %v5077
        %v5160 = vadd.f32 %v4736, %v5082
        %v5161 = vadd.f32 %v4737, %v5085
        %v5162 = vadd.f32 %v4738, %v5090
        %v5163 = vadd.f32 %v4739, %v5093
        %v5164 = vadd.f32 %v4740, %v5098
        %v5165 = vadd.f32 %v4741, %v5101
        %v5166 = vadd.f32 %v4742, %v5106
        %v5167 = vadd.f32 %v4743, %v5109
        %v5168 = vadd.f32 %v4744, %v5114
        %v5169 = vadd.f32 %v4745, %v5117
        %v5170 = vadd.f32 %v4746, %v5122
        %v5171 = vadd.f32 %v4747, %v5125
        %v5172 = vadd.f32 %v4748, %v5130
        %v5173 = vadd.f32 %v4749, %v5133
        %v5174 = vadd.f32 %v4750, %v5138
        %v5175 = vadd.f32 %v4751, %v5141
        %v5176 = vld [vmem:[%s4] sm:$0x1]
        %v5178 = vlaneseq
        %v5179 = vshrl.u32 %v5178, 7
        %v5180 = vsub.s32 0, %v5179
        %v5181 = vrot.slane %v5176, %v5180
        %v5183 = vadd.f32 %v5144, %v5181
        %v5184 = vadd.f32 %v5145, %v5181
        %v5185 = vadd.f32 %v5146, %v5181
        %v5186 = vadd.f32 %v5147, %v5181
        %v5187 = vadd.f32 %v5148, %v5181
        %v5188 = vadd.f32 %v5149, %v5181
        %v5189 = vadd.f32 %v5150, %v5181
        %v5190 = vadd.f32 %v5151, %v5181
        %v5191 = vadd.f32 %v5152, %v5181
        %v5192 = vadd.f32 %v5153, %v5181
        %v5193 = vadd.f32 %v5154, %v5181
        %v5194 = vadd.f32 %v5155, %v5181
        %v5195 = vadd.f32 %v5156, %v5181
        %v5196 = vadd.f32 %v5157, %v5181
        %v5197 = vadd.f32 %v5158, %v5181
        %v5198 = vadd.f32 %v5159, %v5181
        %v5199 = vadd.f32 %v5160, %v5181
        %v5200 = vadd.f32 %v5161, %v5181
        %v5201 = vadd.f32 %v5162, %v5181
        %v5202 = vadd.f32 %v5163, %v5181
        %v5203 = vadd.f32 %v5164, %v5181
        %v5204 = vadd.f32 %v5165, %v5181
        %v5205 = vadd.f32 %v5166, %v5181
        %v5206 = vadd.f32 %v5167, %v5181
        %v5207 = vadd.f32 %v5168, %v5181
        %v5208 = vadd.f32 %v5169, %v5181
        %v5209 = vadd.f32 %v5170, %v5181
        %v5210 = vadd.f32 %v5171, %v5181
        %v5211 = vadd.f32 %v5172, %v5181
        %v5212 = vadd.f32 %v5173, %v5181
        %v5213 = vadd.f32 %v5174, %v5181
        %v5214 = vadd.f32 %v5175, %v5181
        %v5215 = vmax.f32 %v5183, 0.0
        %v5216 = vmax.f32 %v5184, 0.0
        %v5217 = vmax.f32 %v5185, 0.0
        %v5218 = vmax.f32 %v5186, 0.0
        %v5219 = vmax.f32 %v5187, 0.0
        %v5220 = vmax.f32 %v5188, 0.0
        %v5221 = vmax.f32 %v5189, 0.0
        %v5222 = vmax.f32 %v5190, 0.0
        %v5223 = vmax.f32 %v5191, 0.0
        %v5224 = vmax.f32 %v5192, 0.0
        %v5225 = vmax.f32 %v5193, 0.0
        %v5226 = vmax.f32 %v5194, 0.0
        %v5227 = vmax.f32 %v5195, 0.0
        %v5228 = vmax.f32 %v5196, 0.0
        %v5229 = vmax.f32 %v5197, 0.0
        %v5230 = vmax.f32 %v5198, 0.0
        %v5231 = vmax.f32 %v5199, 0.0
        %v5232 = vmax.f32 %v5200, 0.0
        %v5233 = vmax.f32 %v5201, 0.0
        %v5234 = vmax.f32 %v5202, 0.0
        %v5235 = vmax.f32 %v5203, 0.0
        %v5236 = vmax.f32 %v5204, 0.0
        %v5237 = vmax.f32 %v5205, 0.0
        %v5238 = vmax.f32 %v5206, 0.0
        %v5239 = vmax.f32 %v5207, 0.0
        %v5240 = vmax.f32 %v5208, 0.0
        %v5241 = vmax.f32 %v5209, 0.0
        %v5242 = vmax.f32 %v5210, 0.0
        %v5243 = vmax.f32 %v5211, 0.0
        %v5244 = vmax.f32 %v5212, 0.0
        %v5245 = vmax.f32 %v5213, 0.0
        %v5246 = vmax.f32 %v5214, 0.0
        %v5247 = vpack.c.bf16 %v5216, %v5215
        %v5248 = vpack.c.bf16 %v5218, %v5217
        %v5249 = vpack.c.bf16 %v5220, %v5219
        %v5250 = vpack.c.bf16 %v5222, %v5221
        %v5251 = vpack.c.bf16 %v5224, %v5223
        %v5252 = vpack.c.bf16 %v5226, %v5225
        %v5253 = vpack.c.bf16 %v5228, %v5227
        %v5254 = vpack.c.bf16 %v5230, %v5229
        %v5255 = vpack.c.bf16 %v5232, %v5231
        %v5256 = vpack.c.bf16 %v5234, %v5233
        %v5257 = vpack.c.bf16 %v5236, %v5235
        %v5258 = vpack.c.bf16 %v5238, %v5237
        %v5259 = vpack.c.bf16 %v5240, %v5239
        %v5260 = vpack.c.bf16 %v5242, %v5241
        %v5261 = vpack.c.bf16 %v5244, %v5243
        %v5262 = vpack.c.bf16 %v5246, %v5245
        %v5263 = vld [vmem:[#allocation9] sm:$0xf]
        %v5264 = vld [vmem:[#allocation9 + $0x4] sm:$0xf]
        %v5265 = vld [vmem:[#allocation9 + $0x8] sm:$0xf]
        %v5266 = vld [vmem:[#allocation9 + $0xc] sm:$0xf]
        %v5267 = vld [vmem:[#allocation9 + $0x10] sm:$0xf]
        %v5268 = vld [vmem:[#allocation9 + $0x14] sm:$0xf]
        %v5269 = vld [vmem:[#allocation9 + $0x18] sm:$0xf]
        %v5270 = vld [vmem:[#allocation9 + $0x1c] sm:$0xf]
        %v5271 = vld [vmem:[#allocation9 + $0x20] sm:$0xf]
        %v5272 = vld [vmem:[#allocation9 + $0x24] sm:$0xf]
        %v5273 = vld [vmem:[#allocation9 + $0x28] sm:$0xf]
        %v5274 = vld [vmem:[#allocation9 + $0x2c] sm:$0xf]
        %v5275 = vld [vmem:[#allocation9 + $0x30] sm:$0xf]
        %v5276 = vld [vmem:[#allocation9 + $0x34] sm:$0xf]
        %v5277 = vld [vmem:[#allocation9 + $0x38] sm:$0xf]
        %v5278 = vld [vmem:[#allocation9 + $0x3c] sm:$0xf]
        %v5279 = vld [vmem:[%s6] sm:$0x1]
        %v5281 = vlaneseq
        %v5282 = vshrl.u32 %v5281, 7
        %v5283 = vsub.s32 0, %v5282
        %v5284 = vrot.slane %v5279, %v5283
        %v5302 = vunpack.c.l.b16 %v5263
        %v5303 = vunpack.c.l.b16 %v5264
        %v5304 = vunpack.c.l.b16 %v5265
        %v5305 = vunpack.c.l.b16 %v5266
        %v5306 = vunpack.c.l.b16 %v5267
        %v5307 = vunpack.c.l.b16 %v5268
        %v5308 = vunpack.c.l.b16 %v5269
        %v5309 = vunpack.c.l.b16 %v5270
        %v5310 = vunpack.c.l.b16 %v5271
        %v5311 = vunpack.c.l.b16 %v5272
        %v5312 = vunpack.c.l.b16 %v5273
        %v5313 = vunpack.c.l.b16 %v5274
        %v5314 = vunpack.c.l.b16 %v5275
        %v5315 = vunpack.c.l.b16 %v5276
        %v5316 = vunpack.c.l.b16 %v5277
        %v5317 = vunpack.c.l.b16 %v5278
        %v5318 = vpack.c.b16 %v5303, %v5302
        %v5319 = vpack.c.b16 %v5305, %v5304
        %v5320 = vpack.c.b16 %v5307, %v5306
        %v5321 = vpack.c.b16 %v5309, %v5308
        %v5322 = vpack.c.b16 %v5311, %v5310
        %v5323 = vpack.c.b16 %v5313, %v5312
        %v5324 = vpack.c.b16 %v5315, %v5314
        %v5325 = vpack.c.b16 %v5317, %v5316
        %5334 = vmatprep.subr.bf16.mxu0 0
        %5335 = vmatpush1.bf16.msra.mxu0 %v5318
        %5336 = vmatprep.subr.bf16.mxu0 0
        %5337 = vmatpush1.bf16.msra.mxu0 %v5319
        %5338 = vmatprep.subr.bf16.mxu0 0
        %5339 = vmatpush1.bf16.msra.mxu0 %v5320
        %5340 = vmatprep.subr.bf16.mxu0 0
        %5341 = vmatpush1.bf16.msra.mxu0 %v5321
        %5342 = vmatprep.subr.bf16.mxu0 0
        %5343 = vmatpush1.bf16.msra.mxu0 %v5322
        %5344 = vmatprep.subr.bf16.mxu0 0
        %5345 = vmatpush1.bf16.msra.mxu0 %v5323
        %5346 = vmatprep.subr.bf16.mxu0 0
        %5347 = vmatpush1.bf16.msra.mxu0 %v5324
        %5348 = vmatprep.subr.bf16.mxu0 0
        %5349 = vmatpush1.bf16.msra.mxu0 %v5325
        %5350 = vmatprep.subr.bf16.mxu0 0
        %5351 = vmatpush1.bf16.msra.mxu0 0
        %5352 = vmatprep.subr.bf16.mxu0 0
        %5353 = vmatpush1.bf16.msra.mxu0 0
        %5354 = vmatprep.subr.bf16.mxu0 0
        %5355 = vmatpush1.bf16.msra.mxu0 0
        %5356 = vmatprep.subr.bf16.mxu0 0
        %5357 = vmatpush1.bf16.msra.mxu0 0
        %5358 = vmatprep.subr.bf16.mxu0 0
        %5359 = vmatpush1.bf16.msra.mxu0 0
        %5360 = vmatprep.subr.bf16.mxu0 0
        %5361 = vmatpush1.bf16.msra.mxu0 0
        %5362 = vmatprep.subr.bf16.mxu0 0
        %5363 = vmatpush1.bf16.msra.mxu0 0
        %5364 = vmatprep.subr.bf16.mxu0 0
        %5365 = vmatpush1.bf16.msra.mxu0 0
        %5366 = vmatprep.mubr.bf16.mxu0 0
        %5367 = vmatmul.mubr.bf16.gmra.mrb[0].mxu0 %v5247
        %v5368 = vpop.f32.mrb[0].mxu0
        %v5369 = vadd.f32 %v5284, %v5368
        %v5370 = vpop.f32.mrb[0].mxu0
        %v5371 = vpop.f32.mrb[0].mxu0
        %v5372 = vadd.f32 %v5284, %v5371
        %v5373 = vpop.f32.mrb[0].mxu0
        %5374 = vmatprep.mubr.bf16.mxu0 0
        %5375 = vmatmul.mubr.bf16.gmra.mrb[0].mxu0 %v5248
        %v5376 = vpop.f32.mrb[0].mxu0
        %v5377 = vadd.f32 %v5284, %v5376
        %v5378 = vpop.f32.mrb[0].mxu0
        %v5379 = vpop.f32.mrb[0].mxu0
        %v5380 = vadd.f32 %v5284, %v5379
        %v5381 = vpop.f32.mrb[0].mxu0
        %5382 = vmatprep.mubr.bf16.mxu0 0
        %5383 = vmatmul.mubr.bf16.gmra.mrb[0].mxu0 %v5249
        %v5384 = vpop.f32.mrb[0].mxu0
        %v5385 = vadd.f32 %v5284, %v5384
        %v5386 = vpop.f32.mrb[0].mxu0
        %v5387 = vpop.f32.mrb[0].mxu0
        %v5388 = vadd.f32 %v5284, %v5387
        %v5389 = vpop.f32.mrb[0].mxu0
        %5390 = vmatprep.mubr.bf16.mxu0 0
        %5391 = vmatmul.mubr.bf16.gmra.mrb[0].mxu0 %v5250
        %v5392 = vpop.f32.mrb[0].mxu0
        %v5393 = vadd.f32 %v5284, %v5392
        %v5394 = vpop.f32.mrb[0].mxu0
        %v5395 = vpop.f32.mrb[0].mxu0
        %v5396 = vadd.f32 %v5284, %v5395
        %v5397 = vpop.f32.mrb[0].mxu0
        %5398 = vmatprep.mubr.bf16.mxu0 0
        %5399 = vmatmul.mubr.bf16.gmra.mrb[0].mxu0 %v5251
        %v5400 = vpop.f32.mrb[0].mxu0
        %v5401 = vadd.f32 %v5284, %v5400
        %v5402 = vpop.f32.mrb[0].mxu0
        %v5403 = vpop.f32.mrb[0].mxu0
        %v5404 = vadd.f32 %v5284, %v5403
        %v5405 = vpop.f32.mrb[0].mxu0
        %5406 = vmatprep.mubr.bf16.mxu0 0
        %5407 = vmatmul.mubr.bf16.gmra.mrb[0].mxu0 %v5252
        %v5408 = vpop.f32.mrb[0].mxu0
        %v5409 = vadd.f32 %v5284, %v5408
        %v5410 = vpop.f32.mrb[0].mxu0
        %v5411 = vpop.f32.mrb[0].mxu0
        %v5412 = vadd.f32 %v5284, %v5411
        %v5413 = vpop.f32.mrb[0].mxu0
        %5414 = vmatprep.mubr.bf16.mxu0 0
        %5415 = vmatmul.mubr.bf16.gmra.mrb[0].mxu0 %v5253
        %v5416 = vpop.f32.mrb[0].mxu0
        %v5417 = vadd.f32 %v5284, %v5416
        %v5418 = vpop.f32.mrb[0].mxu0
        %v5419 = vpop.f32.mrb[0].mxu0
        %v5420 = vadd.f32 %v5284, %v5419
        %v5421 = vpop.f32.mrb[0].mxu0
        %5422 = vmatprep.mubr.bf16.mxu0 0
        %5423 = vmatmul.mubr.bf16.gmra.mrb[0].mxu0 %v5254
        %v5424 = vpop.f32.mrb[0].mxu0
        %v5425 = vadd.f32 %v5284, %v5424
        %v5426 = vpop.f32.mrb[0].mxu0
        %v5427 = vpop.f32.mrb[0].mxu0
        %v5428 = vadd.f32 %v5284, %v5427
        %v5429 = vpop.f32.mrb[0].mxu0
        %5430 = vmatprep.mubr.bf16.mxu0 0
        %5431 = vmatmul.mubr.bf16.gmra.mrb[0].mxu0 %v5255
        %v5432 = vpop.f32.mrb[0].mxu0
        %v5433 = vadd.f32 %v5284, %v5432
        %v5434 = vpop.f32.mrb[0].mxu0
        %v5435 = vpop.f32.mrb[0].mxu0
        %v5436 = vadd.f32 %v5284, %v5435
        %v5437 = vpop.f32.mrb[0].mxu0
        %5438 = vmatprep.mubr.bf16.mxu0 0
        %5439 = vmatmul.mubr.bf16.gmra.mrb[0].mxu0 %v5256
        %v5440 = vpop.f32.mrb[0].mxu0
        %v5441 = vadd.f32 %v5284, %v5440
        %v5442 = vpop.f32.mrb[0].mxu0
        %v5443 = vpop.f32.mrb[0].mxu0
        %v5444 = vadd.f32 %v5284, %v5443
        %v5445 = vpop.f32.mrb[0].mxu0
        %5446 = vmatprep.mubr.bf16.mxu0 0
        %5447 = vmatmul.mubr.bf16.gmra.mrb[0].mxu0 %v5257
        %v5448 = vpop.f32.mrb[0].mxu0
        %v5449 = vadd.f32 %v5284, %v5448
        %v5450 = vpop.f32.mrb[0].mxu0
        %v5451 = vpop.f32.mrb[0].mxu0
        %v5452 = vadd.f32 %v5284, %v5451
        %v5453 = vpop.f32.mrb[0].mxu0
        %5454 = vmatprep.mubr.bf16.mxu0 0
        %5455 = vmatmul.mubr.bf16.gmra.mrb[0].mxu0 %v5258
        %v5456 = vpop.f32.mrb[0].mxu0
        %v5457 = vadd.f32 %v5284, %v5456
        %v5458 = vpop.f32.mrb[0].mxu0
        %v5459 = vpop.f32.mrb[0].mxu0
        %v5460 = vadd.f32 %v5284, %v5459
        %v5461 = vpop.f32.mrb[0].mxu0
        %5462 = vmatprep.mubr.bf16.mxu0 0
        %5463 = vmatmul.mubr.bf16.gmra.mrb[0].mxu0 %v5259
        %v5464 = vpop.f32.mrb[0].mxu0
        %v5465 = vadd.f32 %v5284, %v5464
        %v5466 = vpop.f32.mrb[0].mxu0
        %v5467 = vpop.f32.mrb[0].mxu0
        %v5468 = vadd.f32 %v5284, %v5467
        %v5469 = vpop.f32.mrb[0].mxu0
        %5470 = vmatprep.mubr.bf16.mxu0 0
        %5471 = vmatmul.mubr.bf16.gmra.mrb[0].mxu0 %v5260
        %v5472 = vpop.f32.mrb[0].mxu0
        %v5473 = vadd.f32 %v5284, %v5472
        %v5474 = vpop.f32.mrb[0].mxu0
        %v5475 = vpop.f32.mrb[0].mxu0
        %v5476 = vadd.f32 %v5284, %v5475
        %v5477 = vpop.f32.mrb[0].mxu0
        %5478 = vmatprep.mubr.bf16.mxu0 0
        %5479 = vmatmul.mubr.bf16.gmra.mrb[0].mxu0 %v5261
        %v5480 = vpop.f32.mrb[0].mxu0
        %v5481 = vadd.f32 %v5284, %v5480
        %v5482 = vpop.f32.mrb[0].mxu0
        %v5483 = vpop.f32.mrb[0].mxu0
        %v5484 = vadd.f32 %v5284, %v5483
        %v5485 = vpop.f32.mrb[0].mxu0
        %5486 = vmatprep.mubr.bf16.mxu0 0
        %5487 = vmatmul.mubr.bf16.gmra.mrb[0].mxu0 %v5262
        %v5488 = vpop.f32.mrb[0].mxu0
        %v5489 = vadd.f32 %v5284, %v5488
        %v5490 = vpop.f32.mrb[0].mxu0
        %v5491 = vpop.f32.mrb[0].mxu0
        %v5492 = vadd.f32 %v5284, %v5491
        %v5493 = vpop.f32.mrb[0].mxu0
        %5494 = vdwg.mxu0
        %v5495 = vadd.f32 %v5369, %v344
        %v5496 = vadd.f32 %v5372, %v345
        %v5497 = vadd.f32 %v5377, %v346
        %v5498 = vadd.f32 %v5380, %v347
        %v5499 = vadd.f32 %v5385, %v348
        %v5500 = vadd.f32 %v5388, %v349
        %v5501 = vadd.f32 %v5393, %v350
        %v5502 = vadd.f32 %v5396, %v351
        %v5503 = vadd.f32 %v5401, %v352
        %v5504 = vadd.f32 %v5404, %v353
        %v5505 = vadd.f32 %v5409, %v354
        %v5506 = vadd.f32 %v5412, %v355
        %v5507 = vadd.f32 %v5417, %v356
        %v5508 = vadd.f32 %v5420, %v357
        %v5509 = vadd.f32 %v5425, %v358
        %v5510 = vadd.f32 %v5428, %v359
        %v5511 = vadd.f32 %v5433, %v360
        %v5512 = vadd.f32 %v5436, %v361
        %v5513 = vadd.f32 %v5441, %v362
        %v5514 = vadd.f32 %v5444, %v363
        %v5515 = vadd.f32 %v5449, %v364
        %v5516 = vadd.f32 %v5452, %v365
        %v5517 = vadd.f32 %v5457, %v366
        %v5518 = vadd.f32 %v5460, %v367
        %v5519 = vadd.f32 %v5465, %v368
        %v5520 = vadd.f32 %v5468, %v369
        %v5521 = vadd.f32 %v5473, %v370
        %v5522 = vadd.f32 %v5476, %v371
        %v5523 = vadd.f32 %v5481, %v372
        %v5524 = vadd.f32 %v5484, %v373
        %v5525 = vadd.f32 %v5489, %v374
        %v5526 = vadd.f32 %v5492, %v375
        %v5527 = vmax.f32 %v5495, 0.0
        %v5528 = vmax.f32 %v5496, 0.0
        %v5529 = vmax.f32 %v5497, 0.0
        %v5530 = vmax.f32 %v5498, 0.0
        %v5531 = vmax.f32 %v5499, 0.0
        %v5532 = vmax.f32 %v5500, 0.0
        %v5533 = vmax.f32 %v5501, 0.0
        %v5534 = vmax.f32 %v5502, 0.0
        %v5535 = vmax.f32 %v5503, 0.0
        %v5536 = vmax.f32 %v5504, 0.0
        %v5537 = vmax.f32 %v5505, 0.0
        %v5538 = vmax.f32 %v5506, 0.0
        %v5539 = vmax.f32 %v5507, 0.0
        %v5540 = vmax.f32 %v5508, 0.0
        %v5541 = vmax.f32 %v5509, 0.0
        %v5542 = vmax.f32 %v5510, 0.0
        %v5543 = vmax.f32 %v5511, 0.0
        %v5544 = vmax.f32 %v5512, 0.0
        %v5545 = vmax.f32 %v5513, 0.0
        %v5546 = vmax.f32 %v5514, 0.0
        %v5547 = vmax.f32 %v5515, 0.0
        %v5548 = vmax.f32 %v5516, 0.0
        %v5549 = vmax.f32 %v5517, 0.0
        %v5550 = vmax.f32 %v5518, 0.0
        %v5551 = vmax.f32 %v5519, 0.0
        %v5552 = vmax.f32 %v5520, 0.0
        %v5553 = vmax.f32 %v5521, 0.0
        %v5554 = vmax.f32 %v5522, 0.0
        %v5555 = vmax.f32 %v5523, 0.0
        %v5556 = vmax.f32 %v5524, 0.0
        %v5557 = vmax.f32 %v5525, 0.0
        %v5558 = vmax.f32 %v5526, 0.0
        %5559 = vst [vmem:[%s340] sm:$0xff] %v5527
        %5560 = vst [vmem:[%s340 + $0x8] sm:$0xff] %v5528
        %5561 = vst [vmem:[%s340 + $0x10] sm:$0xff] %v5529
        %5562 = vst [vmem:[%s340 + $0x18] sm:$0xff] %v5530
        %5563 = vst [vmem:[%s340 + $0x20] sm:$0xff] %v5531
        %5564 = vst [vmem:[%s340 + $0x28] sm:$0xff] %v5532
        %5565 = vst [vmem:[%s340 + $0x30] sm:$0xff] %v5533
        %5566 = vst [vmem:[%s340 + $0x38] sm:$0xff] %v5534
        %5567 = vst [vmem:[%s340 + $0x40] sm:$0xff] %v5535
        %5568 = vst [vmem:[%s340 + $0x48] sm:$0xff] %v5536
        %5569 = vst [vmem:[%s340 + $0x50] sm:$0xff] %v5537
        %5570 = vst [vmem:[%s340 + $0x58] sm:$0xff] %v5538
        %5571 = vst [vmem:[%s340 + $0x60] sm:$0xff] %v5539
        %5572 = vst [vmem:[%s340 + $0x68] sm:$0xff] %v5540
        %5573 = vst [vmem:[%s340 + $0x70] sm:$0xff] %v5541
        %5574 = vst [vmem:[%s340 + $0x78] sm:$0xff] %v5542
        %5575 = vst [vmem:[%s340 + $0x80] sm:$0xff] %v5543
        %5576 = vst [vmem:[%s340 + $0x88] sm:$0xff] %v5544
        %5577 = vst [vmem:[%s340 + $0x90] sm:$0xff] %v5545
        %5578 = vst [vmem:[%s340 + $0x98] sm:$0xff] %v5546
        %5579 = vst [vmem:[%s340 + $0xa0] sm:$0xff] %v5547
        %5580 = vst [vmem:[%s340 + $0xa8] sm:$0xff] %v5548
        %5581 = vst [vmem:[%s340 + $0xb0] sm:$0xff] %v5549
        %5582 = vst [vmem:[%s340 + $0xb8] sm:$0xff] %v5550
        %5583 = vst [vmem:[%s340 + $0xc0] sm:$0xff] %v5551
        %5584 = vst [vmem:[%s340 + $0xc8] sm:$0xff] %v5552
        %5585 = vst [vmem:[%s340 + $0xd0] sm:$0xff] %v5553
        %5586 = vst [vmem:[%s340 + $0xd8] sm:$0xff] %v5554
        %5587 = vst [vmem:[%s340 + $0xe0] sm:$0xff] %v5555
        %5588 = vst [vmem:[%s340 + $0xe8] sm:$0xff] %v5556
        %5589 = vst [vmem:[%s340 + $0xf0] sm:$0xff] %v5557
        %5590 = vst [vmem:[%s340 + $0xf8] sm:$0xff] %v5558
        %s5591 = sand.u32 %s186, 1
        %s5592 = scalar_lea.sflag [#allocation5], %s5591
        %s5593 = sand.u32 %s186, 1
        %s5594 = smul.addr %s5593, 256
        %s5595 = scalar_lea.vmem [#allocation11], %s5594
        // Predicated region
        $region65: #{tpu_custom_call.1} parent=47 // pred_check
          %p5596 = pneg %p196
        $region66: #{tpu_custom_call.1} parent=47 // pred_check_branch
          %5598 = sbr.rel (%p5596) target = $region68
        $region67: #{tpu_custom_call.1} parent=47 // pred_region
          %s5600 = ssub.s32 4096, 4096
          %5601 = vsyncadd %s5592, %s5600
          %s5602 = smul.addr %s26, 32
          %s5603 = smul.addr %s5602, 128
          %s5604 = scalar_lea.hbm %s7, %s5603
          %s5605 = sshll.u32 %s5595, 4
          %s5606 = int_to_ptr.vmem [resolvable:$true] %s5605
          %5611 = dma.vmem_to_hbm [thread:$0]  %s5606, 4096, %s5604, %s5592, 128, 128, 8
        $region68: #{tpu_custom_call.1} parent=47 // pred_fallthru
          _
      $region48: #{tpu_custom_call.1} parent=5 // pred_fallthru
        _
      %p5612 = scmp.le.s32.totalorder 2, %s21
      // Predicated region
      $region69: #{tpu_custom_call.1} parent=5 // pred_check
        %p5613 = pneg %p5612
      $region70: #{tpu_custom_call.1} parent=5 // pred_check_branch
        %5615 = sbr.rel (%p5613) target = $region72
      $region71: #{tpu_custom_call.1} parent=5 // pred_region
        %s5616 = ssub.s32 %s21, 2
        // Predicated region
        $region73: #{tpu_custom_call.1} parent=71 // pred_check
          %p5617 = pneg %p202
        $region74: #{tpu_custom_call.1} parent=71 // pred_check_branch
          %5619 = sbr.rel (%p5617) target = $region76
        $region75: #{tpu_custom_call.1} parent=71 // pred_region
          %s5620 = sand.u32 %s187, 1
          %s5621 = scalar_lea.sflag [#allocation5], %s5620
          %s5622 = sand.u32 %s187, 1
          %s5623 = smul.addr %s5622, 256
          %s5624 = scalar_lea.vmem [#allocation11], %s5623
          %5625 = dma.done %s5621, 4096
        $region76: #{tpu_custom_call.1} parent=71 // pred_fallthru
          _
      $region72: #{tpu_custom_call.1} parent=5 // pred_fallthru
        _
    $region6: #{tpu_custom_call.1} parent=1 // loop_footer
      %s25 = sadd.s32 1, %s21
    $region7: #{tpu_custom_call.1} parent=1 // loop_footer_branch
      %20 = sbr.rel target = $region3
    $region8: #{tpu_custom_call.1} parent=1 // loop_exit
      _
    %5626 = vsyncpa [#allocation4], 1
    %s5627 = scalar_lea.sflag [#allocation4], 1
    %5628 = vsyncpa %s5627, 1
    %5629 = vsyncpa [#allocation7], 1
    %5630 = vsyncpa [#allocation10], 1
    %5631 = vsyncpa [#allocation5], 1
    %s5632 = scalar_lea.sflag [#allocation5], 1
    %5633 = vsyncpa %s5632, 1

</llo_original>
